<compile_context>
chip_gen: v6e
topology: v6e:2x2x1
jax: 0.10.0
libtpu: 0.0.40
codegen_flags: <defaults>
</compile_context>

<pallas_src>
import jax
import jax.numpy as jnp
from jax import lax
from jax.experimental import pallas as pl
from jax.experimental.pallas import tpu as pltpu


def _bottleneck_kernel(x_ref, w1_ref, s1_ref, b1_ref,
                       w2_ref, s2_ref, b2_ref,
                       w3_ref, s3_ref, b3_ref,
                       wd_ref, bd_ref,
                       o_ref, pad_ref):
    # x_ref  : (1, H, W, Cin)        one image per grid step (NHWC)
    # w1_ref : (Cin, Cmid)           1x1 conv #1
    # w2_ref : (9, Cmid, Cmid)       3x3 grouped conv, dense block-diagonal taps
    # w3_ref : (Cmid, Cout)          1x1 conv #2
    # wd_ref : (Cin, Cout), bd_ref: (1, Cout)   dim_equalizer (with bias)
    # s*/b*  : (1, C)                folded BatchNorm scale / bias
    # o_ref  : (1, H, W, Cout)
    # pad_ref: (H+2, W+2, Cmid) f32  VMEM scratch (zero-padded halo)
    _, H, W, Cin = x_ref.shape
    Cmid = w1_ref.shape[1]
    Cout = w3_ref.shape[1]

    x2d = x_ref[0].reshape(H * W, Cin)                                # (HW, Cin)

    # --- stage 1: 1x1 conv + BN + ReLU --------------------------------------
    h1 = jnp.dot(x2d, w1_ref[...], preferred_element_type=jnp.float32)
    h1 = jnp.maximum(h1 * s1_ref[...] + b1_ref[...], 0.0)             # (HW, Cmid)

    # --- stage 2: 3x3 grouped conv (pad=1) as 9 shifted MXU matmuls ---------
    pad_ref[...] = jnp.zeros(pad_ref.shape, pad_ref.dtype)
    pad_ref[1:H + 1, 1:W + 1, :] = h1.reshape(H, W, Cmid)
    acc = jnp.zeros((H * W, Cmid), jnp.float32)
    for tap in range(9):                                              # unrolled
        dy, dx = tap // 3, tap % 3
        win = pad_ref[dy:dy + H, dx:dx + W, :].reshape(H * W, Cmid)
        acc = acc + jnp.dot(win, w2_ref[tap],
                            preferred_element_type=jnp.float32)
    h2 = jnp.maximum(acc * s2_ref[...] + b2_ref[...], 0.0)            # (HW, Cmid)

    # --- stage 3: 1x1 conv + BN (no activation yet) -------------------------
    h3 = jnp.dot(h2, w3_ref[...], preferred_element_type=jnp.float32)
    h3 = h3 * s3_ref[...] + b3_ref[...]                               # (HW, Cout)

    # --- skip path: dim_equalizer (1x1 conv WITH bias) ----------------------
    skip = jnp.dot(x2d, wd_ref[...],
                   preferred_element_type=jnp.float32) + bd_ref[...]

    # --- residual add + final ReLU ------------------------------------------
    out = jnp.maximum(h3 + skip, 0.0)
    o_ref[0] = out.reshape(H, W, Cout).astype(o_ref.dtype)


def resnext_bottleneck_forward(x_nchw, params, *, groups=32, eps=1e-5):
    """Pallas forward of ResNextResidualBottleNeck (stride=1 branch).

    x_nchw: (B, Cin, H, W) float32.  params holds PyTorch-layout tensors.
    """
    B, Cin, H, W = x_nchw.shape
    w1 = params["conv1_w"]            # (Cmid, Cin, 1, 1)
    w2 = params["conv2_w"]            # (Cmid, Cmid//G, 3, 3)  grouped
    w3 = params["conv3_w"]            # (Cout, Cmid, 1, 1)
    wd = params["eq_w"]               # (Cout, Cin, 1, 1)
    bd = params["eq_b"]               # (Cout,)
    Cmid = w1.shape[0]
    Cout = w3.shape[0]
    # PyTorch module passes groups=channels_per_groups to the conv:
    G = max(1, Cmid // groups)
    Cg = Cmid // G

    def fold_bn(g, b, m, v):
        s = g / jnp.sqrt(v + eps)
        return s, b - m * s

    s1, b1 = fold_bn(params["bn1_g"], params["bn1_b"], params["bn1_m"], params["bn1_v"])
    s2, b2 = fold_bn(params["bn2_g"], params["bn2_b"], params["bn2_m"], params["bn2_v"])
    s3, b3 = fold_bn(params["bn3_g"], params["bn3_b"], params["bn3_m"], params["bn3_v"])

    # NHWC (channels on lanes) for the kernel.
    x_nhwc = jnp.transpose(x_nchw, (0, 2, 3, 1))

    # 1x1 conv weights -> matmul form (Cin, Cout).
    w1_t = jnp.transpose(w1[:, :, 0, 0])      # (Cin, Cmid)
    w3_t = jnp.transpose(w3[:, :, 0, 0])      # (Cmid, Cout)
    wd_t = jnp.transpose(wd[:, :, 0, 0])      # (Cin, Cout)

    # Grouped 3x3 conv -> dense block-diagonal taps (9, Cmid, Cmid).
    w2_dense = jnp.zeros((3, 3, Cmid, Cmid), jnp.float32)
    for g in range(G):
        blk = w2[g * Cg:(g + 1) * Cg]                      # (Cg_out, Cg_in, 3, 3)
        blk = jnp.transpose(blk, (2, 3, 1, 0))             # (3, 3, Cg_in, Cg_out)
        w2_dense = w2_dense.at[:, :, g * Cg:(g + 1) * Cg,
                               g * Cg:(g + 1) * Cg].set(blk)
    w2_taps = w2_dense.reshape(9, Cmid, Cmid)

    s1 = s1.reshape(1, Cmid); b1 = b1.reshape(1, Cmid)
    s2 = s2.reshape(1, Cmid); b2 = b2.reshape(1, Cmid)
    s3 = s3.reshape(1, Cout); b3 = b3.reshape(1, Cout)
    bd2 = bd.reshape(1, Cout)

    flops = 2 * B * H * W * (Cin * Cmid + 9 * Cmid * Cmid
                             + Cmid * Cout + Cin * Cout)
    bytes_accessed = 4 * (B * H * W * (Cin + Cout)
                          + 9 * Cmid * Cmid + Cin * Cmid
                          + Cmid * Cout + Cin * Cout)

    const0 = lambda b: (0, 0)

    out_nhwc = pl.pallas_call(
        _bottleneck_kernel,
        out_shape=jax.ShapeDtypeStruct((B, H, W, Cout), jnp.float32),
        grid_spec=pltpu.PrefetchScalarGridSpec(
            num_scalar_prefetch=0,
            grid=(B,),
            in_specs=[
                pl.BlockSpec((1, H, W, Cin), lambda b: (b, 0, 0, 0)),
                pl.BlockSpec((Cin, Cmid), const0),
                pl.BlockSpec((1, Cmid), const0),
                pl.BlockSpec((1, Cmid), const0),
                pl.BlockSpec((9, Cmid, Cmid), lambda b: (0, 0, 0)),
                pl.BlockSpec((1, Cmid), const0),
                pl.BlockSpec((1, Cmid), const0),
                pl.BlockSpec((Cmid, Cout), const0),
                pl.BlockSpec((1, Cout), const0),
                pl.BlockSpec((1, Cout), const0),
                pl.BlockSpec((Cin, Cout), const0),
                pl.BlockSpec((1, Cout), const0),
            ],
            out_specs=pl.BlockSpec((1, H, W, Cout), lambda b: (b, 0, 0, 0)),
            scratch_shapes=[pltpu.VMEM((H + 2, W + 2, Cmid), jnp.float32)],
        ),
        compiler_params=pltpu.CompilerParams(
            dimension_semantics=("parallel",)),
        cost_estimate=pl.CostEstimate(flops=flops, transcendentals=0,
                                      bytes_accessed=bytes_accessed),
    )(x_nhwc, w1_t, s1, b1, w2_taps, s2, b2, w3_t, s3, b3, wd_t, bd2)

    return jnp.transpose(out_nhwc, (0, 3, 1, 2))           # back to NCHW


def _reference(x, params, *, groups=32, eps=1e-5):
    """Pure-JAX (XLA conv) reference of the PyTorch forward, stride=1 branch."""
    dn = ("NCHW", "OIHW", "NCHW")
    prec = lax.Precision.HIGHEST

    def bn(y, g, b, m, v):
        s = g / jnp.sqrt(v + eps)
        return y * s[None, :, None, None] + (b - m * s)[None, :, None, None]

    Cmid = params["conv1_w"].shape[0]
    G = max(1, Cmid // groups)

    h = lax.conv_general_dilated(x, params["conv1_w"], (1, 1), "VALID",
                                 dimension_numbers=dn, precision=prec)
    h = jnp.maximum(bn(h, params["bn1_g"], params["bn1_b"],
                       params["bn1_m"], params["bn1_v"]), 0.0)
    h = lax.conv_general_dilated(h, params["conv2_w"], (1, 1),
                                 ((1, 1), (1, 1)), dimension_numbers=dn,
                                 feature_group_count=G, precision=prec)
    h = jnp.maximum(bn(h, params["bn2_g"], params["bn2_b"],
                       params["bn2_m"], params["bn2_v"]), 0.0)
    h = lax.conv_general_dilated(h, params["conv3_w"], (1, 1), "VALID",
                                 dimension_numbers=dn, precision=prec)
    h = bn(h, params["bn3_g"], params["bn3_b"],
           params["bn3_m"], params["bn3_v"])
    skip = lax.conv_general_dilated(x, params["eq_w"], (1, 1), "VALID",
                                    dimension_numbers=dn, precision=prec)
    skip = skip + params["eq_b"][None, :, None, None]
    return jnp.maximum(h + skip, 0.0)


if __name__ == "__main__":
    key = jax.random.PRNGKey(0)
    ks = jax.random.split(key, 18)

    # Small but ResNeXt-consistent shapes (groups=32 => Cmid must be >= 32).
    B, Cin, H, W = 2, 64, 16, 16
    Cmid, Cout = 128, 128
    groups = 32
    G = max(1, Cmid // groups)      # conv groups (= channels_per_groups) = 4
    Cg = Cmid // G

    def rnd(k, shape, scale=0.1):
        return scale * jax.random.normal(k, shape, dtype=jnp.float32)

    params = dict(
        conv1_w=rnd(ks[0], (Cmid, Cin, 1, 1)),
        bn1_g=1.0 + rnd(ks[1], (Cmid,)),
        bn1_b=rnd(ks[2], (Cmid,)),
        bn1_m=rnd(ks[3], (Cmid,)),
        bn1_v=0.5 + jnp.abs(rnd(ks[4], (Cmid,), 1.0)),
        conv2_w=rnd(ks[5], (Cmid, Cg, 3, 3)),
        bn2_g=1.0 + rnd(ks[6], (Cmid,)),
        bn2_b=rnd(ks[7], (Cmid,)),
        bn2_m=rnd(ks[8], (Cmid,)),
        bn2_v=0.5 + jnp.abs(rnd(ks[9], (Cmid,), 1.0)),
        conv3_w=rnd(ks[10], (Cout, Cmid, 1, 1)),
        bn3_g=1.0 + rnd(ks[11], (Cout,)),
        bn3_b=rnd(ks[12], (Cout,)),
        bn3_m=rnd(ks[13], (Cout,)),
        bn3_v=0.5 + jnp.abs(rnd(ks[14], (Cout,), 1.0)),
        eq_w=rnd(ks[15], (Cout, Cin, 1, 1)),
        eq_b=rnd(ks[16], (Cout,)),
    )
    x = jax.random.normal(ks[17], (B, Cin, H, W), dtype=jnp.float32)

    out = resnext_bottleneck_forward(x, params, groups=groups)
    out = jax.block_until_ready(out)

    ref = _reference(x, params, groups=groups)
    assert out.shape == (B, Cout, H, W)
    max_err = float(jnp.max(jnp.abs(out - ref)))
    assert jnp.allclose(out, ref, atol=1e-3, rtol=1e-3), f"max_err={max_err}"

    print("KERNEL_OK")
</pallas_src>

<mosaic_0001>
module attributes {stable_mosaic.version = 11 : i64} {
  func.func @_bottleneck_kernel(%arg0: i32, %arg1: memref<1x16x16x64xf32, #tpu.memory_space<vmem>>, %arg2: memref<64x128xf32, #tpu.memory_space<vmem>>, %arg3: memref<1x128xf32, #tpu.memory_space<vmem>>, %arg4: memref<1x128xf32, #tpu.memory_space<vmem>>, %arg5: memref<9x128x128xf32, #tpu.memory_space<vmem>>, %arg6: memref<1x128xf32, #tpu.memory_space<vmem>>, %arg7: memref<1x128xf32, #tpu.memory_space<vmem>>, %arg8: memref<128x128xf32, #tpu.memory_space<vmem>>, %arg9: memref<1x128xf32, #tpu.memory_space<vmem>>, %arg10: memref<1x128xf32, #tpu.memory_space<vmem>>, %arg11: memref<64x128xf32, #tpu.memory_space<vmem>>, %arg12: memref<1x128xf32, #tpu.memory_space<vmem>>, %arg13: memref<1x16x16x128xf32, #tpu.memory_space<vmem>>, %arg14: memref<18x18x128xf32, #tpu.memory_space<vmem>>) attributes {dimension_semantics = [#tpu.dimension_semantics<parallel>], iteration_bounds = array<i64: 2>, scalar_prefetch = 0 : i64, scratch_operands = 1 : i64, tpu.core_type = #tpu.core_type<tc>, window_params = [{transform_indices = @transform_0, window_bounds = array<i64: 1, 16, 16, 64>}, {pipeline_mode = #tpu.pipeline_mode<synchronous>, transform_indices = @transform_1, window_bounds = array<i64: 64, 128>}, {pipeline_mode = #tpu.pipeline_mode<synchronous>, transform_indices = @transform_2, window_bounds = array<i64: 1, 128>}, {pipeline_mode = #tpu.pipeline_mode<synchronous>, transform_indices = @transform_3, window_bounds = array<i64: 1, 128>}, {pipeline_mode = #tpu.pipeline_mode<synchronous>, transform_indices = @transform_4, window_bounds = array<i64: 9, 128, 128>}, {pipeline_mode = #tpu.pipeline_mode<synchronous>, transform_indices = @transform_5, window_bounds = array<i64: 1, 128>}, {pipeline_mode = #tpu.pipeline_mode<synchronous>, transform_indices = @transform_6, window_bounds = array<i64: 1, 128>}, {pipeline_mode = #tpu.pipeline_mode<synchronous>, transform_indices = @transform_7, window_bounds = array<i64: 128, 128>}, {pipeline_mode = #tpu.pipeline_mode<synchronous>, transform_indices = @transform_8, window_bounds = array<i64: 1, 128>}, {pipeline_mode = #tpu.pipeline_mode<synchronous>, transform_indices = @transform_9, window_bounds = array<i64: 1, 128>}, {pipeline_mode = #tpu.pipeline_mode<synchronous>, transform_indices = @transform_10, window_bounds = array<i64: 64, 128>}, {pipeline_mode = #tpu.pipeline_mode<synchronous>, transform_indices = @transform_11, window_bounds = array<i64: 1, 128>}, {transform_indices = @transform_12, window_bounds = array<i64: 1, 16, 16, 128>}]} {
    %c0 = arith.constant 0 : index
    %c0_0 = arith.constant 0 : index
    %c0_1 = arith.constant 0 : index
    %c0_2 = arith.constant 0 : index
    %0 = vector.load %arg1[%c0, %c0_0, %c0_1, %c0_2] : memref<1x16x16x64xf32, #tpu.memory_space<vmem>>, vector<1x16x16x64xf32>
    %1 = vector.shape_cast %0 : vector<1x16x16x64xf32> to vector<16x16x64xf32>
    %2 = vector.shape_cast %1 : vector<16x16x64xf32> to vector<256x64xf32>
    %c0_3 = arith.constant 0 : index
    %c0_4 = arith.constant 0 : index
    %3 = vector.load %arg2[%c0_3, %c0_4] : memref<64x128xf32, #tpu.memory_space<vmem>>, vector<64x128xf32>
    %cst = arith.constant dense<0.000000e+00> : vector<256x128xf32>
    %4 = tpu.matmul %2, %3, %cst {dimension_numbers = #tpu.dot_dimension_numbers<[1], [0], [0], [1], [0, 0, 1, 1], [], []>} : vector<256x64xf32>, vector<64x128xf32>, vector<256x128xf32> -> vector<256x128xf32>
    %c0_5 = arith.constant 0 : index
    %c0_6 = arith.constant 0 : index
    %5 = vector.load %arg3[%c0_5, %c0_6] : memref<1x128xf32, #tpu.memory_space<vmem>>, vector<1x128xf32>
    %6 = vector.broadcast %5 : vector<1x128xf32> to vector<256x128xf32>
    %7 = arith.mulf %4, %6 : vector<256x128xf32>
    %c0_7 = arith.constant 0 : index
    %c0_8 = arith.constant 0 : index
    %8 = vector.load %arg4[%c0_7, %c0_8] : memref<1x128xf32, #tpu.memory_space<vmem>>, vector<1x128xf32>
    %9 = vector.broadcast %8 : vector<1x128xf32> to vector<256x128xf32>
    %10 = arith.addf %7, %9 : vector<256x128xf32>
    %cst_9 = arith.constant 0.000000e+00 : f32
    %11 = vector.broadcast %cst_9 : f32 to vector<256x128xf32>
    %12 = arith.maximumf %10, %11 : vector<256x128xf32>
    %cst_10 = arith.constant 0.000000e+00 : f32
    %13 = vector.broadcast %cst_10 : f32 to vector<18x18x128xf32>
    %c0_11 = arith.constant 0 : index
    %c0_12 = arith.constant 0 : index
    %c0_13 = arith.constant 0 : index
    %14 = vector.load %arg14[%c0_11, %c0_12, %c0_13] : memref<18x18x128xf32, #tpu.memory_space<vmem>>, vector<18x18x128xf32>
    tpu.vector_store %arg14[%c0_11, %c0_12, %c0_13], %13 {strides = array<i32>} : memref<18x18x128xf32, #tpu.memory_space<vmem>>, vector<18x18x128xf32>,
    %15 = vector.shape_cast %12 : vector<256x128xf32> to vector<16x16x128xf32>
    %c1 = arith.constant 1 : index
    %c1_14 = arith.constant 1 : index
    %c0_15 = arith.constant 0 : index
    %16 = vector.load %arg14[%c1, %c1_14, %c0_15] : memref<18x18x128xf32, #tpu.memory_space<vmem>>, vector<16x16x128xf32>
    tpu.vector_store %arg14[%c1, %c1_14, %c0_15], %15 {strides = array<i32>} : memref<18x18x128xf32, #tpu.memory_space<vmem>>, vector<16x16x128xf32>,
    %cst_16 = arith.constant 0.000000e+00 : f32
    %17 = vector.broadcast %cst_16 : f32 to vector<256x128xf32>
    %c0_17 = arith.constant 0 : index
    %c0_18 = arith.constant 0 : index
    %c0_19 = arith.constant 0 : index
    %18 = vector.load %arg14[%c0_17, %c0_18, %c0_19] : memref<18x18x128xf32, #tpu.memory_space<vmem>>, vector<16x16x128xf32>
    %19 = vector.shape_cast %18 : vector<16x16x128xf32> to vector<256x128xf32>
    %c0_20 = arith.constant 0 : index
    %c0_21 = arith.constant 0 : index
    %c0_22 = arith.constant 0 : index
    %20 = vector.load %arg5[%c0_20, %c0_21, %c0_22] : memref<9x128x128xf32, #tpu.memory_space<vmem>>, vector<1x128x128xf32>
    %21 = vector.shape_cast %20 : vector<1x128x128xf32> to vector<128x128xf32>
    %cst_23 = arith.constant dense<0.000000e+00> : vector<256x128xf32>
    %22 = tpu.matmul %19, %21, %cst_23 {dimension_numbers = #tpu.dot_dimension_numbers<[1], [0], [0], [1], [0, 0, 1, 1], [], []>} : vector<256x128xf32>, vector<128x128xf32>, vector<256x128xf32> -> vector<256x128xf32>
    %23 = arith.addf %17, %22 : vector<256x128xf32>
    %c0_24 = arith.constant 0 : index
    %c1_25 = arith.constant 1 : index
    %c0_26 = arith.constant 0 : index
    %24 = vector.load %arg14[%c0_24, %c1_25, %c0_26] : memref<18x18x128xf32, #tpu.memory_space<vmem>>, vector<16x16x128xf32>
    %25 = vector.shape_cast %24 : vector<16x16x128xf32> to vector<256x128xf32>
    %c1_27 = arith.constant 1 : index
    %c0_28 = arith.constant 0 : index
    %c0_29 = arith.constant 0 : index
    %26 = vector.load %arg5[%c1_27, %c0_28, %c0_29] : memref<9x128x128xf32, #tpu.memory_space<vmem>>, vector<1x128x128xf32>
    %27 = vector.shape_cast %26 : vector<1x128x128xf32> to vector<128x128xf32>
    %cst_30 = arith.constant dense<0.000000e+00> : vector<256x128xf32>
    %28 = tpu.matmul %25, %27, %cst_30 {dimension_numbers = #tpu.dot_dimension_numbers<[1], [0], [0], [1], [0, 0, 1, 1], [], []>} : vector<256x128xf32>, vector<128x128xf32>, vector<256x128xf32> -> vector<256x128xf32>
    %29 = arith.addf %23, %28 : vector<256x128xf32>
    %c0_31 = arith.constant 0 : index
    %c2 = arith.constant 2 : index
    %c0_32 = arith.constant 0 : index
    %30 = vector.load %arg14[%c0_31, %c2, %c0_32] : memref<18x18x128xf32, #tpu.memory_space<vmem>>, vector<16x16x128xf32>
    %31 = vector.shape_cast %30 : vector<16x16x128xf32> to vector<256x128xf32>
    %c2_33 = arith.constant 2 : index
    %c0_34 = arith.constant 0 : index
    %c0_35 = arith.constant 0 : index
    %32 = vector.load %arg5[%c2_33, %c0_34, %c0_35] : memref<9x128x128xf32, #tpu.memory_space<vmem>>, vector<1x128x128xf32>
    %33 = vector.shape_cast %32 : vector<1x128x128xf32> to vector<128x128xf32>
    %cst_36 = arith.constant dense<0.000000e+00> : vector<256x128xf32>
    %34 = tpu.matmul %31, %33, %cst_36 {dimension_numbers = #tpu.dot_dimension_numbers<[1], [0], [0], [1], [0, 0, 1, 1], [], []>} : vector<256x128xf32>, vector<128x128xf32>, vector<256x128xf32> -> vector<256x128xf32>
    %35 = arith.addf %29, %34 : vector<256x128xf32>
    %c1_37 = arith.constant 1 : index
    %c0_38 = arith.constant 0 : index
    %c0_39 = arith.constant 0 : index
    %36 = vector.load %arg14[%c1_37, %c0_38, %c0_39] : memref<18x18x128xf32, #tpu.memory_space<vmem>>, vector<16x16x128xf32>
    %37 = vector.shape_cast %36 : vector<16x16x128xf32> to vector<256x128xf32>
    %c3 = arith.constant 3 : index
    %c0_40 = arith.constant 0 : index
    %c0_41 = arith.constant 0 : index
    %38 = vector.load %arg5[%c3, %c0_40, %c0_41] : memref<9x128x128xf32, #tpu.memory_space<vmem>>, vector<1x128x128xf32>
    %39 = vector.shape_cast %38 : vector<1x128x128xf32> to vector<128x128xf32>
    %cst_42 = arith.constant dense<0.000000e+00> : vector<256x128xf32>
    %40 = tpu.matmul %37, %39, %cst_42 {dimension_numbers = #tpu.dot_dimension_numbers<[1], [0], [0], [1], [0, 0, 1, 1], [], []>} : vector<256x128xf32>, vector<128x128xf32>, vector<256x128xf32> -> vector<256x128xf32>
    %41 = arith.addf %35, %40 : vector<256x128xf32>
    %c1_43 = arith.constant 1 : index
    %c1_44 = arith.constant 1 : index
    %c0_45 = arith.constant 0 : index
    %42 = vector.load %arg14[%c1_43, %c1_44, %c0_45] : memref<18x18x128xf32, #tpu.memory_space<vmem>>, vector<16x16x128xf32>
    %43 = vector.shape_cast %42 : vector<16x16x128xf32> to vector<256x128xf32>
    %c4 = arith.constant 4 : index
    %c0_46 = arith.constant 0 : index
    %c0_47 = arith.constant 0 : index
    %44 = vector.load %arg5[%c4, %c0_46, %c0_47] : memref<9x128x128xf32, #tpu.memory_space<vmem>>, vector<1x128x128xf32>
    %45 = vector.shape_cast %44 : vector<1x128x128xf32> to vector<128x128xf32>
    %cst_48 = arith.constant dense<0.000000e+00> : vector<256x128xf32>
    %46 = tpu.matmul %43, %45, %cst_48 {dimension_numbers = #tpu.dot_dimension_numbers<[1], [0], [0], [1], [0, 0, 1, 1], [], []>} : vector<256x128xf32>, vector<128x128xf32>, vector<256x128xf32> -> vector<256x128xf32>
    %47 = arith.addf %41, %46 : vector<256x128xf32>
    %c1_49 = arith.constant 1 : index
    %c2_50 = arith.constant 2 : index
    %c0_51 = arith.constant 0 : index
    %48 = vector.load %arg14[%c1_49, %c2_50, %c0_51] : memref<18x18x128xf32, #tpu.memory_space<vmem>>, vector<16x16x128xf32>
    %49 = vector.shape_cast %48 : vector<16x16x128xf32> to vector<256x128xf32>
    %c5 = arith.constant 5 : index
    %c0_52 = arith.constant 0 : index
    %c0_53 = arith.constant 0 : index
    %50 = vector.load %arg5[%c5, %c0_52, %c0_53] : memref<9x128x128xf32, #tpu.memory_space<vmem>>, vector<1x128x128xf32>
    %51 = vector.shape_cast %50 : vector<1x128x128xf32> to vector<128x128xf32>
    %cst_54 = arith.constant dense<0.000000e+00> : vector<256x128xf32>
    %52 = tpu.matmul %49, %51, %cst_54 {dimension_numbers = #tpu.dot_dimension_numbers<[1], [0], [0], [1], [0, 0, 1, 1], [], []>} : vector<256x128xf32>, vector<128x128xf32>, vector<256x128xf32> -> vector<256x128xf32>
    %53 = arith.addf %47, %52 : vector<256x128xf32>
    %c2_55 = arith.constant 2 : index
    %c0_56 = arith.constant 0 : index
    %c0_57 = arith.constant 0 : index
    %54 = vector.load %arg14[%c2_55, %c0_56, %c0_57] : memref<18x18x128xf32, #tpu.memory_space<vmem>>, vector<16x16x128xf32>
    %55 = vector.shape_cast %54 : vector<16x16x128xf32> to vector<256x128xf32>
    %c6 = arith.constant 6 : index
    %c0_58 = arith.constant 0 : index
    %c0_59 = arith.constant 0 : index
    %56 = vector.load %arg5[%c6, %c0_58, %c0_59] : memref<9x128x128xf32, #tpu.memory_space<vmem>>, vector<1x128x128xf32>
    %57 = vector.shape_cast %56 : vector<1x128x128xf32> to vector<128x128xf32>
    %cst_60 = arith.constant dense<0.000000e+00> : vector<256x128xf32>
    %58 = tpu.matmul %55, %57, %cst_60 {dimension_numbers = #tpu.dot_dimension_numbers<[1], [0], [0], [1], [0, 0, 1, 1], [], []>} : vector<256x128xf32>, vector<128x128xf32>, vector<256x128xf32> -> vector<256x128xf32>
    %59 = arith.addf %53, %58 : vector<256x128xf32>
    %c2_61 = arith.constant 2 : index
    %c1_62 = arith.constant 1 : index
    %c0_63 = arith.constant 0 : index
    %60 = vector.load %arg14[%c2_61, %c1_62, %c0_63] : memref<18x18x128xf32, #tpu.memory_space<vmem>>, vector<16x16x128xf32>
    %61 = vector.shape_cast %60 : vector<16x16x128xf32> to vector<256x128xf32>
    %c7 = arith.constant 7 : index
    %c0_64 = arith.constant 0 : index
    %c0_65 = arith.constant 0 : index
    %62 = vector.load %arg5[%c7, %c0_64, %c0_65] : memref<9x128x128xf32, #tpu.memory_space<vmem>>, vector<1x128x128xf32>
    %63 = vector.shape_cast %62 : vector<1x128x128xf32> to vector<128x128xf32>
    %cst_66 = arith.constant dense<0.000000e+00> : vector<256x128xf32>
    %64 = tpu.matmul %61, %63, %cst_66 {dimension_numbers = #tpu.dot_dimension_numbers<[1], [0], [0], [1], [0, 0, 1, 1], [], []>} : vector<256x128xf32>, vector<128x128xf32>, vector<256x128xf32> -> vector<256x128xf32>
    %65 = arith.addf %59, %64 : vector<256x128xf32>
    %c2_67 = arith.constant 2 : index
    %c2_68 = arith.constant 2 : index
    %c0_69 = arith.constant 0 : index
    %66 = vector.load %arg14[%c2_67, %c2_68, %c0_69] : memref<18x18x128xf32, #tpu.memory_space<vmem>>, vector<16x16x128xf32>
    %67 = vector.shape_cast %66 : vector<16x16x128xf32> to vector<256x128xf32>
    %c8 = arith.constant 8 : index
    %c0_70 = arith.constant 0 : index
    %c0_71 = arith.constant 0 : index
    %68 = vector.load %arg5[%c8, %c0_70, %c0_71] : memref<9x128x128xf32, #tpu.memory_space<vmem>>, vector<1x128x128xf32>
    %69 = vector.shape_cast %68 : vector<1x128x128xf32> to vector<128x128xf32>
    %cst_72 = arith.constant dense<0.000000e+00> : vector<256x128xf32>
    %70 = tpu.matmul %67, %69, %cst_72 {dimension_numbers = #tpu.dot_dimension_numbers<[1], [0], [0], [1], [0, 0, 1, 1], [], []>} : vector<256x128xf32>, vector<128x128xf32>, vector<256x128xf32> -> vector<256x128xf32>
    %71 = arith.addf %65, %70 : vector<256x128xf32>
    %c0_73 = arith.constant 0 : index
    %c0_74 = arith.constant 0 : index
    %72 = vector.load %arg6[%c0_73, %c0_74] : memref<1x128xf32, #tpu.memory_space<vmem>>, vector<1x128xf32>
    %73 = vector.broadcast %72 : vector<1x128xf32> to vector<256x128xf32>
    %74 = arith.mulf %71, %73 : vector<256x128xf32>
    %c0_75 = arith.constant 0 : index
    %c0_76 = arith.constant 0 : index
    %75 = vector.load %arg7[%c0_75, %c0_76] : memref<1x128xf32, #tpu.memory_space<vmem>>, vector<1x128xf32>
    %76 = vector.broadcast %75 : vector<1x128xf32> to vector<256x128xf32>
    %77 = arith.addf %74, %76 : vector<256x128xf32>
    %cst_77 = arith.constant 0.000000e+00 : f32
    %78 = vector.broadcast %cst_77 : f32 to vector<256x128xf32>
    %79 = arith.maximumf %77, %78 : vector<256x128xf32>
    %c0_78 = arith.constant 0 : index
    %c0_79 = arith.constant 0 : index
    %80 = vector.load %arg8[%c0_78, %c0_79] : memref<128x128xf32, #tpu.memory_space<vmem>>, vector<128x128xf32>
    %cst_80 = arith.constant dense<0.000000e+00> : vector<256x128xf32>
    %81 = tpu.matmul %79, %80, %cst_80 {dimension_numbers = #tpu.dot_dimension_numbers<[1], [0], [0], [1], [0, 0, 1, 1], [], []>} : vector<256x128xf32>, vector<128x128xf32>, vector<256x128xf32> -> vector<256x128xf32>
    %c0_81 = arith.constant 0 : index
    %c0_82 = arith.constant 0 : index
    %82 = vector.load %arg9[%c0_81, %c0_82] : memref<1x128xf32, #tpu.memory_space<vmem>>, vector<1x128xf32>
    %83 = vector.broadcast %82 : vector<1x128xf32> to vector<256x128xf32>
    %84 = arith.mulf %81, %83 : vector<256x128xf32>
    %c0_83 = arith.constant 0 : index
    %c0_84 = arith.constant 0 : index
    %85 = vector.load %arg10[%c0_83, %c0_84] : memref<1x128xf32, #tpu.memory_space<vmem>>, vector<1x128xf32>
    %86 = vector.broadcast %85 : vector<1x128xf32> to vector<256x128xf32>
    %87 = arith.addf %84, %86 : vector<256x128xf32>
    %c0_85 = arith.constant 0 : index
    %c0_86 = arith.constant 0 : index
    %88 = vector.load %arg11[%c0_85, %c0_86] : memref<64x128xf32, #tpu.memory_space<vmem>>, vector<64x128xf32>
    %cst_87 = arith.constant dense<0.000000e+00> : vector<256x128xf32>
    %89 = tpu.matmul %2, %88, %cst_87 {dimension_numbers = #tpu.dot_dimension_numbers<[1], [0], [0], [1], [0, 0, 1, 1], [], []>} : vector<256x64xf32>, vector<64x128xf32>, vector<256x128xf32> -> vector<256x128xf32>
    %c0_88 = arith.constant 0 : index
    %c0_89 = arith.constant 0 : index
    %90 = vector.load %arg12[%c0_88, %c0_89] : memref<1x128xf32, #tpu.memory_space<vmem>>, vector<1x128xf32>
    %91 = vector.broadcast %90 : vector<1x128xf32> to vector<256x128xf32>
    %92 = arith.addf %89, %91 : vector<256x128xf32>
    %93 = arith.addf %87, %92 : vector<256x128xf32>
    %cst_90 = arith.constant 0.000000e+00 : f32
    %94 = vector.broadcast %cst_90 : f32 to vector<256x128xf32>
    %95 = arith.maximumf %93, %94 : vector<256x128xf32>
    %96 = vector.shape_cast %95 : vector<256x128xf32> to vector<16x16x128xf32>
    %c0_91 = arith.constant 0 : index
    %c0_92 = arith.constant 0 : index
    %c0_93 = arith.constant 0 : index
    %c0_94 = arith.constant 0 : index
    %97 = vector.load %arg13[%c0_91, %c0_92, %c0_93, %c0_94] : memref<1x16x16x128xf32, #tpu.memory_space<vmem>>, vector<1x16x16x128xf32>
    %98 = vector.shape_cast %97 : vector<1x16x16x128xf32> to vector<16x16x128xf32>
    %99 = vector.shape_cast %96 : vector<16x16x128xf32> to vector<1x16x16x128xf32>
    tpu.vector_store %arg13[%c0_91, %c0_92, %c0_93, %c0_94], %99 {strides = array<i32>} : memref<1x16x16x128xf32, #tpu.memory_space<vmem>>, vector<1x16x16x128xf32>,
    return
  }
  func.func @transform_0(%arg0: i32) -> (i32, i32, i32, i32) {
    %c0_i32 = arith.constant 0 : i32
    %c0_i32_0 = arith.constant 0 : i32
    %c0_i32_1 = arith.constant 0 : i32
    %c0_i32_2 = arith.constant 0 : i32
    return %arg0, %c0_i32, %c0_i32_0, %c0_i32_1 : i32, i32, i32, i32
  }
  func.func @transform_1(%arg0: i32) -> (i32, i32) {
    %c0_i32 = arith.constant 0 : i32
    %c0_i32_0 = arith.constant 0 : i32
    %c0_i32_1 = arith.constant 0 : i32
    return %c0_i32, %c0_i32_0 : i32, i32
  }
  func.func @transform_2(%arg0: i32) -> (i32, i32) {
    %c0_i32 = arith.constant 0 : i32
    %c0_i32_0 = arith.constant 0 : i32
    %c0_i32_1 = arith.constant 0 : i32
    return %c0_i32, %c0_i32_0 : i32, i32
  }
  func.func @transform_3(%arg0: i32) -> (i32, i32) {
    %c0_i32 = arith.constant 0 : i32
    %c0_i32_0 = arith.constant 0 : i32
    %c0_i32_1 = arith.constant 0 : i32
    return %c0_i32, %c0_i32_0 : i32, i32
  }
  func.func @transform_4(%arg0: i32) -> (i32, i32, i32) {
    %c0_i32 = arith.constant 0 : i32
    %c0_i32_0 = arith.constant 0 : i32
    %c0_i32_1 = arith.constant 0 : i32
    %c0_i32_2 = arith.constant 0 : i32
    return %c0_i32, %c0_i32_0, %c0_i32_1 : i32, i32, i32
  }
  func.func @transform_5(%arg0: i32) -> (i32, i32) {
    %c0_i32 = arith.constant 0 : i32
    %c0_i32_0 = arith.constant 0 : i32
    %c0_i32_1 = arith.constant 0 : i32
    return %c0_i32, %c0_i32_0 : i32, i32
  }
  func.func @transform_6(%arg0: i32) -> (i32, i32) {
    %c0_i32 = arith.constant 0 : i32
    %c0_i32_0 = arith.constant 0 : i32
    %c0_i32_1 = arith.constant 0 : i32
    return %c0_i32, %c0_i32_0 : i32, i32
  }
  func.func @transform_7(%arg0: i32) -> (i32, i32) {
    %c0_i32 = arith.constant 0 : i32
    %c0_i32_0 = arith.constant 0 : i32
    %c0_i32_1 = arith.constant 0 : i32
    return %c0_i32, %c0_i32_0 : i32, i32
  }
  func.func @transform_8(%arg0: i32) -> (i32, i32) {
    %c0_i32 = arith.constant 0 : i32
    %c0_i32_0 = arith.constant 0 : i32
    %c0_i32_1 = arith.constant 0 : i32
    return %c0_i32, %c0_i32_0 : i32, i32
  }
  func.func @transform_9(%arg0: i32) -> (i32, i32) {
    %c0_i32 = arith.constant 0 : i32
    %c0_i32_0 = arith.constant 0 : i32
    %c0_i32_1 = arith.constant 0 : i32
    return %c0_i32, %c0_i32_0 : i32, i32
  }
  func.func @transform_10(%arg0: i32) -> (i32, i32) {
    %c0_i32 = arith.constant 0 : i32
    %c0_i32_0 = arith.constant 0 : i32
    %c0_i32_1 = arith.constant 0 : i32
    return %c0_i32, %c0_i32_0 : i32, i32
  }
  func.func @transform_11(%arg0: i32) -> (i32, i32) {
    %c0_i32 = arith.constant 0 : i32
    %c0_i32_0 = arith.constant 0 : i32
    %c0_i32_1 = arith.constant 0 : i32
    return %c0_i32, %c0_i32_0 : i32, i32
  }
  func.func @transform_12(%arg0: i32) -> (i32, i32, i32, i32) {
    %c0_i32 = arith.constant 0 : i32
    %c0_i32_0 = arith.constant 0 : i32
    %c0_i32_1 = arith.constant 0 : i32
    %c0_i32_2 = arith.constant 0 : i32
    return %arg0, %c0_i32, %c0_i32_0, %c0_i32_1 : i32, i32, i32, i32
  }
}

</mosaic_0001>

<llo_original>
// kernel: tpu_custom_call.1
$region0: #{tpu_custom_call.1}
  #allocation0 [shape = 'u32[]', space=smem, size = 0x4, offset = 0x4, fixed_abs, tag = 'smem constant byte address 0x4 - core index']
  #allocation1 [shape = 'u32[144,128]{1,0:T(1,128)}', space=vmem, size = 0x12000, scoped, tag = 'internal scratch']
  #allocation2 [shape = 'f32[18,18,128]{2,1,0:T(8,128)}', space=vmem, size = 0x36000, scoped, tag = 'scratch operand']
  %s0 = inlined_call_operand.hbm [shape: f32[2,16,16,64], index: 0, kind: input, shape index: {}]
  %s1 = inlined_call_operand.hbm [shape: f32[64,128], index: 1, kind: input, shape index: {}]
  %s2 = inlined_call_operand.vmem [shape: f32[1,128], index: 2, kind: input, shape index: {}]
  %s3 = inlined_call_operand.vmem [shape: f32[1,128], index: 3, kind: input, shape index: {}]
  %s4 = inlined_call_operand.hbm [shape: f32[9,128,128], index: 4, kind: input, shape index: {}]
  %s5 = inlined_call_operand.vmem [shape: f32[1,128], index: 5, kind: input, shape index: {}]
  %s6 = inlined_call_operand.vmem [shape: f32[1,128], index: 6, kind: input, shape index: {}]
  %s7 = inlined_call_operand.hbm [shape: f32[128,128], index: 7, kind: input, shape index: {}]
  %s8 = inlined_call_operand.vmem [shape: f32[1,128], index: 8, kind: input, shape index: {}]
  %s9 = inlined_call_operand.vmem [shape: f32[1,128], index: 9, kind: input, shape index: {}]
  %s10 = inlined_call_operand.hbm [shape: f32[64,128], index: 10, kind: input, shape index: {}]
  %s11 = inlined_call_operand.vmem [shape: f32[1,128], index: 11, kind: input, shape index: {}]
  %s12 = inlined_call_operand.hbm [shape: f32[2,16,16,128], index: 12, kind: output, shape index: {}]
  %s13 = sld [smem:[#allocation0]]
  $region101: #{tpu_custom_call.1} parent=0
    _
  %s15 = ssub.s32 1, %s13
  %s16 = scalar_select 0, %s15, %s13
  $region1: #{tpu_custom_call.1} parent=0
    #allocation3 [shape = 'u8[262144]{0}', space=vmem, size = 0x40000, scoped, tag = 'input window, operand 0']
    #allocation4 [shape = 's32[2]{0}', space=sflag, size = 0x8, scoped, tag = 'scoped memory for tpu_custom_call.1']
    #allocation5 [shape = 's32[2]{0}', space=sflag, size = 0x8, scoped, tag = 'scoped memory for tpu_custom_call.1']
    #allocation6 [shape = 'u8[32768]{0}', space=vmem, size = 0x8000, scoped, tag = 'input window, operand 1, single buffered']
    #allocation7 [shape = 's32[1]{0}', space=sflag, size = 0x4, scoped, tag = 'scoped memory for tpu_custom_call.1']
    #allocation8 [shape = 'u8[589824]{0}', space=vmem, size = 0x90000, scoped, tag = 'input window, operand 4, single buffered']
    #allocation9 [shape = 'u8[65536]{0}', space=vmem, size = 0x10000, scoped, tag = 'input window, operand 7, single buffered']
    #allocation10 [shape = 's32[1]{0}', space=sflag, size = 0x4, scoped, tag = 'scoped memory for tpu_custom_call.1']
    #allocation11 [shape = 'u8[32768]{0}', space=vmem, size = 0x8000, scoped, tag = 'input window, operand 10, single buffered']
    #allocation12 [shape = 'u8[262144]{0}', space=vmem, size = 0x40000, scoped, tag = 'output window, operand 0']
    %17 = vsyncpa [#allocation4], 0
    %s18 = scalar_lea.sflag [#allocation4], 1
    %19 = vsyncpa %s18, 0
    %20 = vsyncpa [#allocation7], 0
    %21 = vsyncpa [#allocation10], 0
    %22 = vsyncpa [#allocation5], 0
    %s23 = scalar_lea.sflag [#allocation5], 1
    %24 = vsyncpa %s23, 0
    loop: start=0, step=1, limit=4
    $region2: #{tpu_custom_call.1} parent=1 // loop_pre_header
      _
    $region3: #{tpu_custom_call.1} parent=1 // loop_header
      %s26 = sphi 0, %s30
      %p27 = scmp.ge.s32.totalorder %s26, 4
      %s36 = sphi 0, %s38
      %s39 = sphi 0, %s36
      %s40 = sphi 0, %s39
      %s56 = sphi 0, %s40
      %s60 = sphi 0, %s60
      %s62 = sphi 0, %s60
      %s63 = sphi 0, %s62
      %s77 = sphi 0, %s63
      %s81 = sphi 0, %s81
      %s83 = sphi 0, %s81
      %s84 = sphi 0, %s83
      %s98 = sphi 0, %s84
      %s102 = sphi 0, %s102
      %s104 = sphi 0, %s102
      %s105 = sphi 0, %s104
      %s119 = sphi 0, %s105
      %s123 = sphi 0, %s123
      %s125 = sphi 0, %s123
      %s126 = sphi 0, %s125
      %s140 = sphi 0, %s126
      %s144 = sphi 0, %s144
      %s146 = sphi 0, %s144
      %s147 = sphi 0, %s146
      %s161 = sphi 0, %s147
      %s165 = sphi 0, %s165
      %s167 = sphi 0, %s165
      %s168 = sphi 0, %s167
      %s182 = sphi 0, %s168
      %s186 = sphi 0, %s186
      %s188 = sphi 0, %s186
      %s189 = sphi 0, %s188
      %s203 = sphi 0, %s189
      %s207 = sphi 0, %s207
      %s209 = sphi 0, %s207
      %s210 = sphi 0, %s209
      %s224 = sphi 0, %s210
      %s228 = sphi 0, %s228
      %s230 = sphi 0, %s228
      %s231 = sphi 0, %s230
      %s245 = sphi 0, %s231
      %s249 = sphi 0, %s249
      %s251 = sphi 0, %s249
      %s252 = sphi 0, %s251
      %s266 = sphi 0, %s252
      %s270 = sphi 0, %s270
      %s272 = sphi 0, %s270
      %s273 = sphi 0, %s272
      %s287 = sphi 0, %s273
      %s293 = sphi 0, %s295
      %s296 = sphi 0, %s293
      %s297 = sphi 0, %s296
      %s313 = sphi 0, %s297
    $region4: #{tpu_custom_call.1} parent=1 // loop_header_branch
      %29 = sbr.rel (%p27) target = $region8
    $region5: #{tpu_custom_call.1} parent=1 // loop_body
      %s31 = ssub.s32 %s26, 1
      %s32 = ssub.s32 %s26, 2
      %s33 = sadd.s32 %s26, 1
      %s34 = ssub.s32 %s26, %s33
      %p35 = scmp.eq.s32.totalorder %s34, 0
      %s37 = sadd.s32 %s36, 1
      %s38 = scalar_select %p35, %s36, %s37
      %p41 = pneg %p35
      %p42 = scmp.eq.s32.totalorder %s26, 1
      %p43 = por %p41, %p42
      %p44 = scmp.ne.s32.totalorder %s36, %s39
      %p45 = scmp.eq.s32.totalorder %s26, 0
      %p46 = por %p44, %p45
      %p47 = scmp.ne.s32.totalorder %s36, %s39
      %p48 = scmp.eq.s32.totalorder %s31, 1
      %p49 = por %p47, %p48
      %p50 = scmp.ne.s32.totalorder %s39, %s40
      %p51 = scmp.eq.s32.totalorder %s31, 0
      %p52 = por %p50, %p51
      %p53 = scmp.ne.s32.totalorder %s39, %s40
      %p54 = scmp.eq.s32.totalorder %s32, 1
      %p55 = por %p53, %p54
      %p57 = scmp.ne.s32.totalorder %s40, %s56
      %p58 = scmp.eq.s32.totalorder %s32, 0
      %p59 = por %p57, %p58
      %s61 = sadd.s32 %s60, 1
      %p64 = scmp.eq.s32.totalorder %s26, 1
      %p65 = scmp.ne.s32.totalorder %s60, %s62
      %p66 = scmp.eq.s32.totalorder %s26, 0
      %p67 = por %p65, %p66
      %p68 = scmp.ne.s32.totalorder %s60, %s62
      %p69 = scmp.eq.s32.totalorder %s31, 1
      %p70 = por %p68, %p69
      %p71 = scmp.ne.s32.totalorder %s62, %s63
      %p72 = scmp.eq.s32.totalorder %s31, 0
      %p73 = por %p71, %p72
      %p74 = scmp.ne.s32.totalorder %s62, %s63
      %p75 = scmp.eq.s32.totalorder %s32, 1
      %p76 = por %p74, %p75
      %p78 = scmp.ne.s32.totalorder %s63, %s77
      %p79 = scmp.eq.s32.totalorder %s32, 0
      %p80 = por %p78, %p79
      %s82 = sadd.s32 %s81, 1
      %p85 = scmp.eq.s32.totalorder %s26, 1
      %p86 = scmp.ne.s32.totalorder %s81, %s83
      %p87 = scmp.eq.s32.totalorder %s26, 0
      %p88 = por %p86, %p87
      %p89 = scmp.ne.s32.totalorder %s81, %s83
      %p90 = scmp.eq.s32.totalorder %s31, 1
      %p91 = por %p89, %p90
      %p92 = scmp.ne.s32.totalorder %s83, %s84
      %p93 = scmp.eq.s32.totalorder %s31, 0
      %p94 = por %p92, %p93
      %p95 = scmp.ne.s32.totalorder %s83, %s84
      %p96 = scmp.eq.s32.totalorder %s32, 1
      %p97 = por %p95, %p96
      %p99 = scmp.ne.s32.totalorder %s84, %s98
      %p100 = scmp.eq.s32.totalorder %s32, 0
      %p101 = por %p99, %p100
      %s103 = sadd.s32 %s102, 1
      %p106 = scmp.eq.s32.totalorder %s26, 1
      %p107 = scmp.ne.s32.totalorder %s102, %s104
      %p108 = scmp.eq.s32.totalorder %s26, 0
      %p109 = por %p107, %p108
      %p110 = scmp.ne.s32.totalorder %s102, %s104
      %p111 = scmp.eq.s32.totalorder %s31, 1
      %p112 = por %p110, %p111
      %p113 = scmp.ne.s32.totalorder %s104, %s105
      %p114 = scmp.eq.s32.totalorder %s31, 0
      %p115 = por %p113, %p114
      %p116 = scmp.ne.s32.totalorder %s104, %s105
      %p117 = scmp.eq.s32.totalorder %s32, 1
      %p118 = por %p116, %p117
      %p120 = scmp.ne.s32.totalorder %s105, %s119
      %p121 = scmp.eq.s32.totalorder %s32, 0
      %p122 = por %p120, %p121
      %s124 = sadd.s32 %s123, 1
      %p127 = scmp.eq.s32.totalorder %s26, 1
      %p128 = scmp.ne.s32.totalorder %s123, %s125
      %p129 = scmp.eq.s32.totalorder %s26, 0
      %p130 = por %p128, %p129
      %p131 = scmp.ne.s32.totalorder %s123, %s125
      %p132 = scmp.eq.s32.totalorder %s31, 1
      %p133 = por %p131, %p132
      %p134 = scmp.ne.s32.totalorder %s125, %s126
      %p135 = scmp.eq.s32.totalorder %s31, 0
      %p136 = por %p134, %p135
      %p137 = scmp.ne.s32.totalorder %s125, %s126
      %p138 = scmp.eq.s32.totalorder %s32, 1
      %p139 = por %p137, %p138
      %p141 = scmp.ne.s32.totalorder %s126, %s140
      %p142 = scmp.eq.s32.totalorder %s32, 0
      %p143 = por %p141, %p142
      %s145 = sadd.s32 %s144, 1
      %p148 = scmp.eq.s32.totalorder %s26, 1
      %p149 = scmp.ne.s32.totalorder %s144, %s146
      %p150 = scmp.eq.s32.totalorder %s26, 0
      %p151 = por %p149, %p150
      %p152 = scmp.ne.s32.totalorder %s144, %s146
      %p153 = scmp.eq.s32.totalorder %s31, 1
      %p154 = por %p152, %p153
      %p155 = scmp.ne.s32.totalorder %s146, %s147
      %p156 = scmp.eq.s32.totalorder %s31, 0
      %p157 = por %p155, %p156
      %p158 = scmp.ne.s32.totalorder %s146, %s147
      %p159 = scmp.eq.s32.totalorder %s32, 1
      %p160 = por %p158, %p159
      %p162 = scmp.ne.s32.totalorder %s147, %s161
      %p163 = scmp.eq.s32.totalorder %s32, 0
      %p164 = por %p162, %p163
      %s166 = sadd.s32 %s165, 1
      %p169 = scmp.eq.s32.totalorder %s26, 1
      %p170 = scmp.ne.s32.totalorder %s165, %s167
      %p171 = scmp.eq.s32.totalorder %s26, 0
      %p172 = por %p170, %p171
      %p173 = scmp.ne.s32.totalorder %s165, %s167
      %p174 = scmp.eq.s32.totalorder %s31, 1
      %p175 = por %p173, %p174
      %p176 = scmp.ne.s32.totalorder %s167, %s168
      %p177 = scmp.eq.s32.totalorder %s31, 0
      %p178 = por %p176, %p177
      %p179 = scmp.ne.s32.totalorder %s167, %s168
      %p180 = scmp.eq.s32.totalorder %s32, 1
      %p181 = por %p179, %p180
      %p183 = scmp.ne.s32.totalorder %s168, %s182
      %p184 = scmp.eq.s32.totalorder %s32, 0
      %p185 = por %p183, %p184
      %s187 = sadd.s32 %s186, 1
      %p190 = scmp.eq.s32.totalorder %s26, 1
      %p191 = scmp.ne.s32.totalorder %s186, %s188
      %p192 = scmp.eq.s32.totalorder %s26, 0
      %p193 = por %p191, %p192
      %p194 = scmp.ne.s32.totalorder %s186, %s188
      %p195 = scmp.eq.s32.totalorder %s31, 1
      %p196 = por %p194, %p195
      %p197 = scmp.ne.s32.totalorder %s188, %s189
      %p198 = scmp.eq.s32.totalorder %s31, 0
      %p199 = por %p197, %p198
      %p200 = scmp.ne.s32.totalorder %s188, %s189
      %p201 = scmp.eq.s32.totalorder %s32, 1
      %p202 = por %p200, %p201
      %p204 = scmp.ne.s32.totalorder %s189, %s203
      %p205 = scmp.eq.s32.totalorder %s32, 0
      %p206 = por %p204, %p205
      %s208 = sadd.s32 %s207, 1
      %p211 = scmp.eq.s32.totalorder %s26, 1
      %p212 = scmp.ne.s32.totalorder %s207, %s209
      %p213 = scmp.eq.s32.totalorder %s26, 0
      %p214 = por %p212, %p213
      %p215 = scmp.ne.s32.totalorder %s207, %s209
      %p216 = scmp.eq.s32.totalorder %s31, 1
      %p217 = por %p215, %p216
      %p218 = scmp.ne.s32.totalorder %s209, %s210
      %p219 = scmp.eq.s32.totalorder %s31, 0
      %p220 = por %p218, %p219
      %p221 = scmp.ne.s32.totalorder %s209, %s210
      %p222 = scmp.eq.s32.totalorder %s32, 1
      %p223 = por %p221, %p222
      %p225 = scmp.ne.s32.totalorder %s210, %s224
      %p226 = scmp.eq.s32.totalorder %s32, 0
      %p227 = por %p225, %p226
      %s229 = sadd.s32 %s228, 1
      %p232 = scmp.eq.s32.totalorder %s26, 1
      %p233 = scmp.ne.s32.totalorder %s228, %s230
      %p234 = scmp.eq.s32.totalorder %s26, 0
      %p235 = por %p233, %p234
      %p236 = scmp.ne.s32.totalorder %s228, %s230
      %p237 = scmp.eq.s32.totalorder %s31, 1
      %p238 = por %p236, %p237
      %p239 = scmp.ne.s32.totalorder %s230, %s231
      %p240 = scmp.eq.s32.totalorder %s31, 0
      %p241 = por %p239, %p240
      %p242 = scmp.ne.s32.totalorder %s230, %s231
      %p243 = scmp.eq.s32.totalorder %s32, 1
      %p244 = por %p242, %p243
      %p246 = scmp.ne.s32.totalorder %s231, %s245
      %p247 = scmp.eq.s32.totalorder %s32, 0
      %p248 = por %p246, %p247
      %s250 = sadd.s32 %s249, 1
      %p253 = scmp.eq.s32.totalorder %s26, 1
      %p254 = scmp.ne.s32.totalorder %s249, %s251
      %p255 = scmp.eq.s32.totalorder %s26, 0
      %p256 = por %p254, %p255
      %p257 = scmp.ne.s32.totalorder %s249, %s251
      %p258 = scmp.eq.s32.totalorder %s31, 1
      %p259 = por %p257, %p258
      %p260 = scmp.ne.s32.totalorder %s251, %s252
      %p261 = scmp.eq.s32.totalorder %s31, 0
      %p262 = por %p260, %p261
      %p263 = scmp.ne.s32.totalorder %s251, %s252
      %p264 = scmp.eq.s32.totalorder %s32, 1
      %p265 = por %p263, %p264
      %p267 = scmp.ne.s32.totalorder %s252, %s266
      %p268 = scmp.eq.s32.totalorder %s32, 0
      %p269 = por %p267, %p268
      %s271 = sadd.s32 %s270, 1
      %p274 = scmp.eq.s32.totalorder %s26, 1
      %p275 = scmp.ne.s32.totalorder %s270, %s272
      %p276 = scmp.eq.s32.totalorder %s26, 0
      %p277 = por %p275, %p276
      %p278 = scmp.ne.s32.totalorder %s270, %s272
      %p279 = scmp.eq.s32.totalorder %s31, 1
      %p280 = por %p278, %p279
      %p281 = scmp.ne.s32.totalorder %s272, %s273
      %p282 = scmp.eq.s32.totalorder %s31, 0
      %p283 = por %p281, %p282
      %p284 = scmp.ne.s32.totalorder %s272, %s273
      %p285 = scmp.eq.s32.totalorder %s32, 1
      %p286 = por %p284, %p285
      %p288 = scmp.ne.s32.totalorder %s273, %s287
      %p289 = scmp.eq.s32.totalorder %s32, 0
      %p290 = por %p288, %p289
      %s291 = ssub.s32 %s26, %s33
      %p292 = scmp.eq.s32.totalorder %s291, 0
      %s294 = sadd.s32 %s293, 1
      %s295 = scalar_select %p292, %s293, %s294
      %p298 = pneg %p292
      %p299 = scmp.eq.s32.totalorder %s26, 1
      %p300 = por %p298, %p299
      %p301 = scmp.ne.s32.totalorder %s293, %s296
      %p302 = scmp.eq.s32.totalorder %s26, 0
      %p303 = por %p301, %p302
      %p304 = scmp.ne.s32.totalorder %s293, %s296
      %p305 = scmp.eq.s32.totalorder %s31, 1
      %p306 = por %p304, %p305
      %p307 = scmp.ne.s32.totalorder %s296, %s297
      %p308 = scmp.eq.s32.totalorder %s31, 0
      %p309 = por %p307, %p308
      %p310 = scmp.ne.s32.totalorder %s296, %s297
      %p311 = scmp.eq.s32.totalorder %s32, 1
      %p312 = por %p310, %p311
      %p314 = scmp.ne.s32.totalorder %s297, %s313
      %p315 = scmp.eq.s32.totalorder %s32, 0
      %p316 = por %p314, %p315
      %p317 = scmp.le.s32.totalorder 1, %s26
      %p318 = scmp.lt.s32.totalorder %s26, 3
      %p319 = pnand %p317, %p318
      %p320 = pneg %p319
      // Predicated region
      $region9: #{tpu_custom_call.1} parent=5 // pred_check
        _
      $region10: #{tpu_custom_call.1} parent=5 // pred_check_branch
        %322 = sbr.rel (%p319) target = $region12
      $region11: #{tpu_custom_call.1} parent=5 // pred_region
        %s323 = ssub.s32 %s26, 1
        // Predicated region
        $region13: #{tpu_custom_call.1} parent=11 // pred_check
          %p324 = pneg %p73
        $region14: #{tpu_custom_call.1} parent=11 // pred_check_branch
          %326 = sbr.rel (%p324) target = $region16
        $region15: #{tpu_custom_call.1} parent=11 // pred_region
          %s328 = ssub.s32 1024, 1024
          %329 = vsyncadd [#allocation7], %s328
          %s330 = sshll.u32 [#allocation6], 4
          %s331 = int_to_ptr.vmem [resolvable:$true] %s330
          %336 = dma.hbm_to_vmem [thread:$0]  %s1, 1024, %s331, [#allocation7], 128, 128, 8
        $region16: #{tpu_custom_call.1} parent=11 // pred_fallthru
          _
        // Predicated region
        $region17: #{tpu_custom_call.1} parent=11 // pred_check
          %p337 = pneg %p94
        $region18: #{tpu_custom_call.1} parent=11 // pred_check_branch
          %339 = sbr.rel (%p337) target = $region20
        $region19: #{tpu_custom_call.1} parent=11 // pred_region
          _
        $region20: #{tpu_custom_call.1} parent=11 // pred_fallthru
          _
        // Predicated region
        $region21: #{tpu_custom_call.1} parent=11 // pred_check
          %p340 = pneg %p115
        $region22: #{tpu_custom_call.1} parent=11 // pred_check_branch
          %342 = sbr.rel (%p340) target = $region24
        $region23: #{tpu_custom_call.1} parent=11 // pred_region
          _
        $region24: #{tpu_custom_call.1} parent=11 // pred_fallthru
          _
        // Predicated region
        $region25: #{tpu_custom_call.1} parent=11 // pred_check
          %p343 = pneg %p136
        $region26: #{tpu_custom_call.1} parent=11 // pred_check_branch
          %345 = sbr.rel (%p343) target = $region28
        $region27: #{tpu_custom_call.1} parent=11 // pred_region
          %s347 = ssub.s32 18432, 18432
          %348 = vsyncadd [#allocation7], %s347
          %s349 = sshll.u32 [#allocation8], 4
          %s350 = int_to_ptr.vmem [resolvable:$true] %s349
          %355 = dma.hbm_to_vmem [thread:$0]  %s4, 18432, %s350, [#allocation7], 128, 128, 8
        $region28: #{tpu_custom_call.1} parent=11 // pred_fallthru
          _
        // Predicated region
        $region29: #{tpu_custom_call.1} parent=11 // pred_check
          %p356 = pneg %p157
        $region30: #{tpu_custom_call.1} parent=11 // pred_check_branch
          %358 = sbr.rel (%p356) target = $region32
        $region31: #{tpu_custom_call.1} parent=11 // pred_region
          _
        $region32: #{tpu_custom_call.1} parent=11 // pred_fallthru
          _
        // Predicated region
        $region33: #{tpu_custom_call.1} parent=11 // pred_check
          %p359 = pneg %p178
        $region34: #{tpu_custom_call.1} parent=11 // pred_check_branch
          %361 = sbr.rel (%p359) target = $region36
        $region35: #{tpu_custom_call.1} parent=11 // pred_region
          _
        $region36: #{tpu_custom_call.1} parent=11 // pred_fallthru
          _
        // Predicated region
        $region37: #{tpu_custom_call.1} parent=11 // pred_check
          %p362 = pneg %p199
        $region38: #{tpu_custom_call.1} parent=11 // pred_check_branch
          %364 = sbr.rel (%p362) target = $region40
        $region39: #{tpu_custom_call.1} parent=11 // pred_region
          %s366 = ssub.s32 2048, 2048
          %367 = vsyncadd [#allocation10], %s366
          %s368 = sshll.u32 [#allocation9], 4
          %s369 = int_to_ptr.vmem [resolvable:$true] %s368
          %374 = dma.hbm_to_vmem [thread:$0]  %s7, 2048, %s369, [#allocation10], 128, 128, 8
        $region40: #{tpu_custom_call.1} parent=11 // pred_fallthru
          _
        // Predicated region
        $region41: #{tpu_custom_call.1} parent=11 // pred_check
          %p375 = pneg %p220
        $region42: #{tpu_custom_call.1} parent=11 // pred_check_branch
          %377 = sbr.rel (%p375) target = $region44
        $region43: #{tpu_custom_call.1} parent=11 // pred_region
          _
        $region44: #{tpu_custom_call.1} parent=11 // pred_fallthru
          _
        // Predicated region
        $region45: #{tpu_custom_call.1} parent=11 // pred_check
          %p378 = pneg %p241
        $region46: #{tpu_custom_call.1} parent=11 // pred_check_branch
          %380 = sbr.rel (%p378) target = $region48
        $region47: #{tpu_custom_call.1} parent=11 // pred_region
          _
        $region48: #{tpu_custom_call.1} parent=11 // pred_fallthru
          _
        // Predicated region
        $region49: #{tpu_custom_call.1} parent=11 // pred_check
          %p381 = pneg %p262
        $region50: #{tpu_custom_call.1} parent=11 // pred_check_branch
          %383 = sbr.rel (%p381) target = $region52
        $region51: #{tpu_custom_call.1} parent=11 // pred_region
          %s385 = ssub.s32 1024, 1024
          %386 = vsyncadd [#allocation10], %s385
          %s387 = sshll.u32 [#allocation11], 4
          %s388 = int_to_ptr.vmem [resolvable:$true] %s387
          %393 = dma.hbm_to_vmem [thread:$0]  %s10, 1024, %s388, [#allocation10], 128, 128, 8
        $region52: #{tpu_custom_call.1} parent=11 // pred_fallthru
          _
        // Predicated region
        $region53: #{tpu_custom_call.1} parent=11 // pred_check
          %p394 = pneg %p283
        $region54: #{tpu_custom_call.1} parent=11 // pred_check_branch
          %396 = sbr.rel (%p394) target = $region56
        $region55: #{tpu_custom_call.1} parent=11 // pred_region
          _
        $region56: #{tpu_custom_call.1} parent=11 // pred_fallthru
          _
      $region12: #{tpu_custom_call.1} parent=5 // pred_fallthru
        _
      %p397 = scmp.lt.s32.totalorder %s26, 2
      // Predicated region
      $region57: #{tpu_custom_call.1} parent=5 // pred_check
        %p398 = pneg %p397
      $region58: #{tpu_custom_call.1} parent=5 // pred_check_branch
        %400 = sbr.rel (%p398) target = $region60
      $region59: #{tpu_custom_call.1} parent=5 // pred_region
        // Predicated region
        $region61: #{tpu_custom_call.1} parent=59 // pred_check
          %p401 = pneg %p46
        $region62: #{tpu_custom_call.1} parent=59 // pred_check_branch
          %403 = sbr.rel (%p401) target = $region64
        $region63: #{tpu_custom_call.1} parent=59 // pred_region
          %s404 = sand.u32 %s36, 1
          %s405 = scalar_lea.sflag [#allocation4], %s404
          %s406 = sand.u32 %s36, 1
          %s407 = smul.addr %s406, 256
          %s408 = scalar_lea.vmem [#allocation3], %s407
          %s410 = ssub.s32 4096, 4096
          %411 = vsyncadd %s405, %s410
          %s412 = smul.addr %s26, 32
          %s413 = smul.addr %s412, 128
          %s414 = scalar_lea.hbm %s0, %s413
          %s415 = sshll.u32 %s408, 4
          %s416 = int_to_ptr.vmem [resolvable:$true] %s415
          %421 = dma.hbm_to_vmem [thread:$0]  %s414, 4096, %s416, %s405, 128, 128, 8
        $region64: #{tpu_custom_call.1} parent=59 // pred_fallthru
          _
      $region60: #{tpu_custom_call.1} parent=5 // pred_fallthru
        _
      %p422 = scmp.le.s32.totalorder 1, %s26
      %p423 = scmp.lt.s32.totalorder %s26, 3
      %p424 = pnand %p422, %p423
      %p425 = pneg %p424
      // Predicated region
      $region65: #{tpu_custom_call.1} parent=5 // pred_check
        _
      $region66: #{tpu_custom_call.1} parent=5 // pred_check_branch
        %427 = sbr.rel (%p424) target = $region68
      $region67: #{tpu_custom_call.1} parent=5 // pred_region
        %s428 = ssub.s32 %s26, 1
        %s429 = sand.u32 %s39, 1
        %s430 = scalar_lea.sflag [#allocation4], %s429
        %s431 = sand.u32 %s39, 1
        %s432 = smul.addr %s431, 256
        %s433 = scalar_lea.vmem [#allocation3], %s432
        // Predicated region
        $region69: #{tpu_custom_call.1} parent=67 // pred_check
          %p434 = pneg %p52
        $region70: #{tpu_custom_call.1} parent=67 // pred_check_branch
          %436 = sbr.rel (%p434) target = $region72
        $region71: #{tpu_custom_call.1} parent=67 // pred_region
          %437 = dma.done %s430, 4096
        $region72: #{tpu_custom_call.1} parent=67 // pred_fallthru
          _
        // Predicated region
        $region73: #{tpu_custom_call.1} parent=67 // pred_check
          %p438 = pneg %p73
        $region74: #{tpu_custom_call.1} parent=67 // pred_check_branch
          %440 = sbr.rel (%p438) target = $region76
        $region75: #{tpu_custom_call.1} parent=67 // pred_region
          %441 = dma.done [#allocation7], 1024
        $region76: #{tpu_custom_call.1} parent=67 // pred_fallthru
          _
        // Predicated region
        $region77: #{tpu_custom_call.1} parent=67 // pred_check
          %p442 = pneg %p136
        $region78: #{tpu_custom_call.1} parent=67 // pred_check_branch
          %444 = sbr.rel (%p442) target = $region80
        $region79: #{tpu_custom_call.1} parent=67 // pred_region
          %445 = dma.done [#allocation7], 18432
        $region80: #{tpu_custom_call.1} parent=67 // pred_fallthru
          _
        // Predicated region
        $region81: #{tpu_custom_call.1} parent=67 // pred_check
          %p446 = pneg %p199
        $region82: #{tpu_custom_call.1} parent=67 // pred_check_branch
          %448 = sbr.rel (%p446) target = $region84
        $region83: #{tpu_custom_call.1} parent=67 // pred_region
          %449 = dma.done [#allocation10], 2048
        $region84: #{tpu_custom_call.1} parent=67 // pred_fallthru
          _
        // Predicated region
        $region85: #{tpu_custom_call.1} parent=67 // pred_check
          %p450 = pneg %p262
        $region86: #{tpu_custom_call.1} parent=67 // pred_check_branch
          %452 = sbr.rel (%p450) target = $region88
        $region87: #{tpu_custom_call.1} parent=67 // pred_region
          %453 = dma.done [#allocation10], 1024
        $region88: #{tpu_custom_call.1} parent=67 // pred_fallthru
          _
        %s454 = sand.u32 %s39, 1
        %s455 = scalar_lea.sflag [#allocation4], %s454
        %s456 = sand.u32 %s39, 1
        %s457 = smul.addr %s456, 256
        %s458 = scalar_lea.vmem [#allocation3], %s457
        %p459 = pneg %p52
        %p460 = pneg %p49
        %p461 = pneg %p73
        %p462 = pneg %p70
        %p463 = pneg %p94
        %p464 = pneg %p91
        %p465 = pneg %p115
        %p466 = pneg %p112
        %p467 = pneg %p136
        %p468 = pneg %p133
        %p469 = pneg %p157
        %p470 = pneg %p154
        %p471 = pneg %p178
        %p472 = pneg %p175
        %p473 = pneg %p199
        %p474 = pneg %p196
        %p475 = pneg %p220
        %p476 = pneg %p217
        %p477 = pneg %p241
        %p478 = pneg %p238
        %p479 = pneg %p262
        %p480 = pneg %p259
        %p481 = pneg %p283
        %p482 = pneg %p280
        %p483 = pneg %p309
        %p484 = pneg %p306
        %s485 = sand.u32 %s296, 1
        %s486 = scalar_lea.sflag [#allocation5], %s485
        %s487 = sand.u32 %s296, 1
        %s488 = smul.addr %s487, 256
        %s489 = scalar_lea.vmem [#allocation12], %s488
        %v490 = vld [vmem:[%s433] sm:$0xff]
        %v491 = vld [vmem:[%s433 + $0x8] sm:$0xff]
        %v492 = vld [vmem:[%s433 + $0x10] sm:$0xff]
        %v493 = vld [vmem:[%s433 + $0x18] sm:$0xff]
        %v494 = vld [vmem:[%s433 + $0x20] sm:$0xff]
        %v495 = vld [vmem:[%s433 + $0x28] sm:$0xff]
        %v496 = vld [vmem:[%s433 + $0x30] sm:$0xff]
        %v497 = vld [vmem:[%s433 + $0x38] sm:$0xff]
        %v498 = vld [vmem:[%s433 + $0x40] sm:$0xff]
        %v499 = vld [vmem:[%s433 + $0x48] sm:$0xff]
        %v500 = vld [vmem:[%s433 + $0x50] sm:$0xff]
        %v501 = vld [vmem:[%s433 + $0x58] sm:$0xff]
        %v502 = vld [vmem:[%s433 + $0x60] sm:$0xff]
        %v503 = vld [vmem:[%s433 + $0x68] sm:$0xff]
        %v504 = vld [vmem:[%s433 + $0x70] sm:$0xff]
        %v505 = vld [vmem:[%s433 + $0x78] sm:$0xff]
        %v506 = vld [vmem:[%s433 + $0x80] sm:$0xff]
        %v507 = vld [vmem:[%s433 + $0x88] sm:$0xff]
        %v508 = vld [vmem:[%s433 + $0x90] sm:$0xff]
        %v509 = vld [vmem:[%s433 + $0x98] sm:$0xff]
        %v510 = vld [vmem:[%s433 + $0xa0] sm:$0xff]
        %v511 = vld [vmem:[%s433 + $0xa8] sm:$0xff]
        %v512 = vld [vmem:[%s433 + $0xb0] sm:$0xff]
        %v513 = vld [vmem:[%s433 + $0xb8] sm:$0xff]
        %v514 = vld [vmem:[%s433 + $0xc0] sm:$0xff]
        %v515 = vld [vmem:[%s433 + $0xc8] sm:$0xff]
        %v516 = vld [vmem:[%s433 + $0xd0] sm:$0xff]
        %v517 = vld [vmem:[%s433 + $0xd8] sm:$0xff]
        %v518 = vld [vmem:[%s433 + $0xe0] sm:$0xff]
        %v519 = vld [vmem:[%s433 + $0xe8] sm:$0xff]
        %v520 = vld [vmem:[%s433 + $0xf0] sm:$0xff]
        %v521 = vld [vmem:[%s433 + $0xf8] sm:$0xff]
        %v522 = vld [vmem:[#allocation6] sm:$0xff]
        %v523 = vld [vmem:[#allocation6 + $0x8] sm:$0xff]
        %v524 = vld [vmem:[#allocation6 + $0x10] sm:$0xff]
        %v525 = vld [vmem:[#allocation6 + $0x18] sm:$0xff]
        %v526 = vld [vmem:[#allocation6 + $0x20] sm:$0xff]
        %v527 = vld [vmem:[#allocation6 + $0x28] sm:$0xff]
        %v528 = vld [vmem:[#allocation6 + $0x30] sm:$0xff]
        %v529 = vld [vmem:[#allocation6 + $0x38] sm:$0xff]
        %vm530 = vcmask 523264
        %v532 = vsel %vm530, %v490, 0
        %v535 = vsel %vm530, %v491, 0
        %v538 = vsel %vm530, %v492, 0
        %v541 = vsel %vm530, %v493, 0
        %v544 = vsel %vm530, %v494, 0
        %v547 = vsel %vm530, %v495, 0
        %v550 = vsel %vm530, %v496, 0
        %v553 = vsel %vm530, %v497, 0
        %v556 = vsel %vm530, %v498, 0
        %v559 = vsel %vm530, %v499, 0
        %v562 = vsel %vm530, %v500, 0
        %v565 = vsel %vm530, %v501, 0
        %v568 = vsel %vm530, %v502, 0
        %v571 = vsel %vm530, %v503, 0
        %v574 = vsel %vm530, %v504, 0
        %v577 = vsel %vm530, %v505, 0
        %v580 = vsel %vm530, %v506, 0
        %v583 = vsel %vm530, %v507, 0
        %v586 = vsel %vm530, %v508, 0
        %v589 = vsel %vm530, %v509, 0
        %v592 = vsel %vm530, %v510, 0
        %v595 = vsel %vm530, %v511, 0
        %v598 = vsel %vm530, %v512, 0
        %v601 = vsel %vm530, %v513, 0
        %v604 = vsel %vm530, %v514, 0
        %v607 = vsel %vm530, %v515, 0
        %v610 = vsel %vm530, %v516, 0
        %v613 = vsel %vm530, %v517, 0
        %v616 = vsel %vm530, %v518, 0
        %v619 = vsel %vm530, %v519, 0
        %v622 = vsel %vm530, %v520, 0
        %v625 = vsel %vm530, %v521, 0
        %627 = vmatprep.subr.mxu0 0.0
        %628 = vmatpush1.msra.mxu0 0.0
        %629 = vmatprep.subr.mxu0 0.0
        %630 = vmatpush1.msra.mxu0 0.0
        %631 = vmatprep.subr.mxu0 0.0
        %632 = vmatpush1.msra.mxu0 0.0
        %633 = vmatprep.subr.mxu0 0.0
        %634 = vmatpush1.msra.mxu0 0.0
        %635 = vmatprep.subr.mxu0 0.0
        %636 = vmatpush1.msra.mxu0 0.0
        %637 = vmatprep.subr.mxu0 0.0
        %638 = vmatpush1.msra.mxu0 0.0
        %639 = vmatprep.subr.mxu0 0.0
        %640 = vmatpush1.msra.mxu0 0.0
        %641 = vmatprep.subr.mxu0 0.0
        %642 = vmatpush1.msra.mxu0 0.0
        %643 = vmatprep.subr.mxu0 0.0
        %644 = vmatpush1.msra.mxu0 %v529
        %645 = vmatprep.subr.mxu0 0.0
        %646 = vmatpush1.msra.mxu0 %v528
        %647 = vmatprep.subr.mxu0 0.0
        %648 = vmatpush1.msra.mxu0 %v527
        %649 = vmatprep.subr.mxu0 0.0
        %650 = vmatpush1.msra.mxu0 %v526
        %651 = vmatprep.subr.mxu0 0.0
        %652 = vmatpush1.msra.mxu0 %v525
        %653 = vmatprep.subr.mxu0 0.0
        %654 = vmatpush1.msra.mxu0 %v524
        %655 = vmatprep.subr.mxu0 0.0
        %656 = vmatpush1.msra.mxu0 %v523
        %657 = vmatprep.subr.mxu0 0.0
        %658 = vmatpush1.msra.mxu0 %v522
        %659 = vmatprep.subr.mxu0 0.0
        %660 = vmatpush2.msra.mxu0 0.0
        %661 = vmatprep.subr.mxu0 0.0
        %662 = vmatpush2.msra.mxu0 0.0
        %663 = vmatprep.subr.mxu0 0.0
        %664 = vmatpush2.msra.mxu0 0.0
        %665 = vmatprep.subr.mxu0 0.0
        %666 = vmatpush2.msra.mxu0 0.0
        %667 = vmatprep.subr.mxu0 0.0
        %668 = vmatpush2.msra.mxu0 0.0
        %669 = vmatprep.subr.mxu0 0.0
        %670 = vmatpush2.msra.mxu0 0.0
        %671 = vmatprep.subr.mxu0 0.0
        %672 = vmatpush2.msra.mxu0 0.0
        %673 = vmatprep.subr.mxu0 0.0
        %674 = vmatpush2.msra.mxu0 0.0
        %675 = vmatprep.subr.mxu0 0.0
        %676 = vmatpush2.msra.mxu0 0.0
        %677 = vmatprep.subr.mxu0 0.0
        %678 = vmatpush2.msra.mxu0 0.0
        %679 = vmatprep.subr.mxu0 0.0
        %680 = vmatpush2.msra.mxu0 0.0
        %681 = vmatprep.subr.mxu0 0.0
        %682 = vmatpush2.msra.mxu0 0.0
        %683 = vmatprep.subr.mxu0 0.0
        %684 = vmatpush2.msra.mxu0 0.0
        %685 = vmatprep.subr.mxu0 0.0
        %686 = vmatpush2.msra.mxu0 0.0
        %687 = vmatprep.subr.mxu0 0.0
        %688 = vmatpush2.msra.mxu0 0.0
        %689 = vmatprep.subr.mxu0 0.0
        %690 = vmatpush2.msra.mxu0 0.0
        %691 = vmatprep.mubr.f32.mxu0 0.0
        %692 = vmatmul.mubr.f32.gmra.mxu0 %v532
        %v693 = vpop.f32.mrf.mxu0
        %v694 = vadd.f32 0.0, %v693
        %v695 = vpop.f32.mrf.mxu0
        %696 = vmatprep.mubr.f32.mxu0 0.0
        %697 = vmatmul.mubr.f32.gmra.mxu0 %v535
        %v698 = vpop.f32.mrf.mxu0
        %v699 = vadd.f32 0.0, %v698
        %v700 = vpop.f32.mrf.mxu0
        %701 = vmatprep.mubr.f32.mxu0 0.0
        %702 = vmatmul.mubr.f32.gmra.mxu0 %v538
        %v703 = vpop.f32.mrf.mxu0
        %v704 = vadd.f32 0.0, %v703
        %v705 = vpop.f32.mrf.mxu0
        %706 = vmatprep.mubr.f32.mxu0 0.0
        %707 = vmatmul.mubr.f32.gmra.mxu0 %v541
        %v708 = vpop.f32.mrf.mxu0
        %v709 = vadd.f32 0.0, %v708
        %v710 = vpop.f32.mrf.mxu0
        %711 = vmatprep.mubr.f32.mxu0 0.0
        %712 = vmatmul.mubr.f32.gmra.mxu0 %v544
        %v713 = vpop.f32.mrf.mxu0
        %v714 = vadd.f32 0.0, %v713
        %v715 = vpop.f32.mrf.mxu0
        %716 = vmatprep.mubr.f32.mxu0 0.0
        %717 = vmatmul.mubr.f32.gmra.mxu0 %v547
        %v718 = vpop.f32.mrf.mxu0
        %v719 = vadd.f32 0.0, %v718
        %v720 = vpop.f32.mrf.mxu0
        %721 = vmatprep.mubr.f32.mxu0 0.0
        %722 = vmatmul.mubr.f32.gmra.mxu0 %v550
        %v723 = vpop.f32.mrf.mxu0
        %v724 = vadd.f32 0.0, %v723
        %v725 = vpop.f32.mrf.mxu0
        %726 = vmatprep.mubr.f32.mxu0 0.0
        %727 = vmatmul.mubr.f32.gmra.mxu0 %v553
        %v728 = vpop.f32.mrf.mxu0
        %v729 = vadd.f32 0.0, %v728
        %v730 = vpop.f32.mrf.mxu0
        %731 = vmatprep.mubr.f32.mxu0 0.0
        %732 = vmatmul.mubr.f32.gmra.mxu0 %v556
        %v733 = vpop.f32.mrf.mxu0
        %v734 = vadd.f32 0.0, %v733
        %v735 = vpop.f32.mrf.mxu0
        %736 = vmatprep.mubr.f32.mxu0 0.0
        %737 = vmatmul.mubr.f32.gmra.mxu0 %v559
        %v738 = vpop.f32.mrf.mxu0
        %v739 = vadd.f32 0.0, %v738
        %v740 = vpop.f32.mrf.mxu0
        %741 = vmatprep.mubr.f32.mxu0 0.0
        %742 = vmatmul.mubr.f32.gmra.mxu0 %v562
        %v743 = vpop.f32.mrf.mxu0
        %v744 = vadd.f32 0.0, %v743
        %v745 = vpop.f32.mrf.mxu0
        %746 = vmatprep.mubr.f32.mxu0 0.0
        %747 = vmatmul.mubr.f32.gmra.mxu0 %v565
        %v748 = vpop.f32.mrf.mxu0
        %v749 = vadd.f32 0.0, %v748
        %v750 = vpop.f32.mrf.mxu0
        %751 = vmatprep.mubr.f32.mxu0 0.0
        %752 = vmatmul.mubr.f32.gmra.mxu0 %v568
        %v753 = vpop.f32.mrf.mxu0
        %v754 = vadd.f32 0.0, %v753
        %v755 = vpop.f32.mrf.mxu0
        %756 = vmatprep.mubr.f32.mxu0 0.0
        %757 = vmatmul.mubr.f32.gmra.mxu0 %v571
        %v758 = vpop.f32.mrf.mxu0
        %v759 = vadd.f32 0.0, %v758
        %v760 = vpop.f32.mrf.mxu0
        %761 = vmatprep.mubr.f32.mxu0 0.0
        %762 = vmatmul.mubr.f32.gmra.mxu0 %v574
        %v763 = vpop.f32.mrf.mxu0
        %v764 = vadd.f32 0.0, %v763
        %v765 = vpop.f32.mrf.mxu0
        %766 = vmatprep.mubr.f32.mxu0 0.0
        %767 = vmatmul.mubr.f32.gmra.mxu0 %v577
        %v768 = vpop.f32.mrf.mxu0
        %v769 = vadd.f32 0.0, %v768
        %v770 = vpop.f32.mrf.mxu0
        %771 = vmatprep.mubr.f32.mxu0 0.0
        %772 = vmatmul.mubr.f32.gmra.mxu0 %v580
        %v773 = vpop.f32.mrf.mxu0
        %v774 = vadd.f32 0.0, %v773
        %v775 = vpop.f32.mrf.mxu0
        %776 = vmatprep.mubr.f32.mxu0 0.0
        %777 = vmatmul.mubr.f32.gmra.mxu0 %v583
        %v778 = vpop.f32.mrf.mxu0
        %v779 = vadd.f32 0.0, %v778
        %v780 = vpop.f32.mrf.mxu0
        %781 = vmatprep.mubr.f32.mxu0 0.0
        %782 = vmatmul.mubr.f32.gmra.mxu0 %v586
        %v783 = vpop.f32.mrf.mxu0
        %v784 = vadd.f32 0.0, %v783
        %v785 = vpop.f32.mrf.mxu0
        %786 = vmatprep.mubr.f32.mxu0 0.0
        %787 = vmatmul.mubr.f32.gmra.mxu0 %v589
        %v788 = vpop.f32.mrf.mxu0
        %v789 = vadd.f32 0.0, %v788
        %v790 = vpop.f32.mrf.mxu0
        %791 = vmatprep.mubr.f32.mxu0 0.0
        %792 = vmatmul.mubr.f32.gmra.mxu0 %v592
        %v793 = vpop.f32.mrf.mxu0
        %v794 = vadd.f32 0.0, %v793
        %v795 = vpop.f32.mrf.mxu0
        %796 = vmatprep.mubr.f32.mxu0 0.0
        %797 = vmatmul.mubr.f32.gmra.mxu0 %v595
        %v798 = vpop.f32.mrf.mxu0
        %v799 = vadd.f32 0.0, %v798
        %v800 = vpop.f32.mrf.mxu0
        %801 = vmatprep.mubr.f32.mxu0 0.0
        %802 = vmatmul.mubr.f32.gmra.mxu0 %v598
        %v803 = vpop.f32.mrf.mxu0
        %v804 = vadd.f32 0.0, %v803
        %v805 = vpop.f32.mrf.mxu0
        %806 = vmatprep.mubr.f32.mxu0 0.0
        %807 = vmatmul.mubr.f32.gmra.mxu0 %v601
        %v808 = vpop.f32.mrf.mxu0
        %v809 = vadd.f32 0.0, %v808
        %v810 = vpop.f32.mrf.mxu0
        %811 = vmatprep.mubr.f32.mxu0 0.0
        %812 = vmatmul.mubr.f32.gmra.mxu0 %v604
        %v813 = vpop.f32.mrf.mxu0
        %v814 = vadd.f32 0.0, %v813
        %v815 = vpop.f32.mrf.mxu0
        %816 = vmatprep.mubr.f32.mxu0 0.0
        %817 = vmatmul.mubr.f32.gmra.mxu0 %v607
        %v818 = vpop.f32.mrf.mxu0
        %v819 = vadd.f32 0.0, %v818
        %v820 = vpop.f32.mrf.mxu0
        %821 = vmatprep.mubr.f32.mxu0 0.0
        %822 = vmatmul.mubr.f32.gmra.mxu0 %v610
        %v823 = vpop.f32.mrf.mxu0
        %v824 = vadd.f32 0.0, %v823
        %v825 = vpop.f32.mrf.mxu0
        %826 = vmatprep.mubr.f32.mxu0 0.0
        %827 = vmatmul.mubr.f32.gmra.mxu0 %v613
        %v828 = vpop.f32.mrf.mxu0
        %v829 = vadd.f32 0.0, %v828
        %v830 = vpop.f32.mrf.mxu0
        %831 = vmatprep.mubr.f32.mxu0 0.0
        %832 = vmatmul.mubr.f32.gmra.mxu0 %v616
        %v833 = vpop.f32.mrf.mxu0
        %v834 = vadd.f32 0.0, %v833
        %v835 = vpop.f32.mrf.mxu0
        %836 = vmatprep.mubr.f32.mxu0 0.0
        %837 = vmatmul.mubr.f32.gmra.mxu0 %v619
        %v838 = vpop.f32.mrf.mxu0
        %v839 = vadd.f32 0.0, %v838
        %v840 = vpop.f32.mrf.mxu0
        %841 = vmatprep.mubr.f32.mxu0 0.0
        %842 = vmatmul.mubr.f32.gmra.mxu0 %v622
        %v843 = vpop.f32.mrf.mxu0
        %v844 = vadd.f32 0.0, %v843
        %v845 = vpop.f32.mrf.mxu0
        %846 = vmatprep.mubr.f32.mxu0 0.0
        %847 = vmatmul.mubr.f32.gmra.mxu0 %v625
        %v848 = vpop.f32.mrf.mxu0
        %v849 = vadd.f32 0.0, %v848
        %v850 = vpop.f32.mrf.mxu0
        %851 = vdwg.mxu0
        %v852 = vld [vmem:[%s2] sm:$0x1]
        %v854 = vlaneseq
        %v855 = vshrl.u32 %v854, 7
        %v856 = vsub.s32 0, %v855
        %v857 = vrot.slane %v852, %v856
        %v859 = vmul.f32 %v694, %v857
        %v860 = vmul.f32 %v699, %v857
        %v861 = vmul.f32 %v704, %v857
        %v862 = vmul.f32 %v709, %v857
        %v863 = vmul.f32 %v714, %v857
        %v864 = vmul.f32 %v719, %v857
        %v865 = vmul.f32 %v724, %v857
        %v866 = vmul.f32 %v729, %v857
        %v867 = vmul.f32 %v734, %v857
        %v868 = vmul.f32 %v739, %v857
        %v869 = vmul.f32 %v744, %v857
        %v870 = vmul.f32 %v749, %v857
        %v871 = vmul.f32 %v754, %v857
        %v872 = vmul.f32 %v759, %v857
        %v873 = vmul.f32 %v764, %v857
        %v874 = vmul.f32 %v769, %v857
        %v875 = vmul.f32 %v774, %v857
        %v876 = vmul.f32 %v779, %v857
        %v877 = vmul.f32 %v784, %v857
        %v878 = vmul.f32 %v789, %v857
        %v879 = vmul.f32 %v794, %v857
        %v880 = vmul.f32 %v799, %v857
        %v881 = vmul.f32 %v804, %v857
        %v882 = vmul.f32 %v809, %v857
        %v883 = vmul.f32 %v814, %v857
        %v884 = vmul.f32 %v819, %v857
        %v885 = vmul.f32 %v824, %v857
        %v886 = vmul.f32 %v829, %v857
        %v887 = vmul.f32 %v834, %v857
        %v888 = vmul.f32 %v839, %v857
        %v889 = vmul.f32 %v844, %v857
        %v890 = vmul.f32 %v849, %v857
        %v891 = vld [vmem:[%s3] sm:$0x1]
        %v893 = vlaneseq
        %v894 = vshrl.u32 %v893, 7
        %v895 = vsub.s32 0, %v894
        %v896 = vrot.slane %v891, %v895
        %v898 = vadd.f32 %v859, %v896
        %v899 = vadd.f32 %v860, %v896
        %v900 = vadd.f32 %v861, %v896
        %v901 = vadd.f32 %v862, %v896
        %v902 = vadd.f32 %v863, %v896
        %v903 = vadd.f32 %v864, %v896
        %v904 = vadd.f32 %v865, %v896
        %v905 = vadd.f32 %v866, %v896
        %v906 = vadd.f32 %v867, %v896
        %v907 = vadd.f32 %v868, %v896
        %v908 = vadd.f32 %v869, %v896
        %v909 = vadd.f32 %v870, %v896
        %v910 = vadd.f32 %v871, %v896
        %v911 = vadd.f32 %v872, %v896
        %v912 = vadd.f32 %v873, %v896
        %v913 = vadd.f32 %v874, %v896
        %v914 = vadd.f32 %v875, %v896
        %v915 = vadd.f32 %v876, %v896
        %v916 = vadd.f32 %v877, %v896
        %v917 = vadd.f32 %v878, %v896
        %v918 = vadd.f32 %v879, %v896
        %v919 = vadd.f32 %v880, %v896
        %v920 = vadd.f32 %v881, %v896
        %v921 = vadd.f32 %v882, %v896
        %v922 = vadd.f32 %v883, %v896
        %v923 = vadd.f32 %v884, %v896
        %v924 = vadd.f32 %v885, %v896
        %v925 = vadd.f32 %v886, %v896
        %v926 = vadd.f32 %v887, %v896
        %v927 = vadd.f32 %v888, %v896
        %v928 = vadd.f32 %v889, %v896
        %v929 = vadd.f32 %v890, %v896
        %v930 = vmax.f32 %v898, 0.0
        %v931 = vmax.f32 %v899, 0.0
        %v932 = vmax.f32 %v900, 0.0
        %v933 = vmax.f32 %v901, 0.0
        %v934 = vmax.f32 %v902, 0.0
        %v935 = vmax.f32 %v903, 0.0
        %v936 = vmax.f32 %v904, 0.0
        %v937 = vmax.f32 %v905, 0.0
        %v938 = vmax.f32 %v906, 0.0
        %v939 = vmax.f32 %v907, 0.0
        %v940 = vmax.f32 %v908, 0.0
        %v941 = vmax.f32 %v909, 0.0
        %v942 = vmax.f32 %v910, 0.0
        %v943 = vmax.f32 %v911, 0.0
        %v944 = vmax.f32 %v912, 0.0
        %v945 = vmax.f32 %v913, 0.0
        %v946 = vmax.f32 %v914, 0.0
        %v947 = vmax.f32 %v915, 0.0
        %v948 = vmax.f32 %v916, 0.0
        %v949 = vmax.f32 %v917, 0.0
        %v950 = vmax.f32 %v918, 0.0
        %v951 = vmax.f32 %v919, 0.0
        %v952 = vmax.f32 %v920, 0.0
        %v953 = vmax.f32 %v921, 0.0
        %v954 = vmax.f32 %v922, 0.0
        %v955 = vmax.f32 %v923, 0.0
        %v956 = vmax.f32 %v924, 0.0
        %v957 = vmax.f32 %v925, 0.0
        %v958 = vmax.f32 %v926, 0.0
        %v959 = vmax.f32 %v927, 0.0
        %v960 = vmax.f32 %v928, 0.0
        %v961 = vmax.f32 %v929, 0.0
        %962 = vst [vmem:[#allocation2] sm:$0xff] 0.0
        %963 = vst [vmem:[#allocation2 + $0x8] sm:$0xff] 0.0
        %964 = vst [vmem:[#allocation2 + $0x10] sm:$0x3] 0.0
        %965 = vst [vmem:[#allocation2 + $0x18] sm:$0xff] 0.0
        %966 = vst [vmem:[#allocation2 + $0x20] sm:$0xff] 0.0
        %967 = vst [vmem:[#allocation2 + $0x28] sm:$0x3] 0.0
        %968 = vst [vmem:[#allocation2 + $0x30] sm:$0xff] 0.0
        %969 = vst [vmem:[#allocation2 + $0x38] sm:$0xff] 0.0
        %970 = vst [vmem:[#allocation2 + $0x40] sm:$0x3] 0.0
        %971 = vst [vmem:[#allocation2 + $0x48] sm:$0xff] 0.0
        %972 = vst [vmem:[#allocation2 + $0x50] sm:$0xff] 0.0
        %973 = vst [vmem:[#allocation2 + $0x58] sm:$0x3] 0.0
        %974 = vst [vmem:[#allocation2 + $0x60] sm:$0xff] 0.0
        %975 = vst [vmem:[#allocation2 + $0x68] sm:$0xff] 0.0
        %976 = vst [vmem:[#allocation2 + $0x70] sm:$0x3] 0.0
        %977 = vst [vmem:[#allocation2 + $0x78] sm:$0xff] 0.0
        %978 = vst [vmem:[#allocation2 + $0x80] sm:$0xff] 0.0
        %979 = vst [vmem:[#allocation2 + $0x88] sm:$0x3] 0.0
        %980 = vst [vmem:[#allocation2 + $0x90] sm:$0xff] 0.0
        %981 = vst [vmem:[#allocation2 + $0x98] sm:$0xff] 0.0
        %982 = vst [vmem:[#allocation2 + $0xa0] sm:$0x3] 0.0
        %983 = vst [vmem:[#allocation2 + $0xa8] sm:$0xff] 0.0
        %984 = vst [vmem:[#allocation2 + $0xb0] sm:$0xff] 0.0
        %985 = vst [vmem:[#allocation2 + $0xb8] sm:$0x3] 0.0
        %986 = vst [vmem:[#allocation2 + $0xc0] sm:$0xff] 0.0
        %987 = vst [vmem:[#allocation2 + $0xc8] sm:$0xff] 0.0
        %988 = vst [vmem:[#allocation2 + $0xd0] sm:$0x3] 0.0
        %989 = vst [vmem:[#allocation2 + $0xd8] sm:$0xff] 0.0
        %990 = vst [vmem:[#allocation2 + $0xe0] sm:$0xff] 0.0
        %991 = vst [vmem:[#allocation2 + $0xe8] sm:$0x3] 0.0
        %992 = vst [vmem:[#allocation2 + $0xf0] sm:$0xff] 0.0
        %993 = vst [vmem:[#allocation2 + $0xf8] sm:$0xff] 0.0
        %994 = vst [vmem:[#allocation2 + $0x100] sm:$0x3] 0.0
        %995 = vst [vmem:[#allocation2 + $0x108] sm:$0xff] 0.0
        %996 = vst [vmem:[#allocation2 + $0x110] sm:$0xff] 0.0
        %997 = vst [vmem:[#allocation2 + $0x118] sm:$0x3] 0.0
        %998 = vst [vmem:[#allocation2 + $0x120] sm:$0xff] 0.0
        %999 = vst [vmem:[#allocation2 + $0x128] sm:$0xff] 0.0
        %1000 = vst [vmem:[#allocation2 + $0x130] sm:$0x3] 0.0
        %1001 = vst [vmem:[#allocation2 + $0x138] sm:$0xff] 0.0
        %1002 = vst [vmem:[#allocation2 + $0x140] sm:$0xff] 0.0
        %1003 = vst [vmem:[#allocation2 + $0x148] sm:$0x3] 0.0
        %1004 = vst [vmem:[#allocation2 + $0x150] sm:$0xff] 0.0
        %1005 = vst [vmem:[#allocation2 + $0x158] sm:$0xff] 0.0
        %1006 = vst [vmem:[#allocation2 + $0x160] sm:$0x3] 0.0
        %1007 = vst [vmem:[#allocation2 + $0x168] sm:$0xff] 0.0
        %1008 = vst [vmem:[#allocation2 + $0x170] sm:$0xff] 0.0
        %1009 = vst [vmem:[#allocation2 + $0x178] sm:$0x3] 0.0
        %1010 = vst [vmem:[#allocation2 + $0x180] sm:$0xff] 0.0
        %1011 = vst [vmem:[#allocation2 + $0x188] sm:$0xff] 0.0
        %1012 = vst [vmem:[#allocation2 + $0x190] sm:$0x3] 0.0
        %1013 = vst [vmem:[#allocation2 + $0x198] sm:$0xff] 0.0
        %1014 = vst [vmem:[#allocation2 + $0x1a0] sm:$0xff] 0.0
        %1015 = vst [vmem:[#allocation2 + $0x1a8] sm:$0x3] 0.0
        %s1016 = scalar_lea.vmem [#allocation2], 24
        %1017 = vst [vmem:[%s1016 + $0x1] sm:$0xff] %v930
        %1018 = vst [vmem:[%s1016 + $0x9] sm:$0xff] %v931
        %1019 = vst [vmem:[%s1016 + $0x19] sm:$0xff] %v932
        %1020 = vst [vmem:[%s1016 + $0x21] sm:$0xff] %v933
        %1021 = vst [vmem:[%s1016 + $0x31] sm:$0xff] %v934
        %1022 = vst [vmem:[%s1016 + $0x39] sm:$0xff] %v935
        %1023 = vst [vmem:[%s1016 + $0x49] sm:$0xff] %v936
        %1024 = vst [vmem:[%s1016 + $0x51] sm:$0xff] %v937
        %1025 = vst [vmem:[%s1016 + $0x61] sm:$0xff] %v938
        %1026 = vst [vmem:[%s1016 + $0x69] sm:$0xff] %v939
        %1027 = vst [vmem:[%s1016 + $0x79] sm:$0xff] %v940
        %1028 = vst [vmem:[%s1016 + $0x81] sm:$0xff] %v941
        %1029 = vst [vmem:[%s1016 + $0x91] sm:$0xff] %v942
        %1030 = vst [vmem:[%s1016 + $0x99] sm:$0xff] %v943
        %1031 = vst [vmem:[%s1016 + $0xa9] sm:$0xff] %v944
        %1032 = vst [vmem:[%s1016 + $0xb1] sm:$0xff] %v945
        %1033 = vst [vmem:[%s1016 + $0xc1] sm:$0xff] %v946
        %1034 = vst [vmem:[%s1016 + $0xc9] sm:$0xff] %v947
        %1035 = vst [vmem:[%s1016 + $0xd9] sm:$0xff] %v948
        %1036 = vst [vmem:[%s1016 + $0xe1] sm:$0xff] %v949
        %1037 = vst [vmem:[%s1016 + $0xf1] sm:$0xff] %v950
        %1038 = vst [vmem:[%s1016 + $0xf9] sm:$0xff] %v951
        %1039 = vst [vmem:[%s1016 + $0x109] sm:$0xff] %v952
        %1040 = vst [vmem:[%s1016 + $0x111] sm:$0xff] %v953
        %1041 = vst [vmem:[%s1016 + $0x121] sm:$0xff] %v954
        %1042 = vst [vmem:[%s1016 + $0x129] sm:$0xff] %v955
        %1043 = vst [vmem:[%s1016 + $0x139] sm:$0xff] %v956
        %1044 = vst [vmem:[%s1016 + $0x141] sm:$0xff] %v957
        %1045 = vst [vmem:[%s1016 + $0x151] sm:$0xff] %v958
        %1046 = vst [vmem:[%s1016 + $0x159] sm:$0xff] %v959
        %1047 = vst [vmem:[%s1016 + $0x169] sm:$0xff] %v960
        %1048 = vst [vmem:[%s1016 + $0x171] sm:$0xff] %v961
        %v1049 = vld [vmem:[#allocation2] sm:$0xff]
        %v1050 = vld [vmem:[#allocation2 + $0x8] sm:$0xff]
        %v1051 = vld [vmem:[#allocation2 + $0x18] sm:$0xff]
        %v1052 = vld [vmem:[#allocation2 + $0x20] sm:$0xff]
        %v1053 = vld [vmem:[#allocation2 + $0x30] sm:$0xff]
        %v1054 = vld [vmem:[#allocation2 + $0x38] sm:$0xff]
        %v1055 = vld [vmem:[#allocation2 + $0x48] sm:$0xff]
        %v1056 = vld [vmem:[#allocation2 + $0x50] sm:$0xff]
        %v1057 = vld [vmem:[#allocation2 + $0x60] sm:$0xff]
        %v1058 = vld [vmem:[#allocation2 + $0x68] sm:$0xff]
        %v1059 = vld [vmem:[#allocation2 + $0x78] sm:$0xff]
        %v1060 = vld [vmem:[#allocation2 + $0x80] sm:$0xff]
        %v1061 = vld [vmem:[#allocation2 + $0x90] sm:$0xff]
        %v1062 = vld [vmem:[#allocation2 + $0x98] sm:$0xff]
        %v1063 = vld [vmem:[#allocation2 + $0xa8] sm:$0xff]
        %v1064 = vld [vmem:[#allocation2 + $0xb0] sm:$0xff]
        %v1065 = vld [vmem:[#allocation2 + $0xc0] sm:$0xff]
        %v1066 = vld [vmem:[#allocation2 + $0xc8] sm:$0xff]
        %v1067 = vld [vmem:[#allocation2 + $0xd8] sm:$0xff]
        %v1068 = vld [vmem:[#allocation2 + $0xe0] sm:$0xff]
        %v1069 = vld [vmem:[#allocation2 + $0xf0] sm:$0xff]
        %v1070 = vld [vmem:[#allocation2 + $0xf8] sm:$0xff]
        %v1071 = vld [vmem:[#allocation2 + $0x108] sm:$0xff]
        %v1072 = vld [vmem:[#allocation2 + $0x110] sm:$0xff]
        %v1073 = vld [vmem:[#allocation2 + $0x120] sm:$0xff]
        %v1074 = vld [vmem:[#allocation2 + $0x128] sm:$0xff]
        %v1075 = vld [vmem:[#allocation2 + $0x138] sm:$0xff]
        %v1076 = vld [vmem:[#allocation2 + $0x140] sm:$0xff]
        %v1077 = vld [vmem:[#allocation2 + $0x150] sm:$0xff]
        %v1078 = vld [vmem:[#allocation2 + $0x158] sm:$0xff]
        %v1079 = vld [vmem:[#allocation2 + $0x168] sm:$0xff]
        %v1080 = vld [vmem:[#allocation2 + $0x170] sm:$0xff]
        %v1081 = vld [vmem:[#allocation8] sm:$0xff]
        %v1082 = vld [vmem:[#allocation8 + $0x8] sm:$0xff]
        %v1083 = vld [vmem:[#allocation8 + $0x10] sm:$0xff]
        %v1084 = vld [vmem:[#allocation8 + $0x18] sm:$0xff]
        %v1085 = vld [vmem:[#allocation8 + $0x20] sm:$0xff]
        %v1086 = vld [vmem:[#allocation8 + $0x28] sm:$0xff]
        %v1087 = vld [vmem:[#allocation8 + $0x30] sm:$0xff]
        %v1088 = vld [vmem:[#allocation8 + $0x38] sm:$0xff]
        %v1089 = vld [vmem:[#allocation8 + $0x40] sm:$0xff]
        %v1090 = vld [vmem:[#allocation8 + $0x48] sm:$0xff]
        %v1091 = vld [vmem:[#allocation8 + $0x50] sm:$0xff]
        %v1092 = vld [vmem:[#allocation8 + $0x58] sm:$0xff]
        %v1093 = vld [vmem:[#allocation8 + $0x60] sm:$0xff]
        %v1094 = vld [vmem:[#allocation8 + $0x68] sm:$0xff]
        %v1095 = vld [vmem:[#allocation8 + $0x70] sm:$0xff]
        %v1096 = vld [vmem:[#allocation8 + $0x78] sm:$0xff]
        %v1097 = vld [vmem:[#allocation2 + $0x1] sm:$0xff]
        %v1098 = vld [vmem:[#allocation2 + $0x9] sm:$0xff]
        %v1099 = vld [vmem:[#allocation2 + $0x19] sm:$0xff]
        %v1100 = vld [vmem:[#allocation2 + $0x21] sm:$0xff]
        %v1101 = vld [vmem:[#allocation2 + $0x31] sm:$0xff]
        %v1102 = vld [vmem:[#allocation2 + $0x39] sm:$0xff]
        %v1103 = vld [vmem:[#allocation2 + $0x49] sm:$0xff]
        %v1104 = vld [vmem:[#allocation2 + $0x51] sm:$0xff]
        %v1105 = vld [vmem:[#allocation2 + $0x61] sm:$0xff]
        %v1106 = vld [vmem:[#allocation2 + $0x69] sm:$0xff]
        %v1107 = vld [vmem:[#allocation2 + $0x79] sm:$0xff]
        %v1108 = vld [vmem:[#allocation2 + $0x81] sm:$0xff]
        %v1109 = vld [vmem:[#allocation2 + $0x91] sm:$0xff]
        %v1110 = vld [vmem:[#allocation2 + $0x99] sm:$0xff]
        %v1111 = vld [vmem:[#allocation2 + $0xa9] sm:$0xff]
        %v1112 = vld [vmem:[#allocation2 + $0xb1] sm:$0xff]
        %v1113 = vld [vmem:[#allocation2 + $0xc1] sm:$0xff]
        %v1114 = vld [vmem:[#allocation2 + $0xc9] sm:$0xff]
        %v1115 = vld [vmem:[#allocation2 + $0xd9] sm:$0xff]
        %v1116 = vld [vmem:[#allocation2 + $0xe1] sm:$0xff]
        %v1117 = vld [vmem:[#allocation2 + $0xf1] sm:$0xff]
        %v1118 = vld [vmem:[#allocation2 + $0xf9] sm:$0xff]
        %v1119 = vld [vmem:[#allocation2 + $0x109] sm:$0xff]
        %v1120 = vld [vmem:[#allocation2 + $0x111] sm:$0xff]
        %v1121 = vld [vmem:[#allocation2 + $0x121] sm:$0xff]
        %v1122 = vld [vmem:[#allocation2 + $0x129] sm:$0xff]
        %v1123 = vld [vmem:[#allocation2 + $0x139] sm:$0xff]
        %v1124 = vld [vmem:[#allocation2 + $0x141] sm:$0xff]
        %v1125 = vld [vmem:[#allocation2 + $0x151] sm:$0xff]
        %v1126 = vld [vmem:[#allocation2 + $0x159] sm:$0xff]
        %v1127 = vld [vmem:[#allocation2 + $0x169] sm:$0xff]
        %v1128 = vld [vmem:[#allocation2 + $0x171] sm:$0xff]
        %s1129 = scalar_lea.vmem [#allocation8], 128
        %v1130 = vld [vmem:[%s1129] sm:$0xff]
        %v1131 = vld [vmem:[%s1129 + $0x8] sm:$0xff]
        %v1132 = vld [vmem:[%s1129 + $0x10] sm:$0xff]
        %v1133 = vld [vmem:[%s1129 + $0x18] sm:$0xff]
        %v1134 = vld [vmem:[%s1129 + $0x20] sm:$0xff]
        %v1135 = vld [vmem:[%s1129 + $0x28] sm:$0xff]
        %v1136 = vld [vmem:[%s1129 + $0x30] sm:$0xff]
        %v1137 = vld [vmem:[%s1129 + $0x38] sm:$0xff]
        %v1138 = vld [vmem:[%s1129 + $0x40] sm:$0xff]
        %v1139 = vld [vmem:[%s1129 + $0x48] sm:$0xff]
        %v1140 = vld [vmem:[%s1129 + $0x50] sm:$0xff]
        %v1141 = vld [vmem:[%s1129 + $0x58] sm:$0xff]
        %v1142 = vld [vmem:[%s1129 + $0x60] sm:$0xff]
        %v1143 = vld [vmem:[%s1129 + $0x68] sm:$0xff]
        %v1144 = vld [vmem:[%s1129 + $0x70] sm:$0xff]
        %v1145 = vld [vmem:[%s1129 + $0x78] sm:$0xff]
        %1146 = vmatprep.subr.mxu0 0.0
        %1147 = vmatpush1.msra.mxu0 %v1145
        %1148 = vmatprep.subr.mxu0 0.0
        %1149 = vmatpush1.msra.mxu0 %v1144
        %1150 = vmatprep.subr.mxu0 0.0
        %1151 = vmatpush1.msra.mxu0 %v1143
        %1152 = vmatprep.subr.mxu0 0.0
        %1153 = vmatpush1.msra.mxu0 %v1142
        %1154 = vmatprep.subr.mxu0 0.0
        %1155 = vmatpush1.msra.mxu0 %v1141
        %1156 = vmatprep.subr.mxu0 0.0
        %1157 = vmatpush1.msra.mxu0 %v1140
        %1158 = vmatprep.subr.mxu0 0.0
        %1159 = vmatpush1.msra.mxu0 %v1139
        %1160 = vmatprep.subr.mxu0 0.0
        %1161 = vmatpush1.msra.mxu0 %v1138
        %1162 = vmatprep.subr.mxu0 0.0
        %1163 = vmatpush1.msra.mxu0 %v1137
        %1164 = vmatprep.subr.mxu0 0.0
        %1165 = vmatpush1.msra.mxu0 %v1136
        %1166 = vmatprep.subr.mxu0 0.0
        %1167 = vmatpush1.msra.mxu0 %v1135
        %1168 = vmatprep.subr.mxu0 0.0
        %1169 = vmatpush1.msra.mxu0 %v1134
        %1170 = vmatprep.subr.mxu0 0.0
        %1171 = vmatpush1.msra.mxu0 %v1133
        %1172 = vmatprep.subr.mxu0 0.0
        %1173 = vmatpush1.msra.mxu0 %v1132
        %1174 = vmatprep.subr.mxu0 0.0
        %1175 = vmatpush1.msra.mxu0 %v1131
        %1176 = vmatprep.subr.mxu0 0.0
        %1177 = vmatpush1.msra.mxu0 %v1130
        %1178 = vmatprep.subr.mxu0 0.0
        %1179 = vmatpush2.msra.mxu0 0.0
        %1180 = vmatprep.subr.mxu0 0.0
        %1181 = vmatpush2.msra.mxu0 0.0
        %1182 = vmatprep.subr.mxu0 0.0
        %1183 = vmatpush2.msra.mxu0 0.0
        %1184 = vmatprep.subr.mxu0 0.0
        %1185 = vmatpush2.msra.mxu0 0.0
        %1186 = vmatprep.subr.mxu0 0.0
        %1187 = vmatpush2.msra.mxu0 0.0
        %1188 = vmatprep.subr.mxu0 0.0
        %1189 = vmatpush2.msra.mxu0 0.0
        %1190 = vmatprep.subr.mxu0 0.0
        %1191 = vmatpush2.msra.mxu0 0.0
        %1192 = vmatprep.subr.mxu0 0.0
        %1193 = vmatpush2.msra.mxu0 0.0
        %1194 = vmatprep.subr.mxu0 0.0
        %1195 = vmatpush2.msra.mxu0 0.0
        %1196 = vmatprep.subr.mxu0 0.0
        %1197 = vmatpush2.msra.mxu0 0.0
        %1198 = vmatprep.subr.mxu0 0.0
        %1199 = vmatpush2.msra.mxu0 0.0
        %1200 = vmatprep.subr.mxu0 0.0
        %1201 = vmatpush2.msra.mxu0 0.0
        %1202 = vmatprep.subr.mxu0 0.0
        %1203 = vmatpush2.msra.mxu0 0.0
        %1204 = vmatprep.subr.mxu0 0.0
        %1205 = vmatpush2.msra.mxu0 0.0
        %1206 = vmatprep.subr.mxu0 0.0
        %1207 = vmatpush2.msra.mxu0 0.0
        %1208 = vmatprep.subr.mxu0 0.0
        %1209 = vmatpush2.msra.mxu0 0.0
        %1210 = vmatprep.mubr.f32.mxu0 0.0
        %1211 = vmatmul.mubr.f32.gmra.mxu0 %v1097
        %v1212 = vpop.f32.mrf.mxu0
        %v1213 = vadd.f32 0.0, %v1212
        %v1214 = vpop.f32.mrf.mxu0
        %1215 = vmatprep.mubr.f32.mxu0 0.0
        %1216 = vmatmul.mubr.f32.gmra.mxu0 %v1098
        %v1217 = vpop.f32.mrf.mxu0
        %v1218 = vadd.f32 0.0, %v1217
        %v1219 = vpop.f32.mrf.mxu0
        %1220 = vmatprep.mubr.f32.mxu0 0.0
        %1221 = vmatmul.mubr.f32.gmra.mxu0 %v1099
        %v1222 = vpop.f32.mrf.mxu0
        %v1223 = vadd.f32 0.0, %v1222
        %v1224 = vpop.f32.mrf.mxu0
        %1225 = vmatprep.mubr.f32.mxu0 0.0
        %1226 = vmatmul.mubr.f32.gmra.mxu0 %v1100
        %v1227 = vpop.f32.mrf.mxu0
        %v1228 = vadd.f32 0.0, %v1227
        %v1229 = vpop.f32.mrf.mxu0
        %1230 = vmatprep.mubr.f32.mxu0 0.0
        %1231 = vmatmul.mubr.f32.gmra.mxu0 %v1101
        %v1232 = vpop.f32.mrf.mxu0
        %v1233 = vadd.f32 0.0, %v1232
        %v1234 = vpop.f32.mrf.mxu0
        %1235 = vmatprep.mubr.f32.mxu0 0.0
        %1236 = vmatmul.mubr.f32.gmra.mxu0 %v1102
        %v1237 = vpop.f32.mrf.mxu0
        %v1238 = vadd.f32 0.0, %v1237
        %v1239 = vpop.f32.mrf.mxu0
        %1240 = vmatprep.mubr.f32.mxu0 0.0
        %1241 = vmatmul.mubr.f32.gmra.mxu0 %v1103
        %v1242 = vpop.f32.mrf.mxu0
        %v1243 = vadd.f32 0.0, %v1242
        %v1244 = vpop.f32.mrf.mxu0
        %1245 = vmatprep.mubr.f32.mxu0 0.0
        %1246 = vmatmul.mubr.f32.gmra.mxu0 %v1104
        %v1247 = vpop.f32.mrf.mxu0
        %v1248 = vadd.f32 0.0, %v1247
        %v1249 = vpop.f32.mrf.mxu0
        %1250 = vmatprep.mubr.f32.mxu0 0.0
        %1251 = vmatmul.mubr.f32.gmra.mxu0 %v1105
        %v1252 = vpop.f32.mrf.mxu0
        %v1253 = vadd.f32 0.0, %v1252
        %v1254 = vpop.f32.mrf.mxu0
        %1255 = vmatprep.mubr.f32.mxu0 0.0
        %1256 = vmatmul.mubr.f32.gmra.mxu0 %v1106
        %v1257 = vpop.f32.mrf.mxu0
        %v1258 = vadd.f32 0.0, %v1257
        %v1259 = vpop.f32.mrf.mxu0
        %1260 = vmatprep.mubr.f32.mxu0 0.0
        %1261 = vmatmul.mubr.f32.gmra.mxu0 %v1107
        %v1262 = vpop.f32.mrf.mxu0
        %v1263 = vadd.f32 0.0, %v1262
        %v1264 = vpop.f32.mrf.mxu0
        %1265 = vmatprep.mubr.f32.mxu0 0.0
        %1266 = vmatmul.mubr.f32.gmra.mxu0 %v1108
        %v1267 = vpop.f32.mrf.mxu0
        %v1268 = vadd.f32 0.0, %v1267
        %v1269 = vpop.f32.mrf.mxu0
        %1270 = vmatprep.mubr.f32.mxu0 0.0
        %1271 = vmatmul.mubr.f32.gmra.mxu0 %v1109
        %v1272 = vpop.f32.mrf.mxu0
        %v1273 = vadd.f32 0.0, %v1272
        %v1274 = vpop.f32.mrf.mxu0
        %1275 = vmatprep.mubr.f32.mxu0 0.0
        %1276 = vmatmul.mubr.f32.gmra.mxu0 %v1110
        %v1277 = vpop.f32.mrf.mxu0
        %v1278 = vadd.f32 0.0, %v1277
        %v1279 = vpop.f32.mrf.mxu0
        %1280 = vmatprep.mubr.f32.mxu0 0.0
        %1281 = vmatmul.mubr.f32.gmra.mxu0 %v1111
        %v1282 = vpop.f32.mrf.mxu0
        %v1283 = vadd.f32 0.0, %v1282
        %v1284 = vpop.f32.mrf.mxu0
        %1285 = vmatprep.mubr.f32.mxu0 0.0
        %1286 = vmatmul.mubr.f32.gmra.mxu0 %v1112
        %v1287 = vpop.f32.mrf.mxu0
        %v1288 = vadd.f32 0.0, %v1287
        %v1289 = vpop.f32.mrf.mxu0
        %1290 = vmatprep.mubr.f32.mxu0 0.0
        %1291 = vmatmul.mubr.f32.gmra.mxu0 %v1113
        %v1292 = vpop.f32.mrf.mxu0
        %v1293 = vadd.f32 0.0, %v1292
        %v1294 = vpop.f32.mrf.mxu0
        %1295 = vmatprep.mubr.f32.mxu0 0.0
        %1296 = vmatmul.mubr.f32.gmra.mxu0 %v1114
        %v1297 = vpop.f32.mrf.mxu0
        %v1298 = vadd.f32 0.0, %v1297
        %v1299 = vpop.f32.mrf.mxu0
        %1300 = vmatprep.mubr.f32.mxu0 0.0
        %1301 = vmatmul.mubr.f32.gmra.mxu0 %v1115
        %v1302 = vpop.f32.mrf.mxu0
        %v1303 = vadd.f32 0.0, %v1302
        %v1304 = vpop.f32.mrf.mxu0
        %1305 = vmatprep.mubr.f32.mxu0 0.0
        %1306 = vmatmul.mubr.f32.gmra.mxu0 %v1116
        %v1307 = vpop.f32.mrf.mxu0
        %v1308 = vadd.f32 0.0, %v1307
        %v1309 = vpop.f32.mrf.mxu0
        %1310 = vmatprep.mubr.f32.mxu0 0.0
        %1311 = vmatmul.mubr.f32.gmra.mxu0 %v1117
        %v1312 = vpop.f32.mrf.mxu0
        %v1313 = vadd.f32 0.0, %v1312
        %v1314 = vpop.f32.mrf.mxu0
        %1315 = vmatprep.mubr.f32.mxu0 0.0
        %1316 = vmatmul.mubr.f32.gmra.mxu0 %v1118
        %v1317 = vpop.f32.mrf.mxu0
        %v1318 = vadd.f32 0.0, %v1317
        %v1319 = vpop.f32.mrf.mxu0
        %1320 = vmatprep.mubr.f32.mxu0 0.0
        %1321 = vmatmul.mubr.f32.gmra.mxu0 %v1119
        %v1322 = vpop.f32.mrf.mxu0
        %v1323 = vadd.f32 0.0, %v1322
        %v1324 = vpop.f32.mrf.mxu0
        %1325 = vmatprep.mubr.f32.mxu0 0.0
        %1326 = vmatmul.mubr.f32.gmra.mxu0 %v1120
        %v1327 = vpop.f32.mrf.mxu0
        %v1328 = vadd.f32 0.0, %v1327
        %v1329 = vpop.f32.mrf.mxu0
        %1330 = vmatprep.mubr.f32.mxu0 0.0
        %1331 = vmatmul.mubr.f32.gmra.mxu0 %v1121
        %v1332 = vpop.f32.mrf.mxu0
        %v1333 = vadd.f32 0.0, %v1332
        %v1334 = vpop.f32.mrf.mxu0
        %1335 = vmatprep.mubr.f32.mxu0 0.0
        %1336 = vmatmul.mubr.f32.gmra.mxu0 %v1122
        %v1337 = vpop.f32.mrf.mxu0
        %v1338 = vadd.f32 0.0, %v1337
        %v1339 = vpop.f32.mrf.mxu0
        %1340 = vmatprep.mubr.f32.mxu0 0.0
        %1341 = vmatmul.mubr.f32.gmra.mxu0 %v1123
        %v1342 = vpop.f32.mrf.mxu0
        %v1343 = vadd.f32 0.0, %v1342
        %v1344 = vpop.f32.mrf.mxu0
        %1345 = vmatprep.mubr.f32.mxu0 0.0
        %1346 = vmatmul.mubr.f32.gmra.mxu0 %v1124
        %v1347 = vpop.f32.mrf.mxu0
        %v1348 = vadd.f32 0.0, %v1347
        %v1349 = vpop.f32.mrf.mxu0
        %1350 = vmatprep.mubr.f32.mxu0 0.0
        %1351 = vmatmul.mubr.f32.gmra.mxu0 %v1125
        %v1352 = vpop.f32.mrf.mxu0
        %v1353 = vadd.f32 0.0, %v1352
        %v1354 = vpop.f32.mrf.mxu0
        %1355 = vmatprep.mubr.f32.mxu0 0.0
        %1356 = vmatmul.mubr.f32.gmra.mxu0 %v1126
        %v1357 = vpop.f32.mrf.mxu0
        %v1358 = vadd.f32 0.0, %v1357
        %v1359 = vpop.f32.mrf.mxu0
        %1360 = vmatprep.mubr.f32.mxu0 0.0
        %1361 = vmatmul.mubr.f32.gmra.mxu0 %v1127
        %v1362 = vpop.f32.mrf.mxu0
        %v1363 = vadd.f32 0.0, %v1362
        %v1364 = vpop.f32.mrf.mxu0
        %1365 = vmatprep.mubr.f32.mxu0 0.0
        %1366 = vmatmul.mubr.f32.gmra.mxu0 %v1128
        %v1367 = vpop.f32.mrf.mxu0
        %v1368 = vadd.f32 0.0, %v1367
        %v1369 = vpop.f32.mrf.mxu0
        %1370 = vdwg.mxu0
        %1371 = vmatprep.subr.mxu0 0.0
        %1372 = vmatpush1.msra.mxu0 %v1096
        %1373 = vmatprep.subr.mxu0 0.0
        %1374 = vmatpush1.msra.mxu0 %v1095
        %1375 = vmatprep.subr.mxu0 0.0
        %1376 = vmatpush1.msra.mxu0 %v1094
        %1377 = vmatprep.subr.mxu0 0.0
        %1378 = vmatpush1.msra.mxu0 %v1093
        %1379 = vmatprep.subr.mxu0 0.0
        %1380 = vmatpush1.msra.mxu0 %v1092
        %1381 = vmatprep.subr.mxu0 0.0
        %1382 = vmatpush1.msra.mxu0 %v1091
        %1383 = vmatprep.subr.mxu0 0.0
        %1384 = vmatpush1.msra.mxu0 %v1090
        %1385 = vmatprep.subr.mxu0 0.0
        %1386 = vmatpush1.msra.mxu0 %v1089
        %1387 = vmatprep.subr.mxu0 0.0
        %1388 = vmatpush1.msra.mxu0 %v1088
        %1389 = vmatprep.subr.mxu0 0.0
        %1390 = vmatpush1.msra.mxu0 %v1087
        %1391 = vmatprep.subr.mxu0 0.0
        %1392 = vmatpush1.msra.mxu0 %v1086
        %1393 = vmatprep.subr.mxu0 0.0
        %1394 = vmatpush1.msra.mxu0 %v1085
        %1395 = vmatprep.subr.mxu0 0.0
        %1396 = vmatpush1.msra.mxu0 %v1084
        %1397 = vmatprep.subr.mxu0 0.0
        %1398 = vmatpush1.msra.mxu0 %v1083
        %1399 = vmatprep.subr.mxu0 0.0
        %1400 = vmatpush1.msra.mxu0 %v1082
        %1401 = vmatprep.subr.mxu0 0.0
        %1402 = vmatpush1.msra.mxu0 %v1081
        %1403 = vmatprep.subr.mxu0 0.0
        %1404 = vmatpush2.msra.mxu0 0.0
        %1405 = vmatprep.subr.mxu0 0.0
        %1406 = vmatpush2.msra.mxu0 0.0
        %1407 = vmatprep.subr.mxu0 0.0
        %1408 = vmatpush2.msra.mxu0 0.0
        %1409 = vmatprep.subr.mxu0 0.0
        %1410 = vmatpush2.msra.mxu0 0.0
        %1411 = vmatprep.subr.mxu0 0.0
        %1412 = vmatpush2.msra.mxu0 0.0
        %1413 = vmatprep.subr.mxu0 0.0
        %1414 = vmatpush2.msra.mxu0 0.0
        %1415 = vmatprep.subr.mxu0 0.0
        %1416 = vmatpush2.msra.mxu0 0.0
        %1417 = vmatprep.subr.mxu0 0.0
        %1418 = vmatpush2.msra.mxu0 0.0
        %1419 = vmatprep.subr.mxu0 0.0
        %1420 = vmatpush2.msra.mxu0 0.0
        %1421 = vmatprep.subr.mxu0 0.0
        %1422 = vmatpush2.msra.mxu0 0.0
        %1423 = vmatprep.subr.mxu0 0.0
        %1424 = vmatpush2.msra.mxu0 0.0
        %1425 = vmatprep.subr.mxu0 0.0
        %1426 = vmatpush2.msra.mxu0 0.0
        %1427 = vmatprep.subr.mxu0 0.0
        %1428 = vmatpush2.msra.mxu0 0.0
        %1429 = vmatprep.subr.mxu0 0.0
        %1430 = vmatpush2.msra.mxu0 0.0
        %1431 = vmatprep.subr.mxu0 0.0
        %1432 = vmatpush2.msra.mxu0 0.0
        %1433 = vmatprep.subr.mxu0 0.0
        %1434 = vmatpush2.msra.mxu0 0.0
        %1435 = vmatprep.mubr.f32.mxu0 0.0
        %1436 = vmatmul.mubr.f32.gmra.mxu0 %v1049
        %v1437 = vpop.f32.mrf.mxu0
        %v1438 = vadd.f32 %v1213, %v1437
        %v1439 = vpop.f32.mrf.mxu0
        %1440 = vmatprep.mubr.f32.mxu0 0.0
        %1441 = vmatmul.mubr.f32.gmra.mxu0 %v1050
        %v1442 = vpop.f32.mrf.mxu0
        %v1443 = vadd.f32 %v1218, %v1442
        %v1444 = vpop.f32.mrf.mxu0
        %1445 = vmatprep.mubr.f32.mxu0 0.0
        %1446 = vmatmul.mubr.f32.gmra.mxu0 %v1051
        %v1447 = vpop.f32.mrf.mxu0
        %v1448 = vadd.f32 %v1223, %v1447
        %v1449 = vpop.f32.mrf.mxu0
        %1450 = vmatprep.mubr.f32.mxu0 0.0
        %1451 = vmatmul.mubr.f32.gmra.mxu0 %v1052
        %v1452 = vpop.f32.mrf.mxu0
        %v1453 = vadd.f32 %v1228, %v1452
        %v1454 = vpop.f32.mrf.mxu0
        %1455 = vmatprep.mubr.f32.mxu0 0.0
        %1456 = vmatmul.mubr.f32.gmra.mxu0 %v1053
        %v1457 = vpop.f32.mrf.mxu0
        %v1458 = vadd.f32 %v1233, %v1457
        %v1459 = vpop.f32.mrf.mxu0
        %1460 = vmatprep.mubr.f32.mxu0 0.0
        %1461 = vmatmul.mubr.f32.gmra.mxu0 %v1054
        %v1462 = vpop.f32.mrf.mxu0
        %v1463 = vadd.f32 %v1238, %v1462
        %v1464 = vpop.f32.mrf.mxu0
        %1465 = vmatprep.mubr.f32.mxu0 0.0
        %1466 = vmatmul.mubr.f32.gmra.mxu0 %v1055
        %v1467 = vpop.f32.mrf.mxu0
        %v1468 = vadd.f32 %v1243, %v1467
        %v1469 = vpop.f32.mrf.mxu0
        %1470 = vmatprep.mubr.f32.mxu0 0.0
        %1471 = vmatmul.mubr.f32.gmra.mxu0 %v1056
        %v1472 = vpop.f32.mrf.mxu0
        %v1473 = vadd.f32 %v1248, %v1472
        %v1474 = vpop.f32.mrf.mxu0
        %1475 = vmatprep.mubr.f32.mxu0 0.0
        %1476 = vmatmul.mubr.f32.gmra.mxu0 %v1057
        %v1477 = vpop.f32.mrf.mxu0
        %v1478 = vadd.f32 %v1253, %v1477
        %v1479 = vpop.f32.mrf.mxu0
        %1480 = vmatprep.mubr.f32.mxu0 0.0
        %1481 = vmatmul.mubr.f32.gmra.mxu0 %v1058
        %v1482 = vpop.f32.mrf.mxu0
        %v1483 = vadd.f32 %v1258, %v1482
        %v1484 = vpop.f32.mrf.mxu0
        %1485 = vmatprep.mubr.f32.mxu0 0.0
        %1486 = vmatmul.mubr.f32.gmra.mxu0 %v1059
        %v1487 = vpop.f32.mrf.mxu0
        %v1488 = vadd.f32 %v1263, %v1487
        %v1489 = vpop.f32.mrf.mxu0
        %1490 = vmatprep.mubr.f32.mxu0 0.0
        %1491 = vmatmul.mubr.f32.gmra.mxu0 %v1060
        %v1492 = vpop.f32.mrf.mxu0
        %v1493 = vadd.f32 %v1268, %v1492
        %v1494 = vpop.f32.mrf.mxu0
        %1495 = vmatprep.mubr.f32.mxu0 0.0
        %1496 = vmatmul.mubr.f32.gmra.mxu0 %v1061
        %v1497 = vpop.f32.mrf.mxu0
        %v1498 = vadd.f32 %v1273, %v1497
        %v1499 = vpop.f32.mrf.mxu0
        %1500 = vmatprep.mubr.f32.mxu0 0.0
        %1501 = vmatmul.mubr.f32.gmra.mxu0 %v1062
        %v1502 = vpop.f32.mrf.mxu0
        %v1503 = vadd.f32 %v1278, %v1502
        %v1504 = vpop.f32.mrf.mxu0
        %1505 = vmatprep.mubr.f32.mxu0 0.0
        %1506 = vmatmul.mubr.f32.gmra.mxu0 %v1063
        %v1507 = vpop.f32.mrf.mxu0
        %v1508 = vadd.f32 %v1283, %v1507
        %v1509 = vpop.f32.mrf.mxu0
        %1510 = vmatprep.mubr.f32.mxu0 0.0
        %1511 = vmatmul.mubr.f32.gmra.mxu0 %v1064
        %v1512 = vpop.f32.mrf.mxu0
        %v1513 = vadd.f32 %v1288, %v1512
        %v1514 = vpop.f32.mrf.mxu0
        %1515 = vmatprep.mubr.f32.mxu0 0.0
        %1516 = vmatmul.mubr.f32.gmra.mxu0 %v1065
        %v1517 = vpop.f32.mrf.mxu0
        %v1518 = vadd.f32 %v1293, %v1517
        %v1519 = vpop.f32.mrf.mxu0
        %1520 = vmatprep.mubr.f32.mxu0 0.0
        %1521 = vmatmul.mubr.f32.gmra.mxu0 %v1066
        %v1522 = vpop.f32.mrf.mxu0
        %v1523 = vadd.f32 %v1298, %v1522
        %v1524 = vpop.f32.mrf.mxu0
        %1525 = vmatprep.mubr.f32.mxu0 0.0
        %1526 = vmatmul.mubr.f32.gmra.mxu0 %v1067
        %v1527 = vpop.f32.mrf.mxu0
        %v1528 = vadd.f32 %v1303, %v1527
        %v1529 = vpop.f32.mrf.mxu0
        %1530 = vmatprep.mubr.f32.mxu0 0.0
        %1531 = vmatmul.mubr.f32.gmra.mxu0 %v1068
        %v1532 = vpop.f32.mrf.mxu0
        %v1533 = vadd.f32 %v1308, %v1532
        %v1534 = vpop.f32.mrf.mxu0
        %1535 = vmatprep.mubr.f32.mxu0 0.0
        %1536 = vmatmul.mubr.f32.gmra.mxu0 %v1069
        %v1537 = vpop.f32.mrf.mxu0
        %v1538 = vadd.f32 %v1313, %v1537
        %v1539 = vpop.f32.mrf.mxu0
        %1540 = vmatprep.mubr.f32.mxu0 0.0
        %1541 = vmatmul.mubr.f32.gmra.mxu0 %v1070
        %v1542 = vpop.f32.mrf.mxu0
        %v1543 = vadd.f32 %v1318, %v1542
        %v1544 = vpop.f32.mrf.mxu0
        %1545 = vmatprep.mubr.f32.mxu0 0.0
        %1546 = vmatmul.mubr.f32.gmra.mxu0 %v1071
        %v1547 = vpop.f32.mrf.mxu0
        %v1548 = vadd.f32 %v1323, %v1547
        %v1549 = vpop.f32.mrf.mxu0
        %1550 = vmatprep.mubr.f32.mxu0 0.0
        %1551 = vmatmul.mubr.f32.gmra.mxu0 %v1072
        %v1552 = vpop.f32.mrf.mxu0
        %v1553 = vadd.f32 %v1328, %v1552
        %v1554 = vpop.f32.mrf.mxu0
        %1555 = vmatprep.mubr.f32.mxu0 0.0
        %1556 = vmatmul.mubr.f32.gmra.mxu0 %v1073
        %v1557 = vpop.f32.mrf.mxu0
        %v1558 = vadd.f32 %v1333, %v1557
        %v1559 = vpop.f32.mrf.mxu0
        %1560 = vmatprep.mubr.f32.mxu0 0.0
        %1561 = vmatmul.mubr.f32.gmra.mxu0 %v1074
        %v1562 = vpop.f32.mrf.mxu0
        %v1563 = vadd.f32 %v1338, %v1562
        %v1564 = vpop.f32.mrf.mxu0
        %1565 = vmatprep.mubr.f32.mxu0 0.0
        %1566 = vmatmul.mubr.f32.gmra.mxu0 %v1075
        %v1567 = vpop.f32.mrf.mxu0
        %v1568 = vadd.f32 %v1343, %v1567
        %v1569 = vpop.f32.mrf.mxu0
        %1570 = vmatprep.mubr.f32.mxu0 0.0
        %1571 = vmatmul.mubr.f32.gmra.mxu0 %v1076
        %v1572 = vpop.f32.mrf.mxu0
        %v1573 = vadd.f32 %v1348, %v1572
        %v1574 = vpop.f32.mrf.mxu0
        %1575 = vmatprep.mubr.f32.mxu0 0.0
        %1576 = vmatmul.mubr.f32.gmra.mxu0 %v1077
        %v1577 = vpop.f32.mrf.mxu0
        %v1578 = vadd.f32 %v1353, %v1577
        %v1579 = vpop.f32.mrf.mxu0
        %1580 = vmatprep.mubr.f32.mxu0 0.0
        %1581 = vmatmul.mubr.f32.gmra.mxu0 %v1078
        %v1582 = vpop.f32.mrf.mxu0
        %v1583 = vadd.f32 %v1358, %v1582
        %v1584 = vpop.f32.mrf.mxu0
        %1585 = vmatprep.mubr.f32.mxu0 0.0
        %1586 = vmatmul.mubr.f32.gmra.mxu0 %v1079
        %v1587 = vpop.f32.mrf.mxu0
        %v1588 = vadd.f32 %v1363, %v1587
        %v1589 = vpop.f32.mrf.mxu0
        %1590 = vmatprep.mubr.f32.mxu0 0.0
        %1591 = vmatmul.mubr.f32.gmra.mxu0 %v1080
        %v1592 = vpop.f32.mrf.mxu0
        %v1593 = vadd.f32 %v1368, %v1592
        %v1594 = vpop.f32.mrf.mxu0
        %1595 = vdwg.mxu0
        %v1596 = vld [vmem:[#allocation2 + $0x2] sm:$0xff]
        %v1597 = vld [vmem:[#allocation2 + $0xa] sm:$0xff]
        %v1598 = vld [vmem:[#allocation2 + $0x1a] sm:$0xff]
        %v1599 = vld [vmem:[#allocation2 + $0x22] sm:$0xff]
        %v1600 = vld [vmem:[#allocation2 + $0x32] sm:$0xff]
        %v1601 = vld [vmem:[#allocation2 + $0x3a] sm:$0xff]
        %v1602 = vld [vmem:[#allocation2 + $0x4a] sm:$0xff]
        %v1603 = vld [vmem:[#allocation2 + $0x52] sm:$0xff]
        %v1604 = vld [vmem:[#allocation2 + $0x62] sm:$0xff]
        %v1605 = vld [vmem:[#allocation2 + $0x6a] sm:$0xff]
        %v1606 = vld [vmem:[#allocation2 + $0x7a] sm:$0xff]
        %v1607 = vld [vmem:[#allocation2 + $0x82] sm:$0xff]
        %v1608 = vld [vmem:[#allocation2 + $0x92] sm:$0xff]
        %v1609 = vld [vmem:[#allocation2 + $0x9a] sm:$0xff]
        %v1610 = vld [vmem:[#allocation2 + $0xaa] sm:$0xff]
        %v1611 = vld [vmem:[#allocation2 + $0xb2] sm:$0xff]
        %v1612 = vld [vmem:[#allocation2 + $0xc2] sm:$0xff]
        %v1613 = vld [vmem:[#allocation2 + $0xca] sm:$0xff]
        %v1614 = vld [vmem:[#allocation2 + $0xda] sm:$0xff]
        %v1615 = vld [vmem:[#allocation2 + $0xe2] sm:$0xff]
        %v1616 = vld [vmem:[#allocation2 + $0xf2] sm:$0xff]
        %v1617 = vld [vmem:[#allocation2 + $0xfa] sm:$0xff]
        %v1618 = vld [vmem:[#allocation2 + $0x10a] sm:$0xff]
        %v1619 = vld [vmem:[#allocation2 + $0x112] sm:$0xff]
        %v1620 = vld [vmem:[#allocation2 + $0x122] sm:$0xff]
        %v1621 = vld [vmem:[#allocation2 + $0x12a] sm:$0xff]
        %v1622 = vld [vmem:[#allocation2 + $0x13a] sm:$0xff]
        %v1623 = vld [vmem:[#allocation2 + $0x142] sm:$0xff]
        %v1624 = vld [vmem:[#allocation2 + $0x152] sm:$0xff]
        %v1625 = vld [vmem:[#allocation2 + $0x15a] sm:$0xff]
        %v1626 = vld [vmem:[#allocation2 + $0x16a] sm:$0xff]
        %v1627 = vld [vmem:[#allocation2 + $0x172] sm:$0xff]
        %s1628 = scalar_lea.vmem [#allocation8], 256
        %v1629 = vld [vmem:[%s1628] sm:$0xff]
        %v1630 = vld [vmem:[%s1628 + $0x8] sm:$0xff]
        %v1631 = vld [vmem:[%s1628 + $0x10] sm:$0xff]
        %v1632 = vld [vmem:[%s1628 + $0x18] sm:$0xff]
        %v1633 = vld [vmem:[%s1628 + $0x20] sm:$0xff]
        %v1634 = vld [vmem:[%s1628 + $0x28] sm:$0xff]
        %v1635 = vld [vmem:[%s1628 + $0x30] sm:$0xff]
        %v1636 = vld [vmem:[%s1628 + $0x38] sm:$0xff]
        %v1637 = vld [vmem:[%s1628 + $0x40] sm:$0xff]
        %v1638 = vld [vmem:[%s1628 + $0x48] sm:$0xff]
        %v1639 = vld [vmem:[%s1628 + $0x50] sm:$0xff]
        %v1640 = vld [vmem:[%s1628 + $0x58] sm:$0xff]
        %v1641 = vld [vmem:[%s1628 + $0x60] sm:$0xff]
        %v1642 = vld [vmem:[%s1628 + $0x68] sm:$0xff]
        %v1643 = vld [vmem:[%s1628 + $0x70] sm:$0xff]
        %v1644 = vld [vmem:[%s1628 + $0x78] sm:$0xff]
        %1645 = vmatprep.subr.mxu0 0.0
        %1646 = vmatpush1.msra.mxu0 %v1644
        %1647 = vmatprep.subr.mxu0 0.0
        %1648 = vmatpush1.msra.mxu0 %v1643
        %1649 = vmatprep.subr.mxu0 0.0
        %1650 = vmatpush1.msra.mxu0 %v1642
        %1651 = vmatprep.subr.mxu0 0.0
        %1652 = vmatpush1.msra.mxu0 %v1641
        %1653 = vmatprep.subr.mxu0 0.0
        %1654 = vmatpush1.msra.mxu0 %v1640
        %1655 = vmatprep.subr.mxu0 0.0
        %1656 = vmatpush1.msra.mxu0 %v1639
        %1657 = vmatprep.subr.mxu0 0.0
        %1658 = vmatpush1.msra.mxu0 %v1638
        %1659 = vmatprep.subr.mxu0 0.0
        %1660 = vmatpush1.msra.mxu0 %v1637
        %1661 = vmatprep.subr.mxu0 0.0
        %1662 = vmatpush1.msra.mxu0 %v1636
        %1663 = vmatprep.subr.mxu0 0.0
        %1664 = vmatpush1.msra.mxu0 %v1635
        %1665 = vmatprep.subr.mxu0 0.0
        %1666 = vmatpush1.msra.mxu0 %v1634
        %1667 = vmatprep.subr.mxu0 0.0
        %1668 = vmatpush1.msra.mxu0 %v1633
        %1669 = vmatprep.subr.mxu0 0.0
        %1670 = vmatpush1.msra.mxu0 %v1632
        %1671 = vmatprep.subr.mxu0 0.0
        %1672 = vmatpush1.msra.mxu0 %v1631
        %1673 = vmatprep.subr.mxu0 0.0
        %1674 = vmatpush1.msra.mxu0 %v1630
        %1675 = vmatprep.subr.mxu0 0.0
        %1676 = vmatpush1.msra.mxu0 %v1629
        %1677 = vmatprep.subr.mxu0 0.0
        %1678 = vmatpush2.msra.mxu0 0.0
        %1679 = vmatprep.subr.mxu0 0.0
        %1680 = vmatpush2.msra.mxu0 0.0
        %1681 = vmatprep.subr.mxu0 0.0
        %1682 = vmatpush2.msra.mxu0 0.0
        %1683 = vmatprep.subr.mxu0 0.0
        %1684 = vmatpush2.msra.mxu0 0.0
        %1685 = vmatprep.subr.mxu0 0.0
        %1686 = vmatpush2.msra.mxu0 0.0
        %1687 = vmatprep.subr.mxu0 0.0
        %1688 = vmatpush2.msra.mxu0 0.0
        %1689 = vmatprep.subr.mxu0 0.0
        %1690 = vmatpush2.msra.mxu0 0.0
        %1691 = vmatprep.subr.mxu0 0.0
        %1692 = vmatpush2.msra.mxu0 0.0
        %1693 = vmatprep.subr.mxu0 0.0
        %1694 = vmatpush2.msra.mxu0 0.0
        %1695 = vmatprep.subr.mxu0 0.0
        %1696 = vmatpush2.msra.mxu0 0.0
        %1697 = vmatprep.subr.mxu0 0.0
        %1698 = vmatpush2.msra.mxu0 0.0
        %1699 = vmatprep.subr.mxu0 0.0
        %1700 = vmatpush2.msra.mxu0 0.0
        %1701 = vmatprep.subr.mxu0 0.0
        %1702 = vmatpush2.msra.mxu0 0.0
        %1703 = vmatprep.subr.mxu0 0.0
        %1704 = vmatpush2.msra.mxu0 0.0
        %1705 = vmatprep.subr.mxu0 0.0
        %1706 = vmatpush2.msra.mxu0 0.0
        %1707 = vmatprep.subr.mxu0 0.0
        %1708 = vmatpush2.msra.mxu0 0.0
        %1709 = vmatprep.mubr.f32.mxu0 0.0
        %1710 = vmatmul.mubr.f32.gmra.mxu0 %v1596
        %v1711 = vpop.f32.mrf.mxu0
        %v1712 = vadd.f32 0.0, %v1711
        %v1713 = vpop.f32.mrf.mxu0
        %1714 = vmatprep.mubr.f32.mxu0 0.0
        %1715 = vmatmul.mubr.f32.gmra.mxu0 %v1597
        %v1716 = vpop.f32.mrf.mxu0
        %v1717 = vadd.f32 0.0, %v1716
        %v1718 = vpop.f32.mrf.mxu0
        %1719 = vmatprep.mubr.f32.mxu0 0.0
        %1720 = vmatmul.mubr.f32.gmra.mxu0 %v1598
        %v1721 = vpop.f32.mrf.mxu0
        %v1722 = vadd.f32 0.0, %v1721
        %v1723 = vpop.f32.mrf.mxu0
        %1724 = vmatprep.mubr.f32.mxu0 0.0
        %1725 = vmatmul.mubr.f32.gmra.mxu0 %v1599
        %v1726 = vpop.f32.mrf.mxu0
        %v1727 = vadd.f32 0.0, %v1726
        %v1728 = vpop.f32.mrf.mxu0
        %1729 = vmatprep.mubr.f32.mxu0 0.0
        %1730 = vmatmul.mubr.f32.gmra.mxu0 %v1600
        %v1731 = vpop.f32.mrf.mxu0
        %v1732 = vadd.f32 0.0, %v1731
        %v1733 = vpop.f32.mrf.mxu0
        %1734 = vmatprep.mubr.f32.mxu0 0.0
        %1735 = vmatmul.mubr.f32.gmra.mxu0 %v1601
        %v1736 = vpop.f32.mrf.mxu0
        %v1737 = vadd.f32 0.0, %v1736
        %v1738 = vpop.f32.mrf.mxu0
        %1739 = vmatprep.mubr.f32.mxu0 0.0
        %1740 = vmatmul.mubr.f32.gmra.mxu0 %v1602
        %v1741 = vpop.f32.mrf.mxu0
        %v1742 = vadd.f32 0.0, %v1741
        %v1743 = vpop.f32.mrf.mxu0
        %1744 = vmatprep.mubr.f32.mxu0 0.0
        %1745 = vmatmul.mubr.f32.gmra.mxu0 %v1603
        %v1746 = vpop.f32.mrf.mxu0
        %v1747 = vadd.f32 0.0, %v1746
        %v1748 = vpop.f32.mrf.mxu0
        %1749 = vmatprep.mubr.f32.mxu0 0.0
        %1750 = vmatmul.mubr.f32.gmra.mxu0 %v1604
        %v1751 = vpop.f32.mrf.mxu0
        %v1752 = vadd.f32 0.0, %v1751
        %v1753 = vpop.f32.mrf.mxu0
        %1754 = vmatprep.mubr.f32.mxu0 0.0
        %1755 = vmatmul.mubr.f32.gmra.mxu0 %v1605
        %v1756 = vpop.f32.mrf.mxu0
        %v1757 = vadd.f32 0.0, %v1756
        %v1758 = vpop.f32.mrf.mxu0
        %1759 = vmatprep.mubr.f32.mxu0 0.0
        %1760 = vmatmul.mubr.f32.gmra.mxu0 %v1606
        %v1761 = vpop.f32.mrf.mxu0
        %v1762 = vadd.f32 0.0, %v1761
        %v1763 = vpop.f32.mrf.mxu0
        %1764 = vmatprep.mubr.f32.mxu0 0.0
        %1765 = vmatmul.mubr.f32.gmra.mxu0 %v1607
        %v1766 = vpop.f32.mrf.mxu0
        %v1767 = vadd.f32 0.0, %v1766
        %v1768 = vpop.f32.mrf.mxu0
        %1769 = vmatprep.mubr.f32.mxu0 0.0
        %1770 = vmatmul.mubr.f32.gmra.mxu0 %v1608
        %v1771 = vpop.f32.mrf.mxu0
        %v1772 = vadd.f32 0.0, %v1771
        %v1773 = vpop.f32.mrf.mxu0
        %1774 = vmatprep.mubr.f32.mxu0 0.0
        %1775 = vmatmul.mubr.f32.gmra.mxu0 %v1609
        %v1776 = vpop.f32.mrf.mxu0
        %v1777 = vadd.f32 0.0, %v1776
        %v1778 = vpop.f32.mrf.mxu0
        %1779 = vmatprep.mubr.f32.mxu0 0.0
        %1780 = vmatmul.mubr.f32.gmra.mxu0 %v1610
        %v1781 = vpop.f32.mrf.mxu0
        %v1782 = vadd.f32 0.0, %v1781
        %v1783 = vpop.f32.mrf.mxu0
        %1784 = vmatprep.mubr.f32.mxu0 0.0
        %1785 = vmatmul.mubr.f32.gmra.mxu0 %v1611
        %v1786 = vpop.f32.mrf.mxu0
        %v1787 = vadd.f32 0.0, %v1786
        %v1788 = vpop.f32.mrf.mxu0
        %1789 = vmatprep.mubr.f32.mxu0 0.0
        %1790 = vmatmul.mubr.f32.gmra.mxu0 %v1612
        %v1791 = vpop.f32.mrf.mxu0
        %v1792 = vadd.f32 0.0, %v1791
        %v1793 = vpop.f32.mrf.mxu0
        %1794 = vmatprep.mubr.f32.mxu0 0.0
        %1795 = vmatmul.mubr.f32.gmra.mxu0 %v1613
        %v1796 = vpop.f32.mrf.mxu0
        %v1797 = vadd.f32 0.0, %v1796
        %v1798 = vpop.f32.mrf.mxu0
        %1799 = vmatprep.mubr.f32.mxu0 0.0
        %1800 = vmatmul.mubr.f32.gmra.mxu0 %v1614
        %v1801 = vpop.f32.mrf.mxu0
        %v1802 = vadd.f32 0.0, %v1801
        %v1803 = vpop.f32.mrf.mxu0
        %1804 = vmatprep.mubr.f32.mxu0 0.0
        %1805 = vmatmul.mubr.f32.gmra.mxu0 %v1615
        %v1806 = vpop.f32.mrf.mxu0
        %v1807 = vadd.f32 0.0, %v1806
        %v1808 = vpop.f32.mrf.mxu0
        %1809 = vmatprep.mubr.f32.mxu0 0.0
        %1810 = vmatmul.mubr.f32.gmra.mxu0 %v1616
        %v1811 = vpop.f32.mrf.mxu0
        %v1812 = vadd.f32 0.0, %v1811
        %v1813 = vpop.f32.mrf.mxu0
        %1814 = vmatprep.mubr.f32.mxu0 0.0
        %1815 = vmatmul.mubr.f32.gmra.mxu0 %v1617
        %v1816 = vpop.f32.mrf.mxu0
        %v1817 = vadd.f32 0.0, %v1816
        %v1818 = vpop.f32.mrf.mxu0
        %1819 = vmatprep.mubr.f32.mxu0 0.0
        %1820 = vmatmul.mubr.f32.gmra.mxu0 %v1618
        %v1821 = vpop.f32.mrf.mxu0
        %v1822 = vadd.f32 0.0, %v1821
        %v1823 = vpop.f32.mrf.mxu0
        %1824 = vmatprep.mubr.f32.mxu0 0.0
        %1825 = vmatmul.mubr.f32.gmra.mxu0 %v1619
        %v1826 = vpop.f32.mrf.mxu0
        %v1827 = vadd.f32 0.0, %v1826
        %v1828 = vpop.f32.mrf.mxu0
        %1829 = vmatprep.mubr.f32.mxu0 0.0
        %1830 = vmatmul.mubr.f32.gmra.mxu0 %v1620
        %v1831 = vpop.f32.mrf.mxu0
        %v1832 = vadd.f32 0.0, %v1831
        %v1833 = vpop.f32.mrf.mxu0
        %1834 = vmatprep.mubr.f32.mxu0 0.0
        %1835 = vmatmul.mubr.f32.gmra.mxu0 %v1621
        %v1836 = vpop.f32.mrf.mxu0
        %v1837 = vadd.f32 0.0, %v1836
        %v1838 = vpop.f32.mrf.mxu0
        %1839 = vmatprep.mubr.f32.mxu0 0.0
        %1840 = vmatmul.mubr.f32.gmra.mxu0 %v1622
        %v1841 = vpop.f32.mrf.mxu0
        %v1842 = vadd.f32 0.0, %v1841
        %v1843 = vpop.f32.mrf.mxu0
        %1844 = vmatprep.mubr.f32.mxu0 0.0
        %1845 = vmatmul.mubr.f32.gmra.mxu0 %v1623
        %v1846 = vpop.f32.mrf.mxu0
        %v1847 = vadd.f32 0.0, %v1846
        %v1848 = vpop.f32.mrf.mxu0
        %1849 = vmatprep.mubr.f32.mxu0 0.0
        %1850 = vmatmul.mubr.f32.gmra.mxu0 %v1624
        %v1851 = vpop.f32.mrf.mxu0
        %v1852 = vadd.f32 0.0, %v1851
        %v1853 = vpop.f32.mrf.mxu0
        %1854 = vmatprep.mubr.f32.mxu0 0.0
        %1855 = vmatmul.mubr.f32.gmra.mxu0 %v1625
        %v1856 = vpop.f32.mrf.mxu0
        %v1857 = vadd.f32 0.0, %v1856
        %v1858 = vpop.f32.mrf.mxu0
        %1859 = vmatprep.mubr.f32.mxu0 0.0
        %1860 = vmatmul.mubr.f32.gmra.mxu0 %v1626
        %v1861 = vpop.f32.mrf.mxu0
        %v1862 = vadd.f32 0.0, %v1861
        %v1863 = vpop.f32.mrf.mxu0
        %1864 = vmatprep.mubr.f32.mxu0 0.0
        %1865 = vmatmul.mubr.f32.gmra.mxu0 %v1627
        %v1866 = vpop.f32.mrf.mxu0
        %v1867 = vadd.f32 0.0, %v1866
        %v1868 = vpop.f32.mrf.mxu0
        %1869 = vdwg.mxu0
        %v1870 = vadd.f32 %v1438, %v1712
        %v1871 = vadd.f32 %v1443, %v1717
        %v1872 = vadd.f32 %v1448, %v1722
        %v1873 = vadd.f32 %v1453, %v1727
        %v1874 = vadd.f32 %v1458, %v1732
        %v1875 = vadd.f32 %v1463, %v1737
        %v1876 = vadd.f32 %v1468, %v1742
        %v1877 = vadd.f32 %v1473, %v1747
        %v1878 = vadd.f32 %v1478, %v1752
        %v1879 = vadd.f32 %v1483, %v1757
        %v1880 = vadd.f32 %v1488, %v1762
        %v1881 = vadd.f32 %v1493, %v1767
        %v1882 = vadd.f32 %v1498, %v1772
        %v1883 = vadd.f32 %v1503, %v1777
        %v1884 = vadd.f32 %v1508, %v1782
        %v1885 = vadd.f32 %v1513, %v1787
        %v1886 = vadd.f32 %v1518, %v1792
        %v1887 = vadd.f32 %v1523, %v1797
        %v1888 = vadd.f32 %v1528, %v1802
        %v1889 = vadd.f32 %v1533, %v1807
        %v1890 = vadd.f32 %v1538, %v1812
        %v1891 = vadd.f32 %v1543, %v1817
        %v1892 = vadd.f32 %v1548, %v1822
        %v1893 = vadd.f32 %v1553, %v1827
        %v1894 = vadd.f32 %v1558, %v1832
        %v1895 = vadd.f32 %v1563, %v1837
        %v1896 = vadd.f32 %v1568, %v1842
        %v1897 = vadd.f32 %v1573, %v1847
        %v1898 = vadd.f32 %v1578, %v1852
        %v1899 = vadd.f32 %v1583, %v1857
        %v1900 = vadd.f32 %v1588, %v1862
        %v1901 = vadd.f32 %v1593, %v1867
        %v1902 = vld [vmem:[%s1016] sm:$0xff]
        %v1903 = vld [vmem:[%s1016 + $0x8] sm:$0xff]
        %v1904 = vld [vmem:[%s1016 + $0x18] sm:$0xff]
        %v1905 = vld [vmem:[%s1016 + $0x20] sm:$0xff]
        %v1906 = vld [vmem:[%s1016 + $0x30] sm:$0xff]
        %v1907 = vld [vmem:[%s1016 + $0x38] sm:$0xff]
        %v1908 = vld [vmem:[%s1016 + $0x48] sm:$0xff]
        %v1909 = vld [vmem:[%s1016 + $0x50] sm:$0xff]
        %v1910 = vld [vmem:[%s1016 + $0x60] sm:$0xff]
        %v1911 = vld [vmem:[%s1016 + $0x68] sm:$0xff]
        %v1912 = vld [vmem:[%s1016 + $0x78] sm:$0xff]
        %v1913 = vld [vmem:[%s1016 + $0x80] sm:$0xff]
        %v1914 = vld [vmem:[%s1016 + $0x90] sm:$0xff]
        %v1915 = vld [vmem:[%s1016 + $0x98] sm:$0xff]
        %v1916 = vld [vmem:[%s1016 + $0xa8] sm:$0xff]
        %v1917 = vld [vmem:[%s1016 + $0xb0] sm:$0xff]
        %v1918 = vld [vmem:[%s1016 + $0xc0] sm:$0xff]
        %v1919 = vld [vmem:[%s1016 + $0xc8] sm:$0xff]
        %v1920 = vld [vmem:[%s1016 + $0xd8] sm:$0xff]
        %v1921 = vld [vmem:[%s1016 + $0xe0] sm:$0xff]
        %v1922 = vld [vmem:[%s1016 + $0xf0] sm:$0xff]
        %v1923 = vld [vmem:[%s1016 + $0xf8] sm:$0xff]
        %v1924 = vld [vmem:[%s1016 + $0x108] sm:$0xff]
        %v1925 = vld [vmem:[%s1016 + $0x110] sm:$0xff]
        %v1926 = vld [vmem:[%s1016 + $0x120] sm:$0xff]
        %v1927 = vld [vmem:[%s1016 + $0x128] sm:$0xff]
        %v1928 = vld [vmem:[%s1016 + $0x138] sm:$0xff]
        %v1929 = vld [vmem:[%s1016 + $0x140] sm:$0xff]
        %v1930 = vld [vmem:[%s1016 + $0x150] sm:$0xff]
        %v1931 = vld [vmem:[%s1016 + $0x158] sm:$0xff]
        %v1932 = vld [vmem:[%s1016 + $0x168] sm:$0xff]
        %v1933 = vld [vmem:[%s1016 + $0x170] sm:$0xff]
        %s1934 = scalar_lea.vmem [#allocation8], 384
        %v1935 = vld [vmem:[%s1934] sm:$0xff]
        %v1936 = vld [vmem:[%s1934 + $0x8] sm:$0xff]
        %v1937 = vld [vmem:[%s1934 + $0x10] sm:$0xff]
        %v1938 = vld [vmem:[%s1934 + $0x18] sm:$0xff]
        %v1939 = vld [vmem:[%s1934 + $0x20] sm:$0xff]
        %v1940 = vld [vmem:[%s1934 + $0x28] sm:$0xff]
        %v1941 = vld [vmem:[%s1934 + $0x30] sm:$0xff]
        %v1942 = vld [vmem:[%s1934 + $0x38] sm:$0xff]
        %v1943 = vld [vmem:[%s1934 + $0x40] sm:$0xff]
        %v1944 = vld [vmem:[%s1934 + $0x48] sm:$0xff]
        %v1945 = vld [vmem:[%s1934 + $0x50] sm:$0xff]
        %v1946 = vld [vmem:[%s1934 + $0x58] sm:$0xff]
        %v1947 = vld [vmem:[%s1934 + $0x60] sm:$0xff]
        %v1948 = vld [vmem:[%s1934 + $0x68] sm:$0xff]
        %v1949 = vld [vmem:[%s1934 + $0x70] sm:$0xff]
        %v1950 = vld [vmem:[%s1934 + $0x78] sm:$0xff]
        %1951 = vmatprep.subr.mxu0 0.0
        %1952 = vmatpush1.msra.mxu0 %v1950
        %1953 = vmatprep.subr.mxu0 0.0
        %1954 = vmatpush1.msra.mxu0 %v1949
        %1955 = vmatprep.subr.mxu0 0.0
        %1956 = vmatpush1.msra.mxu0 %v1948
        %1957 = vmatprep.subr.mxu0 0.0
        %1958 = vmatpush1.msra.mxu0 %v1947
        %1959 = vmatprep.subr.mxu0 0.0
        %1960 = vmatpush1.msra.mxu0 %v1946
        %1961 = vmatprep.subr.mxu0 0.0
        %1962 = vmatpush1.msra.mxu0 %v1945
        %1963 = vmatprep.subr.mxu0 0.0
        %1964 = vmatpush1.msra.mxu0 %v1944
        %1965 = vmatprep.subr.mxu0 0.0
        %1966 = vmatpush1.msra.mxu0 %v1943
        %1967 = vmatprep.subr.mxu0 0.0
        %1968 = vmatpush1.msra.mxu0 %v1942
        %1969 = vmatprep.subr.mxu0 0.0
        %1970 = vmatpush1.msra.mxu0 %v1941
        %1971 = vmatprep.subr.mxu0 0.0
        %1972 = vmatpush1.msra.mxu0 %v1940
        %1973 = vmatprep.subr.mxu0 0.0
        %1974 = vmatpush1.msra.mxu0 %v1939
        %1975 = vmatprep.subr.mxu0 0.0
        %1976 = vmatpush1.msra.mxu0 %v1938
        %1977 = vmatprep.subr.mxu0 0.0
        %1978 = vmatpush1.msra.mxu0 %v1937
        %1979 = vmatprep.subr.mxu0 0.0
        %1980 = vmatpush1.msra.mxu0 %v1936
        %1981 = vmatprep.subr.mxu0 0.0
        %1982 = vmatpush1.msra.mxu0 %v1935
        %1983 = vmatprep.subr.mxu0 0.0
        %1984 = vmatpush2.msra.mxu0 0.0
        %1985 = vmatprep.subr.mxu0 0.0
        %1986 = vmatpush2.msra.mxu0 0.0
        %1987 = vmatprep.subr.mxu0 0.0
        %1988 = vmatpush2.msra.mxu0 0.0
        %1989 = vmatprep.subr.mxu0 0.0
        %1990 = vmatpush2.msra.mxu0 0.0
        %1991 = vmatprep.subr.mxu0 0.0
        %1992 = vmatpush2.msra.mxu0 0.0
        %1993 = vmatprep.subr.mxu0 0.0
        %1994 = vmatpush2.msra.mxu0 0.0
        %1995 = vmatprep.subr.mxu0 0.0
        %1996 = vmatpush2.msra.mxu0 0.0
        %1997 = vmatprep.subr.mxu0 0.0
        %1998 = vmatpush2.msra.mxu0 0.0
        %1999 = vmatprep.subr.mxu0 0.0
        %2000 = vmatpush2.msra.mxu0 0.0
        %2001 = vmatprep.subr.mxu0 0.0
        %2002 = vmatpush2.msra.mxu0 0.0
        %2003 = vmatprep.subr.mxu0 0.0
        %2004 = vmatpush2.msra.mxu0 0.0
        %2005 = vmatprep.subr.mxu0 0.0
        %2006 = vmatpush2.msra.mxu0 0.0
        %2007 = vmatprep.subr.mxu0 0.0
        %2008 = vmatpush2.msra.mxu0 0.0
        %2009 = vmatprep.subr.mxu0 0.0
        %2010 = vmatpush2.msra.mxu0 0.0
        %2011 = vmatprep.subr.mxu0 0.0
        %2012 = vmatpush2.msra.mxu0 0.0
        %2013 = vmatprep.subr.mxu0 0.0
        %2014 = vmatpush2.msra.mxu0 0.0
        %2015 = vmatprep.mubr.f32.mxu0 0.0
        %2016 = vmatmul.mubr.f32.gmra.mxu0 %v1902
        %v2017 = vpop.f32.mrf.mxu0
        %v2018 = vadd.f32 0.0, %v2017
        %v2019 = vpop.f32.mrf.mxu0
        %2020 = vmatprep.mubr.f32.mxu0 0.0
        %2021 = vmatmul.mubr.f32.gmra.mxu0 %v1903
        %v2022 = vpop.f32.mrf.mxu0
        %v2023 = vadd.f32 0.0, %v2022
        %v2024 = vpop.f32.mrf.mxu0
        %2025 = vmatprep.mubr.f32.mxu0 0.0
        %2026 = vmatmul.mubr.f32.gmra.mxu0 %v1904
        %v2027 = vpop.f32.mrf.mxu0
        %v2028 = vadd.f32 0.0, %v2027
        %v2029 = vpop.f32.mrf.mxu0
        %2030 = vmatprep.mubr.f32.mxu0 0.0
        %2031 = vmatmul.mubr.f32.gmra.mxu0 %v1905
        %v2032 = vpop.f32.mrf.mxu0
        %v2033 = vadd.f32 0.0, %v2032
        %v2034 = vpop.f32.mrf.mxu0
        %2035 = vmatprep.mubr.f32.mxu0 0.0
        %2036 = vmatmul.mubr.f32.gmra.mxu0 %v1906
        %v2037 = vpop.f32.mrf.mxu0
        %v2038 = vadd.f32 0.0, %v2037
        %v2039 = vpop.f32.mrf.mxu0
        %2040 = vmatprep.mubr.f32.mxu0 0.0
        %2041 = vmatmul.mubr.f32.gmra.mxu0 %v1907
        %v2042 = vpop.f32.mrf.mxu0
        %v2043 = vadd.f32 0.0, %v2042
        %v2044 = vpop.f32.mrf.mxu0
        %2045 = vmatprep.mubr.f32.mxu0 0.0
        %2046 = vmatmul.mubr.f32.gmra.mxu0 %v1908
        %v2047 = vpop.f32.mrf.mxu0
        %v2048 = vadd.f32 0.0, %v2047
        %v2049 = vpop.f32.mrf.mxu0
        %2050 = vmatprep.mubr.f32.mxu0 0.0
        %2051 = vmatmul.mubr.f32.gmra.mxu0 %v1909
        %v2052 = vpop.f32.mrf.mxu0
        %v2053 = vadd.f32 0.0, %v2052
        %v2054 = vpop.f32.mrf.mxu0
        %2055 = vmatprep.mubr.f32.mxu0 0.0
        %2056 = vmatmul.mubr.f32.gmra.mxu0 %v1910
        %v2057 = vpop.f32.mrf.mxu0
        %v2058 = vadd.f32 0.0, %v2057
        %v2059 = vpop.f32.mrf.mxu0
        %2060 = vmatprep.mubr.f32.mxu0 0.0
        %2061 = vmatmul.mubr.f32.gmra.mxu0 %v1911
        %v2062 = vpop.f32.mrf.mxu0
        %v2063 = vadd.f32 0.0, %v2062
        %v2064 = vpop.f32.mrf.mxu0
        %2065 = vmatprep.mubr.f32.mxu0 0.0
        %2066 = vmatmul.mubr.f32.gmra.mxu0 %v1912
        %v2067 = vpop.f32.mrf.mxu0
        %v2068 = vadd.f32 0.0, %v2067
        %v2069 = vpop.f32.mrf.mxu0
        %2070 = vmatprep.mubr.f32.mxu0 0.0
        %2071 = vmatmul.mubr.f32.gmra.mxu0 %v1913
        %v2072 = vpop.f32.mrf.mxu0
        %v2073 = vadd.f32 0.0, %v2072
        %v2074 = vpop.f32.mrf.mxu0
        %2075 = vmatprep.mubr.f32.mxu0 0.0
        %2076 = vmatmul.mubr.f32.gmra.mxu0 %v1914
        %v2077 = vpop.f32.mrf.mxu0
        %v2078 = vadd.f32 0.0, %v2077
        %v2079 = vpop.f32.mrf.mxu0
        %2080 = vmatprep.mubr.f32.mxu0 0.0
        %2081 = vmatmul.mubr.f32.gmra.mxu0 %v1915
        %v2082 = vpop.f32.mrf.mxu0
        %v2083 = vadd.f32 0.0, %v2082
        %v2084 = vpop.f32.mrf.mxu0
        %2085 = vmatprep.mubr.f32.mxu0 0.0
        %2086 = vmatmul.mubr.f32.gmra.mxu0 %v1916
        %v2087 = vpop.f32.mrf.mxu0
        %v2088 = vadd.f32 0.0, %v2087
        %v2089 = vpop.f32.mrf.mxu0
        %2090 = vmatprep.mubr.f32.mxu0 0.0
        %2091 = vmatmul.mubr.f32.gmra.mxu0 %v1917
        %v2092 = vpop.f32.mrf.mxu0
        %v2093 = vadd.f32 0.0, %v2092
        %v2094 = vpop.f32.mrf.mxu0
        %2095 = vmatprep.mubr.f32.mxu0 0.0
        %2096 = vmatmul.mubr.f32.gmra.mxu0 %v1918
        %v2097 = vpop.f32.mrf.mxu0
        %v2098 = vadd.f32 0.0, %v2097
        %v2099 = vpop.f32.mrf.mxu0
        %2100 = vmatprep.mubr.f32.mxu0 0.0
        %2101 = vmatmul.mubr.f32.gmra.mxu0 %v1919
        %v2102 = vpop.f32.mrf.mxu0
        %v2103 = vadd.f32 0.0, %v2102
        %v2104 = vpop.f32.mrf.mxu0
        %2105 = vmatprep.mubr.f32.mxu0 0.0
        %2106 = vmatmul.mubr.f32.gmra.mxu0 %v1920
        %v2107 = vpop.f32.mrf.mxu0
        %v2108 = vadd.f32 0.0, %v2107
        %v2109 = vpop.f32.mrf.mxu0
        %2110 = vmatprep.mubr.f32.mxu0 0.0
        %2111 = vmatmul.mubr.f32.gmra.mxu0 %v1921
        %v2112 = vpop.f32.mrf.mxu0
        %v2113 = vadd.f32 0.0, %v2112
        %v2114 = vpop.f32.mrf.mxu0
        %2115 = vmatprep.mubr.f32.mxu0 0.0
        %2116 = vmatmul.mubr.f32.gmra.mxu0 %v1922
        %v2117 = vpop.f32.mrf.mxu0
        %v2118 = vadd.f32 0.0, %v2117
        %v2119 = vpop.f32.mrf.mxu0
        %2120 = vmatprep.mubr.f32.mxu0 0.0
        %2121 = vmatmul.mubr.f32.gmra.mxu0 %v1923
        %v2122 = vpop.f32.mrf.mxu0
        %v2123 = vadd.f32 0.0, %v2122
        %v2124 = vpop.f32.mrf.mxu0
        %2125 = vmatprep.mubr.f32.mxu0 0.0
        %2126 = vmatmul.mubr.f32.gmra.mxu0 %v1924
        %v2127 = vpop.f32.mrf.mxu0
        %v2128 = vadd.f32 0.0, %v2127
        %v2129 = vpop.f32.mrf.mxu0
        %2130 = vmatprep.mubr.f32.mxu0 0.0
        %2131 = vmatmul.mubr.f32.gmra.mxu0 %v1925
        %v2132 = vpop.f32.mrf.mxu0
        %v2133 = vadd.f32 0.0, %v2132
        %v2134 = vpop.f32.mrf.mxu0
        %2135 = vmatprep.mubr.f32.mxu0 0.0
        %2136 = vmatmul.mubr.f32.gmra.mxu0 %v1926
        %v2137 = vpop.f32.mrf.mxu0
        %v2138 = vadd.f32 0.0, %v2137
        %v2139 = vpop.f32.mrf.mxu0
        %2140 = vmatprep.mubr.f32.mxu0 0.0
        %2141 = vmatmul.mubr.f32.gmra.mxu0 %v1927
        %v2142 = vpop.f32.mrf.mxu0
        %v2143 = vadd.f32 0.0, %v2142
        %v2144 = vpop.f32.mrf.mxu0
        %2145 = vmatprep.mubr.f32.mxu0 0.0
        %2146 = vmatmul.mubr.f32.gmra.mxu0 %v1928
        %v2147 = vpop.f32.mrf.mxu0
        %v2148 = vadd.f32 0.0, %v2147
        %v2149 = vpop.f32.mrf.mxu0
        %2150 = vmatprep.mubr.f32.mxu0 0.0
        %2151 = vmatmul.mubr.f32.gmra.mxu0 %v1929
        %v2152 = vpop.f32.mrf.mxu0
        %v2153 = vadd.f32 0.0, %v2152
        %v2154 = vpop.f32.mrf.mxu0
        %2155 = vmatprep.mubr.f32.mxu0 0.0
        %2156 = vmatmul.mubr.f32.gmra.mxu0 %v1930
        %v2157 = vpop.f32.mrf.mxu0
        %v2158 = vadd.f32 0.0, %v2157
        %v2159 = vpop.f32.mrf.mxu0
        %2160 = vmatprep.mubr.f32.mxu0 0.0
        %2161 = vmatmul.mubr.f32.gmra.mxu0 %v1931
        %v2162 = vpop.f32.mrf.mxu0
        %v2163 = vadd.f32 0.0, %v2162
        %v2164 = vpop.f32.mrf.mxu0
        %2165 = vmatprep.mubr.f32.mxu0 0.0
        %2166 = vmatmul.mubr.f32.gmra.mxu0 %v1932
        %v2167 = vpop.f32.mrf.mxu0
        %v2168 = vadd.f32 0.0, %v2167
        %v2169 = vpop.f32.mrf.mxu0
        %2170 = vmatprep.mubr.f32.mxu0 0.0
        %2171 = vmatmul.mubr.f32.gmra.mxu0 %v1933
        %v2172 = vpop.f32.mrf.mxu0
        %v2173 = vadd.f32 0.0, %v2172
        %v2174 = vpop.f32.mrf.mxu0
        %2175 = vdwg.mxu0
        %v2176 = vadd.f32 %v1870, %v2018
        %v2177 = vadd.f32 %v1871, %v2023
        %v2178 = vadd.f32 %v1872, %v2028
        %v2179 = vadd.f32 %v1873, %v2033
        %v2180 = vadd.f32 %v1874, %v2038
        %v2181 = vadd.f32 %v1875, %v2043
        %v2182 = vadd.f32 %v1876, %v2048
        %v2183 = vadd.f32 %v1877, %v2053
        %v2184 = vadd.f32 %v1878, %v2058
        %v2185 = vadd.f32 %v1879, %v2063
        %v2186 = vadd.f32 %v1880, %v2068
        %v2187 = vadd.f32 %v1881, %v2073
        %v2188 = vadd.f32 %v1882, %v2078
        %v2189 = vadd.f32 %v1883, %v2083
        %v2190 = vadd.f32 %v1884, %v2088
        %v2191 = vadd.f32 %v1885, %v2093
        %v2192 = vadd.f32 %v1886, %v2098
        %v2193 = vadd.f32 %v1887, %v2103
        %v2194 = vadd.f32 %v1888, %v2108
        %v2195 = vadd.f32 %v1889, %v2113
        %v2196 = vadd.f32 %v1890, %v2118
        %v2197 = vadd.f32 %v1891, %v2123
        %v2198 = vadd.f32 %v1892, %v2128
        %v2199 = vadd.f32 %v1893, %v2133
        %v2200 = vadd.f32 %v1894, %v2138
        %v2201 = vadd.f32 %v1895, %v2143
        %v2202 = vadd.f32 %v1896, %v2148
        %v2203 = vadd.f32 %v1897, %v2153
        %v2204 = vadd.f32 %v1898, %v2158
        %v2205 = vadd.f32 %v1899, %v2163
        %v2206 = vadd.f32 %v1900, %v2168
        %v2207 = vadd.f32 %v1901, %v2173
        %v2208 = vld [vmem:[%s1016 + $0x1] sm:$0xff]
        %v2209 = vld [vmem:[%s1016 + $0x9] sm:$0xff]
        %v2210 = vld [vmem:[%s1016 + $0x19] sm:$0xff]
        %v2211 = vld [vmem:[%s1016 + $0x21] sm:$0xff]
        %v2212 = vld [vmem:[%s1016 + $0x31] sm:$0xff]
        %v2213 = vld [vmem:[%s1016 + $0x39] sm:$0xff]
        %v2214 = vld [vmem:[%s1016 + $0x49] sm:$0xff]
        %v2215 = vld [vmem:[%s1016 + $0x51] sm:$0xff]
        %v2216 = vld [vmem:[%s1016 + $0x61] sm:$0xff]
        %v2217 = vld [vmem:[%s1016 + $0x69] sm:$0xff]
        %v2218 = vld [vmem:[%s1016 + $0x79] sm:$0xff]
        %v2219 = vld [vmem:[%s1016 + $0x81] sm:$0xff]
        %v2220 = vld [vmem:[%s1016 + $0x91] sm:$0xff]
        %v2221 = vld [vmem:[%s1016 + $0x99] sm:$0xff]
        %v2222 = vld [vmem:[%s1016 + $0xa9] sm:$0xff]
        %v2223 = vld [vmem:[%s1016 + $0xb1] sm:$0xff]
        %v2224 = vld [vmem:[%s1016 + $0xc1] sm:$0xff]
        %v2225 = vld [vmem:[%s1016 + $0xc9] sm:$0xff]
        %v2226 = vld [vmem:[%s1016 + $0xd9] sm:$0xff]
        %v2227 = vld [vmem:[%s1016 + $0xe1] sm:$0xff]
        %v2228 = vld [vmem:[%s1016 + $0xf1] sm:$0xff]
        %v2229 = vld [vmem:[%s1016 + $0xf9] sm:$0xff]
        %v2230 = vld [vmem:[%s1016 + $0x109] sm:$0xff]
        %v2231 = vld [vmem:[%s1016 + $0x111] sm:$0xff]
        %v2232 = vld [vmem:[%s1016 + $0x121] sm:$0xff]
        %v2233 = vld [vmem:[%s1016 + $0x129] sm:$0xff]
        %v2234 = vld [vmem:[%s1016 + $0x139] sm:$0xff]
        %v2235 = vld [vmem:[%s1016 + $0x141] sm:$0xff]
        %v2236 = vld [vmem:[%s1016 + $0x151] sm:$0xff]
        %v2237 = vld [vmem:[%s1016 + $0x159] sm:$0xff]
        %v2238 = vld [vmem:[%s1016 + $0x169] sm:$0xff]
        %v2239 = vld [vmem:[%s1016 + $0x171] sm:$0xff]
        %s2240 = scalar_lea.vmem [#allocation8], 512
        %v2241 = vld [vmem:[%s2240] sm:$0xff]
        %v2242 = vld [vmem:[%s2240 + $0x8] sm:$0xff]
        %v2243 = vld [vmem:[%s2240 + $0x10] sm:$0xff]
        %v2244 = vld [vmem:[%s2240 + $0x18] sm:$0xff]
        %v2245 = vld [vmem:[%s2240 + $0x20] sm:$0xff]
        %v2246 = vld [vmem:[%s2240 + $0x28] sm:$0xff]
        %v2247 = vld [vmem:[%s2240 + $0x30] sm:$0xff]
        %v2248 = vld [vmem:[%s2240 + $0x38] sm:$0xff]
        %v2249 = vld [vmem:[%s2240 + $0x40] sm:$0xff]
        %v2250 = vld [vmem:[%s2240 + $0x48] sm:$0xff]
        %v2251 = vld [vmem:[%s2240 + $0x50] sm:$0xff]
        %v2252 = vld [vmem:[%s2240 + $0x58] sm:$0xff]
        %v2253 = vld [vmem:[%s2240 + $0x60] sm:$0xff]
        %v2254 = vld [vmem:[%s2240 + $0x68] sm:$0xff]
        %v2255 = vld [vmem:[%s2240 + $0x70] sm:$0xff]
        %v2256 = vld [vmem:[%s2240 + $0x78] sm:$0xff]
        %2257 = vmatprep.subr.mxu0 0.0
        %2258 = vmatpush1.msra.mxu0 %v2256
        %2259 = vmatprep.subr.mxu0 0.0
        %2260 = vmatpush1.msra.mxu0 %v2255
        %2261 = vmatprep.subr.mxu0 0.0
        %2262 = vmatpush1.msra.mxu0 %v2254
        %2263 = vmatprep.subr.mxu0 0.0
        %2264 = vmatpush1.msra.mxu0 %v2253
        %2265 = vmatprep.subr.mxu0 0.0
        %2266 = vmatpush1.msra.mxu0 %v2252
        %2267 = vmatprep.subr.mxu0 0.0
        %2268 = vmatpush1.msra.mxu0 %v2251
        %2269 = vmatprep.subr.mxu0 0.0
        %2270 = vmatpush1.msra.mxu0 %v2250
        %2271 = vmatprep.subr.mxu0 0.0
        %2272 = vmatpush1.msra.mxu0 %v2249
        %2273 = vmatprep.subr.mxu0 0.0
        %2274 = vmatpush1.msra.mxu0 %v2248
        %2275 = vmatprep.subr.mxu0 0.0
        %2276 = vmatpush1.msra.mxu0 %v2247
        %2277 = vmatprep.subr.mxu0 0.0
        %2278 = vmatpush1.msra.mxu0 %v2246
        %2279 = vmatprep.subr.mxu0 0.0
        %2280 = vmatpush1.msra.mxu0 %v2245
        %2281 = vmatprep.subr.mxu0 0.0
        %2282 = vmatpush1.msra.mxu0 %v2244
        %2283 = vmatprep.subr.mxu0 0.0
        %2284 = vmatpush1.msra.mxu0 %v2243
        %2285 = vmatprep.subr.mxu0 0.0
        %2286 = vmatpush1.msra.mxu0 %v2242
        %2287 = vmatprep.subr.mxu0 0.0
        %2288 = vmatpush1.msra.mxu0 %v2241
        %2289 = vmatprep.subr.mxu0 0.0
        %2290 = vmatpush2.msra.mxu0 0.0
        %2291 = vmatprep.subr.mxu0 0.0
        %2292 = vmatpush2.msra.mxu0 0.0
        %2293 = vmatprep.subr.mxu0 0.0
        %2294 = vmatpush2.msra.mxu0 0.0
        %2295 = vmatprep.subr.mxu0 0.0
        %2296 = vmatpush2.msra.mxu0 0.0
        %2297 = vmatprep.subr.mxu0 0.0
        %2298 = vmatpush2.msra.mxu0 0.0
        %2299 = vmatprep.subr.mxu0 0.0
        %2300 = vmatpush2.msra.mxu0 0.0
        %2301 = vmatprep.subr.mxu0 0.0
        %2302 = vmatpush2.msra.mxu0 0.0
        %2303 = vmatprep.subr.mxu0 0.0
        %2304 = vmatpush2.msra.mxu0 0.0
        %2305 = vmatprep.subr.mxu0 0.0
        %2306 = vmatpush2.msra.mxu0 0.0
        %2307 = vmatprep.subr.mxu0 0.0
        %2308 = vmatpush2.msra.mxu0 0.0
        %2309 = vmatprep.subr.mxu0 0.0
        %2310 = vmatpush2.msra.mxu0 0.0
        %2311 = vmatprep.subr.mxu0 0.0
        %2312 = vmatpush2.msra.mxu0 0.0
        %2313 = vmatprep.subr.mxu0 0.0
        %2314 = vmatpush2.msra.mxu0 0.0
        %2315 = vmatprep.subr.mxu0 0.0
        %2316 = vmatpush2.msra.mxu0 0.0
        %2317 = vmatprep.subr.mxu0 0.0
        %2318 = vmatpush2.msra.mxu0 0.0
        %2319 = vmatprep.subr.mxu0 0.0
        %2320 = vmatpush2.msra.mxu0 0.0
        %2321 = vmatprep.mubr.f32.mxu0 0.0
        %2322 = vmatmul.mubr.f32.gmra.mxu0 %v2208
        %v2323 = vpop.f32.mrf.mxu0
        %v2324 = vadd.f32 0.0, %v2323
        %v2325 = vpop.f32.mrf.mxu0
        %2326 = vmatprep.mubr.f32.mxu0 0.0
        %2327 = vmatmul.mubr.f32.gmra.mxu0 %v2209
        %v2328 = vpop.f32.mrf.mxu0
        %v2329 = vadd.f32 0.0, %v2328
        %v2330 = vpop.f32.mrf.mxu0
        %2331 = vmatprep.mubr.f32.mxu0 0.0
        %2332 = vmatmul.mubr.f32.gmra.mxu0 %v2210
        %v2333 = vpop.f32.mrf.mxu0
        %v2334 = vadd.f32 0.0, %v2333
        %v2335 = vpop.f32.mrf.mxu0
        %2336 = vmatprep.mubr.f32.mxu0 0.0
        %2337 = vmatmul.mubr.f32.gmra.mxu0 %v2211
        %v2338 = vpop.f32.mrf.mxu0
        %v2339 = vadd.f32 0.0, %v2338
        %v2340 = vpop.f32.mrf.mxu0
        %2341 = vmatprep.mubr.f32.mxu0 0.0
        %2342 = vmatmul.mubr.f32.gmra.mxu0 %v2212
        %v2343 = vpop.f32.mrf.mxu0
        %v2344 = vadd.f32 0.0, %v2343
        %v2345 = vpop.f32.mrf.mxu0
        %2346 = vmatprep.mubr.f32.mxu0 0.0
        %2347 = vmatmul.mubr.f32.gmra.mxu0 %v2213
        %v2348 = vpop.f32.mrf.mxu0
        %v2349 = vadd.f32 0.0, %v2348
        %v2350 = vpop.f32.mrf.mxu0
        %2351 = vmatprep.mubr.f32.mxu0 0.0
        %2352 = vmatmul.mubr.f32.gmra.mxu0 %v2214
        %v2353 = vpop.f32.mrf.mxu0
        %v2354 = vadd.f32 0.0, %v2353
        %v2355 = vpop.f32.mrf.mxu0
        %2356 = vmatprep.mubr.f32.mxu0 0.0
        %2357 = vmatmul.mubr.f32.gmra.mxu0 %v2215
        %v2358 = vpop.f32.mrf.mxu0
        %v2359 = vadd.f32 0.0, %v2358
        %v2360 = vpop.f32.mrf.mxu0
        %2361 = vmatprep.mubr.f32.mxu0 0.0
        %2362 = vmatmul.mubr.f32.gmra.mxu0 %v2216
        %v2363 = vpop.f32.mrf.mxu0
        %v2364 = vadd.f32 0.0, %v2363
        %v2365 = vpop.f32.mrf.mxu0
        %2366 = vmatprep.mubr.f32.mxu0 0.0
        %2367 = vmatmul.mubr.f32.gmra.mxu0 %v2217
        %v2368 = vpop.f32.mrf.mxu0
        %v2369 = vadd.f32 0.0, %v2368
        %v2370 = vpop.f32.mrf.mxu0
        %2371 = vmatprep.mubr.f32.mxu0 0.0
        %2372 = vmatmul.mubr.f32.gmra.mxu0 %v2218
        %v2373 = vpop.f32.mrf.mxu0
        %v2374 = vadd.f32 0.0, %v2373
        %v2375 = vpop.f32.mrf.mxu0
        %2376 = vmatprep.mubr.f32.mxu0 0.0
        %2377 = vmatmul.mubr.f32.gmra.mxu0 %v2219
        %v2378 = vpop.f32.mrf.mxu0
        %v2379 = vadd.f32 0.0, %v2378
        %v2380 = vpop.f32.mrf.mxu0
        %2381 = vmatprep.mubr.f32.mxu0 0.0
        %2382 = vmatmul.mubr.f32.gmra.mxu0 %v2220
        %v2383 = vpop.f32.mrf.mxu0
        %v2384 = vadd.f32 0.0, %v2383
        %v2385 = vpop.f32.mrf.mxu0
        %2386 = vmatprep.mubr.f32.mxu0 0.0
        %2387 = vmatmul.mubr.f32.gmra.mxu0 %v2221
        %v2388 = vpop.f32.mrf.mxu0
        %v2389 = vadd.f32 0.0, %v2388
        %v2390 = vpop.f32.mrf.mxu0
        %2391 = vmatprep.mubr.f32.mxu0 0.0
        %2392 = vmatmul.mubr.f32.gmra.mxu0 %v2222
        %v2393 = vpop.f32.mrf.mxu0
        %v2394 = vadd.f32 0.0, %v2393
        %v2395 = vpop.f32.mrf.mxu0
        %2396 = vmatprep.mubr.f32.mxu0 0.0
        %2397 = vmatmul.mubr.f32.gmra.mxu0 %v2223
        %v2398 = vpop.f32.mrf.mxu0
        %v2399 = vadd.f32 0.0, %v2398
        %v2400 = vpop.f32.mrf.mxu0
        %2401 = vmatprep.mubr.f32.mxu0 0.0
        %2402 = vmatmul.mubr.f32.gmra.mxu0 %v2224
        %v2403 = vpop.f32.mrf.mxu0
        %v2404 = vadd.f32 0.0, %v2403
        %v2405 = vpop.f32.mrf.mxu0
        %2406 = vmatprep.mubr.f32.mxu0 0.0
        %2407 = vmatmul.mubr.f32.gmra.mxu0 %v2225
        %v2408 = vpop.f32.mrf.mxu0
        %v2409 = vadd.f32 0.0, %v2408
        %v2410 = vpop.f32.mrf.mxu0
        %2411 = vmatprep.mubr.f32.mxu0 0.0
        %2412 = vmatmul.mubr.f32.gmra.mxu0 %v2226
        %v2413 = vpop.f32.mrf.mxu0
        %v2414 = vadd.f32 0.0, %v2413
        %v2415 = vpop.f32.mrf.mxu0
        %2416 = vmatprep.mubr.f32.mxu0 0.0
        %2417 = vmatmul.mubr.f32.gmra.mxu0 %v2227
        %v2418 = vpop.f32.mrf.mxu0
        %v2419 = vadd.f32 0.0, %v2418
        %v2420 = vpop.f32.mrf.mxu0
        %2421 = vmatprep.mubr.f32.mxu0 0.0
        %2422 = vmatmul.mubr.f32.gmra.mxu0 %v2228
        %v2423 = vpop.f32.mrf.mxu0
        %v2424 = vadd.f32 0.0, %v2423
        %v2425 = vpop.f32.mrf.mxu0
        %2426 = vmatprep.mubr.f32.mxu0 0.0
        %2427 = vmatmul.mubr.f32.gmra.mxu0 %v2229
        %v2428 = vpop.f32.mrf.mxu0
        %v2429 = vadd.f32 0.0, %v2428
        %v2430 = vpop.f32.mrf.mxu0
        %2431 = vmatprep.mubr.f32.mxu0 0.0
        %2432 = vmatmul.mubr.f32.gmra.mxu0 %v2230
        %v2433 = vpop.f32.mrf.mxu0
        %v2434 = vadd.f32 0.0, %v2433
        %v2435 = vpop.f32.mrf.mxu0
        %2436 = vmatprep.mubr.f32.mxu0 0.0
        %2437 = vmatmul.mubr.f32.gmra.mxu0 %v2231
        %v2438 = vpop.f32.mrf.mxu0
        %v2439 = vadd.f32 0.0, %v2438
        %v2440 = vpop.f32.mrf.mxu0
        %2441 = vmatprep.mubr.f32.mxu0 0.0
        %2442 = vmatmul.mubr.f32.gmra.mxu0 %v2232
        %v2443 = vpop.f32.mrf.mxu0
        %v2444 = vadd.f32 0.0, %v2443
        %v2445 = vpop.f32.mrf.mxu0
        %2446 = vmatprep.mubr.f32.mxu0 0.0
        %2447 = vmatmul.mubr.f32.gmra.mxu0 %v2233
        %v2448 = vpop.f32.mrf.mxu0
        %v2449 = vadd.f32 0.0, %v2448
        %v2450 = vpop.f32.mrf.mxu0
        %2451 = vmatprep.mubr.f32.mxu0 0.0
        %2452 = vmatmul.mubr.f32.gmra.mxu0 %v2234
        %v2453 = vpop.f32.mrf.mxu0
        %v2454 = vadd.f32 0.0, %v2453
        %v2455 = vpop.f32.mrf.mxu0
        %2456 = vmatprep.mubr.f32.mxu0 0.0
        %2457 = vmatmul.mubr.f32.gmra.mxu0 %v2235
        %v2458 = vpop.f32.mrf.mxu0
        %v2459 = vadd.f32 0.0, %v2458
        %v2460 = vpop.f32.mrf.mxu0
        %2461 = vmatprep.mubr.f32.mxu0 0.0
        %2462 = vmatmul.mubr.f32.gmra.mxu0 %v2236
        %v2463 = vpop.f32.mrf.mxu0
        %v2464 = vadd.f32 0.0, %v2463
        %v2465 = vpop.f32.mrf.mxu0
        %2466 = vmatprep.mubr.f32.mxu0 0.0
        %2467 = vmatmul.mubr.f32.gmra.mxu0 %v2237
        %v2468 = vpop.f32.mrf.mxu0
        %v2469 = vadd.f32 0.0, %v2468
        %v2470 = vpop.f32.mrf.mxu0
        %2471 = vmatprep.mubr.f32.mxu0 0.0
        %2472 = vmatmul.mubr.f32.gmra.mxu0 %v2238
        %v2473 = vpop.f32.mrf.mxu0
        %v2474 = vadd.f32 0.0, %v2473
        %v2475 = vpop.f32.mrf.mxu0
        %2476 = vmatprep.mubr.f32.mxu0 0.0
        %2477 = vmatmul.mubr.f32.gmra.mxu0 %v2239
        %v2478 = vpop.f32.mrf.mxu0
        %v2479 = vadd.f32 0.0, %v2478
        %v2480 = vpop.f32.mrf.mxu0
        %2481 = vdwg.mxu0
        %v2482 = vadd.f32 %v2176, %v2324
        %v2483 = vadd.f32 %v2177, %v2329
        %v2484 = vadd.f32 %v2178, %v2334
        %v2485 = vadd.f32 %v2179, %v2339
        %v2486 = vadd.f32 %v2180, %v2344
        %v2487 = vadd.f32 %v2181, %v2349
        %v2488 = vadd.f32 %v2182, %v2354
        %v2489 = vadd.f32 %v2183, %v2359
        %v2490 = vadd.f32 %v2184, %v2364
        %v2491 = vadd.f32 %v2185, %v2369
        %v2492 = vadd.f32 %v2186, %v2374
        %v2493 = vadd.f32 %v2187, %v2379
        %v2494 = vadd.f32 %v2188, %v2384
        %v2495 = vadd.f32 %v2189, %v2389
        %v2496 = vadd.f32 %v2190, %v2394
        %v2497 = vadd.f32 %v2191, %v2399
        %v2498 = vadd.f32 %v2192, %v2404
        %v2499 = vadd.f32 %v2193, %v2409
        %v2500 = vadd.f32 %v2194, %v2414
        %v2501 = vadd.f32 %v2195, %v2419
        %v2502 = vadd.f32 %v2196, %v2424
        %v2503 = vadd.f32 %v2197, %v2429
        %v2504 = vadd.f32 %v2198, %v2434
        %v2505 = vadd.f32 %v2199, %v2439
        %v2506 = vadd.f32 %v2200, %v2444
        %v2507 = vadd.f32 %v2201, %v2449
        %v2508 = vadd.f32 %v2202, %v2454
        %v2509 = vadd.f32 %v2203, %v2459
        %v2510 = vadd.f32 %v2204, %v2464
        %v2511 = vadd.f32 %v2205, %v2469
        %v2512 = vadd.f32 %v2206, %v2474
        %v2513 = vadd.f32 %v2207, %v2479
        %v2514 = vld [vmem:[%s1016 + $0x2] sm:$0xff]
        %v2515 = vld [vmem:[%s1016 + $0xa] sm:$0xff]
        %v2516 = vld [vmem:[%s1016 + $0x1a] sm:$0xff]
        %v2517 = vld [vmem:[%s1016 + $0x22] sm:$0xff]
        %v2518 = vld [vmem:[%s1016 + $0x32] sm:$0xff]
        %v2519 = vld [vmem:[%s1016 + $0x3a] sm:$0xff]
        %v2520 = vld [vmem:[%s1016 + $0x4a] sm:$0xff]
        %v2521 = vld [vmem:[%s1016 + $0x52] sm:$0xff]
        %v2522 = vld [vmem:[%s1016 + $0x62] sm:$0xff]
        %v2523 = vld [vmem:[%s1016 + $0x6a] sm:$0xff]
        %v2524 = vld [vmem:[%s1016 + $0x7a] sm:$0xff]
        %v2525 = vld [vmem:[%s1016 + $0x82] sm:$0xff]
        %v2526 = vld [vmem:[%s1016 + $0x92] sm:$0xff]
        %v2527 = vld [vmem:[%s1016 + $0x9a] sm:$0xff]
        %v2528 = vld [vmem:[%s1016 + $0xaa] sm:$0xff]
        %v2529 = vld [vmem:[%s1016 + $0xb2] sm:$0xff]
        %v2530 = vld [vmem:[%s1016 + $0xc2] sm:$0xff]
        %v2531 = vld [vmem:[%s1016 + $0xca] sm:$0xff]
        %v2532 = vld [vmem:[%s1016 + $0xda] sm:$0xff]
        %v2533 = vld [vmem:[%s1016 + $0xe2] sm:$0xff]
        %v2534 = vld [vmem:[%s1016 + $0xf2] sm:$0xff]
        %v2535 = vld [vmem:[%s1016 + $0xfa] sm:$0xff]
        %v2536 = vld [vmem:[%s1016 + $0x10a] sm:$0xff]
        %v2537 = vld [vmem:[%s1016 + $0x112] sm:$0xff]
        %v2538 = vld [vmem:[%s1016 + $0x122] sm:$0xff]
        %v2539 = vld [vmem:[%s1016 + $0x12a] sm:$0xff]
        %v2540 = vld [vmem:[%s1016 + $0x13a] sm:$0xff]
        %v2541 = vld [vmem:[%s1016 + $0x142] sm:$0xff]
        %v2542 = vld [vmem:[%s1016 + $0x152] sm:$0xff]
        %v2543 = vld [vmem:[%s1016 + $0x15a] sm:$0xff]
        %v2544 = vld [vmem:[%s1016 + $0x16a] sm:$0xff]
        %v2545 = vld [vmem:[%s1016 + $0x172] sm:$0xff]
        %s2546 = scalar_lea.vmem [#allocation8], 640
        %v2547 = vld [vmem:[%s2546] sm:$0xff]
        %v2548 = vld [vmem:[%s2546 + $0x8] sm:$0xff]
        %v2549 = vld [vmem:[%s2546 + $0x10] sm:$0xff]
        %v2550 = vld [vmem:[%s2546 + $0x18] sm:$0xff]
        %v2551 = vld [vmem:[%s2546 + $0x20] sm:$0xff]
        %v2552 = vld [vmem:[%s2546 + $0x28] sm:$0xff]
        %v2553 = vld [vmem:[%s2546 + $0x30] sm:$0xff]
        %v2554 = vld [vmem:[%s2546 + $0x38] sm:$0xff]
        %v2555 = vld [vmem:[%s2546 + $0x40] sm:$0xff]
        %v2556 = vld [vmem:[%s2546 + $0x48] sm:$0xff]
        %v2557 = vld [vmem:[%s2546 + $0x50] sm:$0xff]
        %v2558 = vld [vmem:[%s2546 + $0x58] sm:$0xff]
        %v2559 = vld [vmem:[%s2546 + $0x60] sm:$0xff]
        %v2560 = vld [vmem:[%s2546 + $0x68] sm:$0xff]
        %v2561 = vld [vmem:[%s2546 + $0x70] sm:$0xff]
        %v2562 = vld [vmem:[%s2546 + $0x78] sm:$0xff]
        %2563 = vmatprep.subr.mxu0 0.0
        %2564 = vmatpush1.msra.mxu0 %v2562
        %2565 = vmatprep.subr.mxu0 0.0
        %2566 = vmatpush1.msra.mxu0 %v2561
        %2567 = vmatprep.subr.mxu0 0.0
        %2568 = vmatpush1.msra.mxu0 %v2560
        %2569 = vmatprep.subr.mxu0 0.0
        %2570 = vmatpush1.msra.mxu0 %v2559
        %2571 = vmatprep.subr.mxu0 0.0
        %2572 = vmatpush1.msra.mxu0 %v2558
        %2573 = vmatprep.subr.mxu0 0.0
        %2574 = vmatpush1.msra.mxu0 %v2557
        %2575 = vmatprep.subr.mxu0 0.0
        %2576 = vmatpush1.msra.mxu0 %v2556
        %2577 = vmatprep.subr.mxu0 0.0
        %2578 = vmatpush1.msra.mxu0 %v2555
        %2579 = vmatprep.subr.mxu0 0.0
        %2580 = vmatpush1.msra.mxu0 %v2554
        %2581 = vmatprep.subr.mxu0 0.0
        %2582 = vmatpush1.msra.mxu0 %v2553
        %2583 = vmatprep.subr.mxu0 0.0
        %2584 = vmatpush1.msra.mxu0 %v2552
        %2585 = vmatprep.subr.mxu0 0.0
        %2586 = vmatpush1.msra.mxu0 %v2551
        %2587 = vmatprep.subr.mxu0 0.0
        %2588 = vmatpush1.msra.mxu0 %v2550
        %2589 = vmatprep.subr.mxu0 0.0
        %2590 = vmatpush1.msra.mxu0 %v2549
        %2591 = vmatprep.subr.mxu0 0.0
        %2592 = vmatpush1.msra.mxu0 %v2548
        %2593 = vmatprep.subr.mxu0 0.0
        %2594 = vmatpush1.msra.mxu0 %v2547
        %2595 = vmatprep.subr.mxu0 0.0
        %2596 = vmatpush2.msra.mxu0 0.0
        %2597 = vmatprep.subr.mxu0 0.0
        %2598 = vmatpush2.msra.mxu0 0.0
        %2599 = vmatprep.subr.mxu0 0.0
        %2600 = vmatpush2.msra.mxu0 0.0
        %2601 = vmatprep.subr.mxu0 0.0
        %2602 = vmatpush2.msra.mxu0 0.0
        %2603 = vmatprep.subr.mxu0 0.0
        %2604 = vmatpush2.msra.mxu0 0.0
        %2605 = vmatprep.subr.mxu0 0.0
        %2606 = vmatpush2.msra.mxu0 0.0
        %2607 = vmatprep.subr.mxu0 0.0
        %2608 = vmatpush2.msra.mxu0 0.0
        %2609 = vmatprep.subr.mxu0 0.0
        %2610 = vmatpush2.msra.mxu0 0.0
        %2611 = vmatprep.subr.mxu0 0.0
        %2612 = vmatpush2.msra.mxu0 0.0
        %2613 = vmatprep.subr.mxu0 0.0
        %2614 = vmatpush2.msra.mxu0 0.0
        %2615 = vmatprep.subr.mxu0 0.0
        %2616 = vmatpush2.msra.mxu0 0.0
        %2617 = vmatprep.subr.mxu0 0.0
        %2618 = vmatpush2.msra.mxu0 0.0
        %2619 = vmatprep.subr.mxu0 0.0
        %2620 = vmatpush2.msra.mxu0 0.0
        %2621 = vmatprep.subr.mxu0 0.0
        %2622 = vmatpush2.msra.mxu0 0.0
        %2623 = vmatprep.subr.mxu0 0.0
        %2624 = vmatpush2.msra.mxu0 0.0
        %2625 = vmatprep.subr.mxu0 0.0
        %2626 = vmatpush2.msra.mxu0 0.0
        %2627 = vmatprep.mubr.f32.mxu0 0.0
        %2628 = vmatmul.mubr.f32.gmra.mxu0 %v2514
        %v2629 = vpop.f32.mrf.mxu0
        %v2630 = vadd.f32 0.0, %v2629
        %v2631 = vpop.f32.mrf.mxu0
        %2632 = vmatprep.mubr.f32.mxu0 0.0
        %2633 = vmatmul.mubr.f32.gmra.mxu0 %v2515
        %v2634 = vpop.f32.mrf.mxu0
        %v2635 = vadd.f32 0.0, %v2634
        %v2636 = vpop.f32.mrf.mxu0
        %2637 = vmatprep.mubr.f32.mxu0 0.0
        %2638 = vmatmul.mubr.f32.gmra.mxu0 %v2516
        %v2639 = vpop.f32.mrf.mxu0
        %v2640 = vadd.f32 0.0, %v2639
        %v2641 = vpop.f32.mrf.mxu0
        %2642 = vmatprep.mubr.f32.mxu0 0.0
        %2643 = vmatmul.mubr.f32.gmra.mxu0 %v2517
        %v2644 = vpop.f32.mrf.mxu0
        %v2645 = vadd.f32 0.0, %v2644
        %v2646 = vpop.f32.mrf.mxu0
        %2647 = vmatprep.mubr.f32.mxu0 0.0
        %2648 = vmatmul.mubr.f32.gmra.mxu0 %v2518
        %v2649 = vpop.f32.mrf.mxu0
        %v2650 = vadd.f32 0.0, %v2649
        %v2651 = vpop.f32.mrf.mxu0
        %2652 = vmatprep.mubr.f32.mxu0 0.0
        %2653 = vmatmul.mubr.f32.gmra.mxu0 %v2519
        %v2654 = vpop.f32.mrf.mxu0
        %v2655 = vadd.f32 0.0, %v2654
        %v2656 = vpop.f32.mrf.mxu0
        %2657 = vmatprep.mubr.f32.mxu0 0.0
        %2658 = vmatmul.mubr.f32.gmra.mxu0 %v2520
        %v2659 = vpop.f32.mrf.mxu0
        %v2660 = vadd.f32 0.0, %v2659
        %v2661 = vpop.f32.mrf.mxu0
        %2662 = vmatprep.mubr.f32.mxu0 0.0
        %2663 = vmatmul.mubr.f32.gmra.mxu0 %v2521
        %v2664 = vpop.f32.mrf.mxu0
        %v2665 = vadd.f32 0.0, %v2664
        %v2666 = vpop.f32.mrf.mxu0
        %2667 = vmatprep.mubr.f32.mxu0 0.0
        %2668 = vmatmul.mubr.f32.gmra.mxu0 %v2522
        %v2669 = vpop.f32.mrf.mxu0
        %v2670 = vadd.f32 0.0, %v2669
        %v2671 = vpop.f32.mrf.mxu0
        %2672 = vmatprep.mubr.f32.mxu0 0.0
        %2673 = vmatmul.mubr.f32.gmra.mxu0 %v2523
        %v2674 = vpop.f32.mrf.mxu0
        %v2675 = vadd.f32 0.0, %v2674
        %v2676 = vpop.f32.mrf.mxu0
        %2677 = vmatprep.mubr.f32.mxu0 0.0
        %2678 = vmatmul.mubr.f32.gmra.mxu0 %v2524
        %v2679 = vpop.f32.mrf.mxu0
        %v2680 = vadd.f32 0.0, %v2679
        %v2681 = vpop.f32.mrf.mxu0
        %2682 = vmatprep.mubr.f32.mxu0 0.0
        %2683 = vmatmul.mubr.f32.gmra.mxu0 %v2525
        %v2684 = vpop.f32.mrf.mxu0
        %v2685 = vadd.f32 0.0, %v2684
        %v2686 = vpop.f32.mrf.mxu0
        %2687 = vmatprep.mubr.f32.mxu0 0.0
        %2688 = vmatmul.mubr.f32.gmra.mxu0 %v2526
        %v2689 = vpop.f32.mrf.mxu0
        %v2690 = vadd.f32 0.0, %v2689
        %v2691 = vpop.f32.mrf.mxu0
        %2692 = vmatprep.mubr.f32.mxu0 0.0
        %2693 = vmatmul.mubr.f32.gmra.mxu0 %v2527
        %v2694 = vpop.f32.mrf.mxu0
        %v2695 = vadd.f32 0.0, %v2694
        %v2696 = vpop.f32.mrf.mxu0
        %2697 = vmatprep.mubr.f32.mxu0 0.0
        %2698 = vmatmul.mubr.f32.gmra.mxu0 %v2528
        %v2699 = vpop.f32.mrf.mxu0
        %v2700 = vadd.f32 0.0, %v2699
        %v2701 = vpop.f32.mrf.mxu0
        %2702 = vmatprep.mubr.f32.mxu0 0.0
        %2703 = vmatmul.mubr.f32.gmra.mxu0 %v2529
        %v2704 = vpop.f32.mrf.mxu0
        %v2705 = vadd.f32 0.0, %v2704
        %v2706 = vpop.f32.mrf.mxu0
        %2707 = vmatprep.mubr.f32.mxu0 0.0
        %2708 = vmatmul.mubr.f32.gmra.mxu0 %v2530
        %v2709 = vpop.f32.mrf.mxu0
        %v2710 = vadd.f32 0.0, %v2709
        %v2711 = vpop.f32.mrf.mxu0
        %2712 = vmatprep.mubr.f32.mxu0 0.0
        %2713 = vmatmul.mubr.f32.gmra.mxu0 %v2531
        %v2714 = vpop.f32.mrf.mxu0
        %v2715 = vadd.f32 0.0, %v2714
        %v2716 = vpop.f32.mrf.mxu0
        %2717 = vmatprep.mubr.f32.mxu0 0.0
        %2718 = vmatmul.mubr.f32.gmra.mxu0 %v2532
        %v2719 = vpop.f32.mrf.mxu0
        %v2720 = vadd.f32 0.0, %v2719
        %v2721 = vpop.f32.mrf.mxu0
        %2722 = vmatprep.mubr.f32.mxu0 0.0
        %2723 = vmatmul.mubr.f32.gmra.mxu0 %v2533
        %v2724 = vpop.f32.mrf.mxu0
        %v2725 = vadd.f32 0.0, %v2724
        %v2726 = vpop.f32.mrf.mxu0
        %2727 = vmatprep.mubr.f32.mxu0 0.0
        %2728 = vmatmul.mubr.f32.gmra.mxu0 %v2534
        %v2729 = vpop.f32.mrf.mxu0
        %v2730 = vadd.f32 0.0, %v2729
        %v2731 = vpop.f32.mrf.mxu0
        %2732 = vmatprep.mubr.f32.mxu0 0.0
        %2733 = vmatmul.mubr.f32.gmra.mxu0 %v2535
        %v2734 = vpop.f32.mrf.mxu0
        %v2735 = vadd.f32 0.0, %v2734
        %v2736 = vpop.f32.mrf.mxu0
        %2737 = vmatprep.mubr.f32.mxu0 0.0
        %2738 = vmatmul.mubr.f32.gmra.mxu0 %v2536
        %v2739 = vpop.f32.mrf.mxu0
        %v2740 = vadd.f32 0.0, %v2739
        %v2741 = vpop.f32.mrf.mxu0
        %2742 = vmatprep.mubr.f32.mxu0 0.0
        %2743 = vmatmul.mubr.f32.gmra.mxu0 %v2537
        %v2744 = vpop.f32.mrf.mxu0
        %v2745 = vadd.f32 0.0, %v2744
        %v2746 = vpop.f32.mrf.mxu0
        %2747 = vmatprep.mubr.f32.mxu0 0.0
        %2748 = vmatmul.mubr.f32.gmra.mxu0 %v2538
        %v2749 = vpop.f32.mrf.mxu0
        %v2750 = vadd.f32 0.0, %v2749
        %v2751 = vpop.f32.mrf.mxu0
        %2752 = vmatprep.mubr.f32.mxu0 0.0
        %2753 = vmatmul.mubr.f32.gmra.mxu0 %v2539
        %v2754 = vpop.f32.mrf.mxu0
        %v2755 = vadd.f32 0.0, %v2754
        %v2756 = vpop.f32.mrf.mxu0
        %2757 = vmatprep.mubr.f32.mxu0 0.0
        %2758 = vmatmul.mubr.f32.gmra.mxu0 %v2540
        %v2759 = vpop.f32.mrf.mxu0
        %v2760 = vadd.f32 0.0, %v2759
        %v2761 = vpop.f32.mrf.mxu0
        %2762 = vmatprep.mubr.f32.mxu0 0.0
        %2763 = vmatmul.mubr.f32.gmra.mxu0 %v2541
        %v2764 = vpop.f32.mrf.mxu0
        %v2765 = vadd.f32 0.0, %v2764
        %v2766 = vpop.f32.mrf.mxu0
        %2767 = vmatprep.mubr.f32.mxu0 0.0
        %2768 = vmatmul.mubr.f32.gmra.mxu0 %v2542
        %v2769 = vpop.f32.mrf.mxu0
        %v2770 = vadd.f32 0.0, %v2769
        %v2771 = vpop.f32.mrf.mxu0
        %2772 = vmatprep.mubr.f32.mxu0 0.0
        %2773 = vmatmul.mubr.f32.gmra.mxu0 %v2543
        %v2774 = vpop.f32.mrf.mxu0
        %v2775 = vadd.f32 0.0, %v2774
        %v2776 = vpop.f32.mrf.mxu0
        %2777 = vmatprep.mubr.f32.mxu0 0.0
        %2778 = vmatmul.mubr.f32.gmra.mxu0 %v2544
        %v2779 = vpop.f32.mrf.mxu0
        %v2780 = vadd.f32 0.0, %v2779
        %v2781 = vpop.f32.mrf.mxu0
        %2782 = vmatprep.mubr.f32.mxu0 0.0
        %2783 = vmatmul.mubr.f32.gmra.mxu0 %v2545
        %v2784 = vpop.f32.mrf.mxu0
        %v2785 = vadd.f32 0.0, %v2784
        %v2786 = vpop.f32.mrf.mxu0
        %2787 = vdwg.mxu0
        %v2788 = vadd.f32 %v2482, %v2630
        %v2789 = vadd.f32 %v2483, %v2635
        %v2790 = vadd.f32 %v2484, %v2640
        %v2791 = vadd.f32 %v2485, %v2645
        %v2792 = vadd.f32 %v2486, %v2650
        %v2793 = vadd.f32 %v2487, %v2655
        %v2794 = vadd.f32 %v2488, %v2660
        %v2795 = vadd.f32 %v2489, %v2665
        %v2796 = vadd.f32 %v2490, %v2670
        %v2797 = vadd.f32 %v2491, %v2675
        %v2798 = vadd.f32 %v2492, %v2680
        %v2799 = vadd.f32 %v2493, %v2685
        %v2800 = vadd.f32 %v2494, %v2690
        %v2801 = vadd.f32 %v2495, %v2695
        %v2802 = vadd.f32 %v2496, %v2700
        %v2803 = vadd.f32 %v2497, %v2705
        %v2804 = vadd.f32 %v2498, %v2710
        %v2805 = vadd.f32 %v2499, %v2715
        %v2806 = vadd.f32 %v2500, %v2720
        %v2807 = vadd.f32 %v2501, %v2725
        %v2808 = vadd.f32 %v2502, %v2730
        %v2809 = vadd.f32 %v2503, %v2735
        %v2810 = vadd.f32 %v2504, %v2740
        %v2811 = vadd.f32 %v2505, %v2745
        %v2812 = vadd.f32 %v2506, %v2750
        %v2813 = vadd.f32 %v2507, %v2755
        %v2814 = vadd.f32 %v2508, %v2760
        %v2815 = vadd.f32 %v2509, %v2765
        %v2816 = vadd.f32 %v2510, %v2770
        %v2817 = vadd.f32 %v2511, %v2775
        %v2818 = vadd.f32 %v2512, %v2780
        %v2819 = vadd.f32 %v2513, %v2785
        %s2820 = scalar_lea.vmem [#allocation2], 48
        %v2821 = vld [vmem:[%s2820] sm:$0xff]
        %v2822 = vld [vmem:[%s2820 + $0x8] sm:$0xff]
        %v2823 = vld [vmem:[%s2820 + $0x18] sm:$0xff]
        %v2824 = vld [vmem:[%s2820 + $0x20] sm:$0xff]
        %v2825 = vld [vmem:[%s2820 + $0x30] sm:$0xff]
        %v2826 = vld [vmem:[%s2820 + $0x38] sm:$0xff]
        %v2827 = vld [vmem:[%s2820 + $0x48] sm:$0xff]
        %v2828 = vld [vmem:[%s2820 + $0x50] sm:$0xff]
        %v2829 = vld [vmem:[%s2820 + $0x60] sm:$0xff]
        %v2830 = vld [vmem:[%s2820 + $0x68] sm:$0xff]
        %v2831 = vld [vmem:[%s2820 + $0x78] sm:$0xff]
        %v2832 = vld [vmem:[%s2820 + $0x80] sm:$0xff]
        %v2833 = vld [vmem:[%s2820 + $0x90] sm:$0xff]
        %v2834 = vld [vmem:[%s2820 + $0x98] sm:$0xff]
        %v2835 = vld [vmem:[%s2820 + $0xa8] sm:$0xff]
        %v2836 = vld [vmem:[%s2820 + $0xb0] sm:$0xff]
        %v2837 = vld [vmem:[%s2820 + $0xc0] sm:$0xff]
        %v2838 = vld [vmem:[%s2820 + $0xc8] sm:$0xff]
        %v2839 = vld [vmem:[%s2820 + $0xd8] sm:$0xff]
        %v2840 = vld [vmem:[%s2820 + $0xe0] sm:$0xff]
        %v2841 = vld [vmem:[%s2820 + $0xf0] sm:$0xff]
        %v2842 = vld [vmem:[%s2820 + $0xf8] sm:$0xff]
        %v2843 = vld [vmem:[%s2820 + $0x108] sm:$0xff]
        %v2844 = vld [vmem:[%s2820 + $0x110] sm:$0xff]
        %v2845 = vld [vmem:[%s2820 + $0x120] sm:$0xff]
        %v2846 = vld [vmem:[%s2820 + $0x128] sm:$0xff]
        %v2847 = vld [vmem:[%s2820 + $0x138] sm:$0xff]
        %v2848 = vld [vmem:[%s2820 + $0x140] sm:$0xff]
        %v2849 = vld [vmem:[%s2820 + $0x150] sm:$0xff]
        %v2850 = vld [vmem:[%s2820 + $0x158] sm:$0xff]
        %v2851 = vld [vmem:[%s2820 + $0x168] sm:$0xff]
        %v2852 = vld [vmem:[%s2820 + $0x170] sm:$0xff]
        %s2853 = scalar_lea.vmem [#allocation8], 768
        %v2854 = vld [vmem:[%s2853] sm:$0xff]
        %v2855 = vld [vmem:[%s2853 + $0x8] sm:$0xff]
        %v2856 = vld [vmem:[%s2853 + $0x10] sm:$0xff]
        %v2857 = vld [vmem:[%s2853 + $0x18] sm:$0xff]
        %v2858 = vld [vmem:[%s2853 + $0x20] sm:$0xff]
        %v2859 = vld [vmem:[%s2853 + $0x28] sm:$0xff]
        %v2860 = vld [vmem:[%s2853 + $0x30] sm:$0xff]
        %v2861 = vld [vmem:[%s2853 + $0x38] sm:$0xff]
        %v2862 = vld [vmem:[%s2853 + $0x40] sm:$0xff]
        %v2863 = vld [vmem:[%s2853 + $0x48] sm:$0xff]
        %v2864 = vld [vmem:[%s2853 + $0x50] sm:$0xff]
        %v2865 = vld [vmem:[%s2853 + $0x58] sm:$0xff]
        %v2866 = vld [vmem:[%s2853 + $0x60] sm:$0xff]
        %v2867 = vld [vmem:[%s2853 + $0x68] sm:$0xff]
        %v2868 = vld [vmem:[%s2853 + $0x70] sm:$0xff]
        %v2869 = vld [vmem:[%s2853 + $0x78] sm:$0xff]
        %2870 = vmatprep.subr.mxu0 0.0
        %2871 = vmatpush1.msra.mxu0 %v2869
        %2872 = vmatprep.subr.mxu0 0.0
        %2873 = vmatpush1.msra.mxu0 %v2868
        %2874 = vmatprep.subr.mxu0 0.0
        %2875 = vmatpush1.msra.mxu0 %v2867
        %2876 = vmatprep.subr.mxu0 0.0
        %2877 = vmatpush1.msra.mxu0 %v2866
        %2878 = vmatprep.subr.mxu0 0.0
        %2879 = vmatpush1.msra.mxu0 %v2865
        %2880 = vmatprep.subr.mxu0 0.0
        %2881 = vmatpush1.msra.mxu0 %v2864
        %2882 = vmatprep.subr.mxu0 0.0
        %2883 = vmatpush1.msra.mxu0 %v2863
        %2884 = vmatprep.subr.mxu0 0.0
        %2885 = vmatpush1.msra.mxu0 %v2862
        %2886 = vmatprep.subr.mxu0 0.0
        %2887 = vmatpush1.msra.mxu0 %v2861
        %2888 = vmatprep.subr.mxu0 0.0
        %2889 = vmatpush1.msra.mxu0 %v2860
        %2890 = vmatprep.subr.mxu0 0.0
        %2891 = vmatpush1.msra.mxu0 %v2859
        %2892 = vmatprep.subr.mxu0 0.0
        %2893 = vmatpush1.msra.mxu0 %v2858
        %2894 = vmatprep.subr.mxu0 0.0
        %2895 = vmatpush1.msra.mxu0 %v2857
        %2896 = vmatprep.subr.mxu0 0.0
        %2897 = vmatpush1.msra.mxu0 %v2856
        %2898 = vmatprep.subr.mxu0 0.0
        %2899 = vmatpush1.msra.mxu0 %v2855
        %2900 = vmatprep.subr.mxu0 0.0
        %2901 = vmatpush1.msra.mxu0 %v2854
        %2902 = vmatprep.subr.mxu0 0.0
        %2903 = vmatpush2.msra.mxu0 0.0
        %2904 = vmatprep.subr.mxu0 0.0
        %2905 = vmatpush2.msra.mxu0 0.0
        %2906 = vmatprep.subr.mxu0 0.0
        %2907 = vmatpush2.msra.mxu0 0.0
        %2908 = vmatprep.subr.mxu0 0.0
        %2909 = vmatpush2.msra.mxu0 0.0
        %2910 = vmatprep.subr.mxu0 0.0
        %2911 = vmatpush2.msra.mxu0 0.0
        %2912 = vmatprep.subr.mxu0 0.0
        %2913 = vmatpush2.msra.mxu0 0.0
        %2914 = vmatprep.subr.mxu0 0.0
        %2915 = vmatpush2.msra.mxu0 0.0
        %2916 = vmatprep.subr.mxu0 0.0
        %2917 = vmatpush2.msra.mxu0 0.0
        %2918 = vmatprep.subr.mxu0 0.0
        %2919 = vmatpush2.msra.mxu0 0.0
        %2920 = vmatprep.subr.mxu0 0.0
        %2921 = vmatpush2.msra.mxu0 0.0
        %2922 = vmatprep.subr.mxu0 0.0
        %2923 = vmatpush2.msra.mxu0 0.0
        %2924 = vmatprep.subr.mxu0 0.0
        %2925 = vmatpush2.msra.mxu0 0.0
        %2926 = vmatprep.subr.mxu0 0.0
        %2927 = vmatpush2.msra.mxu0 0.0
        %2928 = vmatprep.subr.mxu0 0.0
        %2929 = vmatpush2.msra.mxu0 0.0
        %2930 = vmatprep.subr.mxu0 0.0
        %2931 = vmatpush2.msra.mxu0 0.0
        %2932 = vmatprep.subr.mxu0 0.0
        %2933 = vmatpush2.msra.mxu0 0.0
        %2934 = vmatprep.mubr.f32.mxu0 0.0
        %2935 = vmatmul.mubr.f32.gmra.mxu0 %v2821
        %v2936 = vpop.f32.mrf.mxu0
        %v2937 = vadd.f32 0.0, %v2936
        %v2938 = vpop.f32.mrf.mxu0
        %2939 = vmatprep.mubr.f32.mxu0 0.0
        %2940 = vmatmul.mubr.f32.gmra.mxu0 %v2822
        %v2941 = vpop.f32.mrf.mxu0
        %v2942 = vadd.f32 0.0, %v2941
        %v2943 = vpop.f32.mrf.mxu0
        %2944 = vmatprep.mubr.f32.mxu0 0.0
        %2945 = vmatmul.mubr.f32.gmra.mxu0 %v2823
        %v2946 = vpop.f32.mrf.mxu0
        %v2947 = vadd.f32 0.0, %v2946
        %v2948 = vpop.f32.mrf.mxu0
        %2949 = vmatprep.mubr.f32.mxu0 0.0
        %2950 = vmatmul.mubr.f32.gmra.mxu0 %v2824
        %v2951 = vpop.f32.mrf.mxu0
        %v2952 = vadd.f32 0.0, %v2951
        %v2953 = vpop.f32.mrf.mxu0
        %2954 = vmatprep.mubr.f32.mxu0 0.0
        %2955 = vmatmul.mubr.f32.gmra.mxu0 %v2825
        %v2956 = vpop.f32.mrf.mxu0
        %v2957 = vadd.f32 0.0, %v2956
        %v2958 = vpop.f32.mrf.mxu0
        %2959 = vmatprep.mubr.f32.mxu0 0.0
        %2960 = vmatmul.mubr.f32.gmra.mxu0 %v2826
        %v2961 = vpop.f32.mrf.mxu0
        %v2962 = vadd.f32 0.0, %v2961
        %v2963 = vpop.f32.mrf.mxu0
        %2964 = vmatprep.mubr.f32.mxu0 0.0
        %2965 = vmatmul.mubr.f32.gmra.mxu0 %v2827
        %v2966 = vpop.f32.mrf.mxu0
        %v2967 = vadd.f32 0.0, %v2966
        %v2968 = vpop.f32.mrf.mxu0
        %2969 = vmatprep.mubr.f32.mxu0 0.0
        %2970 = vmatmul.mubr.f32.gmra.mxu0 %v2828
        %v2971 = vpop.f32.mrf.mxu0
        %v2972 = vadd.f32 0.0, %v2971
        %v2973 = vpop.f32.mrf.mxu0
        %2974 = vmatprep.mubr.f32.mxu0 0.0
        %2975 = vmatmul.mubr.f32.gmra.mxu0 %v2829
        %v2976 = vpop.f32.mrf.mxu0
        %v2977 = vadd.f32 0.0, %v2976
        %v2978 = vpop.f32.mrf.mxu0
        %2979 = vmatprep.mubr.f32.mxu0 0.0
        %2980 = vmatmul.mubr.f32.gmra.mxu0 %v2830
        %v2981 = vpop.f32.mrf.mxu0
        %v2982 = vadd.f32 0.0, %v2981
        %v2983 = vpop.f32.mrf.mxu0
        %2984 = vmatprep.mubr.f32.mxu0 0.0
        %2985 = vmatmul.mubr.f32.gmra.mxu0 %v2831
        %v2986 = vpop.f32.mrf.mxu0
        %v2987 = vadd.f32 0.0, %v2986
        %v2988 = vpop.f32.mrf.mxu0
        %2989 = vmatprep.mubr.f32.mxu0 0.0
        %2990 = vmatmul.mubr.f32.gmra.mxu0 %v2832
        %v2991 = vpop.f32.mrf.mxu0
        %v2992 = vadd.f32 0.0, %v2991
        %v2993 = vpop.f32.mrf.mxu0
        %2994 = vmatprep.mubr.f32.mxu0 0.0
        %2995 = vmatmul.mubr.f32.gmra.mxu0 %v2833
        %v2996 = vpop.f32.mrf.mxu0
        %v2997 = vadd.f32 0.0, %v2996
        %v2998 = vpop.f32.mrf.mxu0
        %2999 = vmatprep.mubr.f32.mxu0 0.0
        %3000 = vmatmul.mubr.f32.gmra.mxu0 %v2834
        %v3001 = vpop.f32.mrf.mxu0
        %v3002 = vadd.f32 0.0, %v3001
        %v3003 = vpop.f32.mrf.mxu0
        %3004 = vmatprep.mubr.f32.mxu0 0.0
        %3005 = vmatmul.mubr.f32.gmra.mxu0 %v2835
        %v3006 = vpop.f32.mrf.mxu0
        %v3007 = vadd.f32 0.0, %v3006
        %v3008 = vpop.f32.mrf.mxu0
        %3009 = vmatprep.mubr.f32.mxu0 0.0
        %3010 = vmatmul.mubr.f32.gmra.mxu0 %v2836
        %v3011 = vpop.f32.mrf.mxu0
        %v3012 = vadd.f32 0.0, %v3011
        %v3013 = vpop.f32.mrf.mxu0
        %3014 = vmatprep.mubr.f32.mxu0 0.0
        %3015 = vmatmul.mubr.f32.gmra.mxu0 %v2837
        %v3016 = vpop.f32.mrf.mxu0
        %v3017 = vadd.f32 0.0, %v3016
        %v3018 = vpop.f32.mrf.mxu0
        %3019 = vmatprep.mubr.f32.mxu0 0.0
        %3020 = vmatmul.mubr.f32.gmra.mxu0 %v2838
        %v3021 = vpop.f32.mrf.mxu0
        %v3022 = vadd.f32 0.0, %v3021
        %v3023 = vpop.f32.mrf.mxu0
        %3024 = vmatprep.mubr.f32.mxu0 0.0
        %3025 = vmatmul.mubr.f32.gmra.mxu0 %v2839
        %v3026 = vpop.f32.mrf.mxu0
        %v3027 = vadd.f32 0.0, %v3026
        %v3028 = vpop.f32.mrf.mxu0
        %3029 = vmatprep.mubr.f32.mxu0 0.0
        %3030 = vmatmul.mubr.f32.gmra.mxu0 %v2840
        %v3031 = vpop.f32.mrf.mxu0
        %v3032 = vadd.f32 0.0, %v3031
        %v3033 = vpop.f32.mrf.mxu0
        %3034 = vmatprep.mubr.f32.mxu0 0.0
        %3035 = vmatmul.mubr.f32.gmra.mxu0 %v2841
        %v3036 = vpop.f32.mrf.mxu0
        %v3037 = vadd.f32 0.0, %v3036
        %v3038 = vpop.f32.mrf.mxu0
        %3039 = vmatprep.mubr.f32.mxu0 0.0
        %3040 = vmatmul.mubr.f32.gmra.mxu0 %v2842
        %v3041 = vpop.f32.mrf.mxu0
        %v3042 = vadd.f32 0.0, %v3041
        %v3043 = vpop.f32.mrf.mxu0
        %3044 = vmatprep.mubr.f32.mxu0 0.0
        %3045 = vmatmul.mubr.f32.gmra.mxu0 %v2843
        %v3046 = vpop.f32.mrf.mxu0
        %v3047 = vadd.f32 0.0, %v3046
        %v3048 = vpop.f32.mrf.mxu0
        %3049 = vmatprep.mubr.f32.mxu0 0.0
        %3050 = vmatmul.mubr.f32.gmra.mxu0 %v2844
        %v3051 = vpop.f32.mrf.mxu0
        %v3052 = vadd.f32 0.0, %v3051
        %v3053 = vpop.f32.mrf.mxu0
        %3054 = vmatprep.mubr.f32.mxu0 0.0
        %3055 = vmatmul.mubr.f32.gmra.mxu0 %v2845
        %v3056 = vpop.f32.mrf.mxu0
        %v3057 = vadd.f32 0.0, %v3056
        %v3058 = vpop.f32.mrf.mxu0
        %3059 = vmatprep.mubr.f32.mxu0 0.0
        %3060 = vmatmul.mubr.f32.gmra.mxu0 %v2846
        %v3061 = vpop.f32.mrf.mxu0
        %v3062 = vadd.f32 0.0, %v3061
        %v3063 = vpop.f32.mrf.mxu0
        %3064 = vmatprep.mubr.f32.mxu0 0.0
        %3065 = vmatmul.mubr.f32.gmra.mxu0 %v2847
        %v3066 = vpop.f32.mrf.mxu0
        %v3067 = vadd.f32 0.0, %v3066
        %v3068 = vpop.f32.mrf.mxu0
        %3069 = vmatprep.mubr.f32.mxu0 0.0
        %3070 = vmatmul.mubr.f32.gmra.mxu0 %v2848
        %v3071 = vpop.f32.mrf.mxu0
        %v3072 = vadd.f32 0.0, %v3071
        %v3073 = vpop.f32.mrf.mxu0
        %3074 = vmatprep.mubr.f32.mxu0 0.0
        %3075 = vmatmul.mubr.f32.gmra.mxu0 %v2849
        %v3076 = vpop.f32.mrf.mxu0
        %v3077 = vadd.f32 0.0, %v3076
        %v3078 = vpop.f32.mrf.mxu0
        %3079 = vmatprep.mubr.f32.mxu0 0.0
        %3080 = vmatmul.mubr.f32.gmra.mxu0 %v2850
        %v3081 = vpop.f32.mrf.mxu0
        %v3082 = vadd.f32 0.0, %v3081
        %v3083 = vpop.f32.mrf.mxu0
        %3084 = vmatprep.mubr.f32.mxu0 0.0
        %3085 = vmatmul.mubr.f32.gmra.mxu0 %v2851
        %v3086 = vpop.f32.mrf.mxu0
        %v3087 = vadd.f32 0.0, %v3086
        %v3088 = vpop.f32.mrf.mxu0
        %3089 = vmatprep.mubr.f32.mxu0 0.0
        %3090 = vmatmul.mubr.f32.gmra.mxu0 %v2852
        %v3091 = vpop.f32.mrf.mxu0
        %v3092 = vadd.f32 0.0, %v3091
        %v3093 = vpop.f32.mrf.mxu0
        %3094 = vdwg.mxu0
        %v3095 = vadd.f32 %v2788, %v2937
        %v3096 = vadd.f32 %v2789, %v2942
        %v3097 = vadd.f32 %v2790, %v2947
        %v3098 = vadd.f32 %v2791, %v2952
        %v3099 = vadd.f32 %v2792, %v2957
        %v3100 = vadd.f32 %v2793, %v2962
        %v3101 = vadd.f32 %v2794, %v2967
        %v3102 = vadd.f32 %v2795, %v2972
        %v3103 = vadd.f32 %v2796, %v2977
        %v3104 = vadd.f32 %v2797, %v2982
        %v3105 = vadd.f32 %v2798, %v2987
        %v3106 = vadd.f32 %v2799, %v2992
        %v3107 = vadd.f32 %v2800, %v2997
        %v3108 = vadd.f32 %v2801, %v3002
        %v3109 = vadd.f32 %v2802, %v3007
        %v3110 = vadd.f32 %v2803, %v3012
        %v3111 = vadd.f32 %v2804, %v3017
        %v3112 = vadd.f32 %v2805, %v3022
        %v3113 = vadd.f32 %v2806, %v3027
        %v3114 = vadd.f32 %v2807, %v3032
        %v3115 = vadd.f32 %v2808, %v3037
        %v3116 = vadd.f32 %v2809, %v3042
        %v3117 = vadd.f32 %v2810, %v3047
        %v3118 = vadd.f32 %v2811, %v3052
        %v3119 = vadd.f32 %v2812, %v3057
        %v3120 = vadd.f32 %v2813, %v3062
        %v3121 = vadd.f32 %v2814, %v3067
        %v3122 = vadd.f32 %v2815, %v3072
        %v3123 = vadd.f32 %v2816, %v3077
        %v3124 = vadd.f32 %v2817, %v3082
        %v3125 = vadd.f32 %v2818, %v3087
        %v3126 = vadd.f32 %v2819, %v3092
        %v3127 = vld [vmem:[%s2820 + $0x1] sm:$0xff]
        %v3128 = vld [vmem:[%s2820 + $0x9] sm:$0xff]
        %v3129 = vld [vmem:[%s2820 + $0x19] sm:$0xff]
        %v3130 = vld [vmem:[%s2820 + $0x21] sm:$0xff]
        %v3131 = vld [vmem:[%s2820 + $0x31] sm:$0xff]
        %v3132 = vld [vmem:[%s2820 + $0x39] sm:$0xff]
        %v3133 = vld [vmem:[%s2820 + $0x49] sm:$0xff]
        %v3134 = vld [vmem:[%s2820 + $0x51] sm:$0xff]
        %v3135 = vld [vmem:[%s2820 + $0x61] sm:$0xff]
        %v3136 = vld [vmem:[%s2820 + $0x69] sm:$0xff]
        %v3137 = vld [vmem:[%s2820 + $0x79] sm:$0xff]
        %v3138 = vld [vmem:[%s2820 + $0x81] sm:$0xff]
        %v3139 = vld [vmem:[%s2820 + $0x91] sm:$0xff]
        %v3140 = vld [vmem:[%s2820 + $0x99] sm:$0xff]
        %v3141 = vld [vmem:[%s2820 + $0xa9] sm:$0xff]
        %v3142 = vld [vmem:[%s2820 + $0xb1] sm:$0xff]
        %v3143 = vld [vmem:[%s2820 + $0xc1] sm:$0xff]
        %v3144 = vld [vmem:[%s2820 + $0xc9] sm:$0xff]
        %v3145 = vld [vmem:[%s2820 + $0xd9] sm:$0xff]
        %v3146 = vld [vmem:[%s2820 + $0xe1] sm:$0xff]
        %v3147 = vld [vmem:[%s2820 + $0xf1] sm:$0xff]
        %v3148 = vld [vmem:[%s2820 + $0xf9] sm:$0xff]
        %v3149 = vld [vmem:[%s2820 + $0x109] sm:$0xff]
        %v3150 = vld [vmem:[%s2820 + $0x111] sm:$0xff]
        %v3151 = vld [vmem:[%s2820 + $0x121] sm:$0xff]
        %v3152 = vld [vmem:[%s2820 + $0x129] sm:$0xff]
        %v3153 = vld [vmem:[%s2820 + $0x139] sm:$0xff]
        %v3154 = vld [vmem:[%s2820 + $0x141] sm:$0xff]
        %v3155 = vld [vmem:[%s2820 + $0x151] sm:$0xff]
        %v3156 = vld [vmem:[%s2820 + $0x159] sm:$0xff]
        %v3157 = vld [vmem:[%s2820 + $0x169] sm:$0xff]
        %v3158 = vld [vmem:[%s2820 + $0x171] sm:$0xff]
        %s3159 = scalar_lea.vmem [#allocation8], 896
        %v3160 = vld [vmem:[%s3159] sm:$0xff]
        %v3161 = vld [vmem:[%s3159 + $0x8] sm:$0xff]
        %v3162 = vld [vmem:[%s3159 + $0x10] sm:$0xff]
        %v3163 = vld [vmem:[%s3159 + $0x18] sm:$0xff]
        %v3164 = vld [vmem:[%s3159 + $0x20] sm:$0xff]
        %v3165 = vld [vmem:[%s3159 + $0x28] sm:$0xff]
        %v3166 = vld [vmem:[%s3159 + $0x30] sm:$0xff]
        %v3167 = vld [vmem:[%s3159 + $0x38] sm:$0xff]
        %v3168 = vld [vmem:[%s3159 + $0x40] sm:$0xff]
        %v3169 = vld [vmem:[%s3159 + $0x48] sm:$0xff]
        %v3170 = vld [vmem:[%s3159 + $0x50] sm:$0xff]
        %v3171 = vld [vmem:[%s3159 + $0x58] sm:$0xff]
        %v3172 = vld [vmem:[%s3159 + $0x60] sm:$0xff]
        %v3173 = vld [vmem:[%s3159 + $0x68] sm:$0xff]
        %v3174 = vld [vmem:[%s3159 + $0x70] sm:$0xff]
        %v3175 = vld [vmem:[%s3159 + $0x78] sm:$0xff]
        %3176 = vmatprep.subr.mxu0 0.0
        %3177 = vmatpush1.msra.mxu0 %v3175
        %3178 = vmatprep.subr.mxu0 0.0
        %3179 = vmatpush1.msra.mxu0 %v3174
        %3180 = vmatprep.subr.mxu0 0.0
        %3181 = vmatpush1.msra.mxu0 %v3173
        %3182 = vmatprep.subr.mxu0 0.0
        %3183 = vmatpush1.msra.mxu0 %v3172
        %3184 = vmatprep.subr.mxu0 0.0
        %3185 = vmatpush1.msra.mxu0 %v3171
        %3186 = vmatprep.subr.mxu0 0.0
        %3187 = vmatpush1.msra.mxu0 %v3170
        %3188 = vmatprep.subr.mxu0 0.0
        %3189 = vmatpush1.msra.mxu0 %v3169
        %3190 = vmatprep.subr.mxu0 0.0
        %3191 = vmatpush1.msra.mxu0 %v3168
        %3192 = vmatprep.subr.mxu0 0.0
        %3193 = vmatpush1.msra.mxu0 %v3167
        %3194 = vmatprep.subr.mxu0 0.0
        %3195 = vmatpush1.msra.mxu0 %v3166
        %3196 = vmatprep.subr.mxu0 0.0
        %3197 = vmatpush1.msra.mxu0 %v3165
        %3198 = vmatprep.subr.mxu0 0.0
        %3199 = vmatpush1.msra.mxu0 %v3164
        %3200 = vmatprep.subr.mxu0 0.0
        %3201 = vmatpush1.msra.mxu0 %v3163
        %3202 = vmatprep.subr.mxu0 0.0
        %3203 = vmatpush1.msra.mxu0 %v3162
        %3204 = vmatprep.subr.mxu0 0.0
        %3205 = vmatpush1.msra.mxu0 %v3161
        %3206 = vmatprep.subr.mxu0 0.0
        %3207 = vmatpush1.msra.mxu0 %v3160
        %3208 = vmatprep.subr.mxu0 0.0
        %3209 = vmatpush2.msra.mxu0 0.0
        %3210 = vmatprep.subr.mxu0 0.0
        %3211 = vmatpush2.msra.mxu0 0.0
        %3212 = vmatprep.subr.mxu0 0.0
        %3213 = vmatpush2.msra.mxu0 0.0
        %3214 = vmatprep.subr.mxu0 0.0
        %3215 = vmatpush2.msra.mxu0 0.0
        %3216 = vmatprep.subr.mxu0 0.0
        %3217 = vmatpush2.msra.mxu0 0.0
        %3218 = vmatprep.subr.mxu0 0.0
        %3219 = vmatpush2.msra.mxu0 0.0
        %3220 = vmatprep.subr.mxu0 0.0
        %3221 = vmatpush2.msra.mxu0 0.0
        %3222 = vmatprep.subr.mxu0 0.0
        %3223 = vmatpush2.msra.mxu0 0.0
        %3224 = vmatprep.subr.mxu0 0.0
        %3225 = vmatpush2.msra.mxu0 0.0
        %3226 = vmatprep.subr.mxu0 0.0
        %3227 = vmatpush2.msra.mxu0 0.0
        %3228 = vmatprep.subr.mxu0 0.0
        %3229 = vmatpush2.msra.mxu0 0.0
        %3230 = vmatprep.subr.mxu0 0.0
        %3231 = vmatpush2.msra.mxu0 0.0
        %3232 = vmatprep.subr.mxu0 0.0
        %3233 = vmatpush2.msra.mxu0 0.0
        %3234 = vmatprep.subr.mxu0 0.0
        %3235 = vmatpush2.msra.mxu0 0.0
        %3236 = vmatprep.subr.mxu0 0.0
        %3237 = vmatpush2.msra.mxu0 0.0
        %3238 = vmatprep.subr.mxu0 0.0
        %3239 = vmatpush2.msra.mxu0 0.0
        %3240 = vmatprep.mubr.f32.mxu0 0.0
        %3241 = vmatmul.mubr.f32.gmra.mxu0 %v3127
        %v3242 = vpop.f32.mrf.mxu0
        %v3243 = vadd.f32 0.0, %v3242
        %v3244 = vpop.f32.mrf.mxu0
        %3245 = vmatprep.mubr.f32.mxu0 0.0
        %3246 = vmatmul.mubr.f32.gmra.mxu0 %v3128
        %v3247 = vpop.f32.mrf.mxu0
        %v3248 = vadd.f32 0.0, %v3247
        %v3249 = vpop.f32.mrf.mxu0
        %3250 = vmatprep.mubr.f32.mxu0 0.0
        %3251 = vmatmul.mubr.f32.gmra.mxu0 %v3129
        %v3252 = vpop.f32.mrf.mxu0
        %v3253 = vadd.f32 0.0, %v3252
        %v3254 = vpop.f32.mrf.mxu0
        %3255 = vmatprep.mubr.f32.mxu0 0.0
        %3256 = vmatmul.mubr.f32.gmra.mxu0 %v3130
        %v3257 = vpop.f32.mrf.mxu0
        %v3258 = vadd.f32 0.0, %v3257
        %v3259 = vpop.f32.mrf.mxu0
        %3260 = vmatprep.mubr.f32.mxu0 0.0
        %3261 = vmatmul.mubr.f32.gmra.mxu0 %v3131
        %v3262 = vpop.f32.mrf.mxu0
        %v3263 = vadd.f32 0.0, %v3262
        %v3264 = vpop.f32.mrf.mxu0
        %3265 = vmatprep.mubr.f32.mxu0 0.0
        %3266 = vmatmul.mubr.f32.gmra.mxu0 %v3132
        %v3267 = vpop.f32.mrf.mxu0
        %v3268 = vadd.f32 0.0, %v3267
        %v3269 = vpop.f32.mrf.mxu0
        %3270 = vmatprep.mubr.f32.mxu0 0.0
        %3271 = vmatmul.mubr.f32.gmra.mxu0 %v3133
        %v3272 = vpop.f32.mrf.mxu0
        %v3273 = vadd.f32 0.0, %v3272
        %v3274 = vpop.f32.mrf.mxu0
        %3275 = vmatprep.mubr.f32.mxu0 0.0
        %3276 = vmatmul.mubr.f32.gmra.mxu0 %v3134
        %v3277 = vpop.f32.mrf.mxu0
        %v3278 = vadd.f32 0.0, %v3277
        %v3279 = vpop.f32.mrf.mxu0
        %3280 = vmatprep.mubr.f32.mxu0 0.0
        %3281 = vmatmul.mubr.f32.gmra.mxu0 %v3135
        %v3282 = vpop.f32.mrf.mxu0
        %v3283 = vadd.f32 0.0, %v3282
        %v3284 = vpop.f32.mrf.mxu0
        %3285 = vmatprep.mubr.f32.mxu0 0.0
        %3286 = vmatmul.mubr.f32.gmra.mxu0 %v3136
        %v3287 = vpop.f32.mrf.mxu0
        %v3288 = vadd.f32 0.0, %v3287
        %v3289 = vpop.f32.mrf.mxu0
        %3290 = vmatprep.mubr.f32.mxu0 0.0
        %3291 = vmatmul.mubr.f32.gmra.mxu0 %v3137
        %v3292 = vpop.f32.mrf.mxu0
        %v3293 = vadd.f32 0.0, %v3292
        %v3294 = vpop.f32.mrf.mxu0
        %3295 = vmatprep.mubr.f32.mxu0 0.0
        %3296 = vmatmul.mubr.f32.gmra.mxu0 %v3138
        %v3297 = vpop.f32.mrf.mxu0
        %v3298 = vadd.f32 0.0, %v3297
        %v3299 = vpop.f32.mrf.mxu0
        %3300 = vmatprep.mubr.f32.mxu0 0.0
        %3301 = vmatmul.mubr.f32.gmra.mxu0 %v3139
        %v3302 = vpop.f32.mrf.mxu0
        %v3303 = vadd.f32 0.0, %v3302
        %v3304 = vpop.f32.mrf.mxu0
        %3305 = vmatprep.mubr.f32.mxu0 0.0
        %3306 = vmatmul.mubr.f32.gmra.mxu0 %v3140
        %v3307 = vpop.f32.mrf.mxu0
        %v3308 = vadd.f32 0.0, %v3307
        %v3309 = vpop.f32.mrf.mxu0
        %3310 = vmatprep.mubr.f32.mxu0 0.0
        %3311 = vmatmul.mubr.f32.gmra.mxu0 %v3141
        %v3312 = vpop.f32.mrf.mxu0
        %v3313 = vadd.f32 0.0, %v3312
        %v3314 = vpop.f32.mrf.mxu0
        %3315 = vmatprep.mubr.f32.mxu0 0.0
        %3316 = vmatmul.mubr.f32.gmra.mxu0 %v3142
        %v3317 = vpop.f32.mrf.mxu0
        %v3318 = vadd.f32 0.0, %v3317
        %v3319 = vpop.f32.mrf.mxu0
        %3320 = vmatprep.mubr.f32.mxu0 0.0
        %3321 = vmatmul.mubr.f32.gmra.mxu0 %v3143
        %v3322 = vpop.f32.mrf.mxu0
        %v3323 = vadd.f32 0.0, %v3322
        %v3324 = vpop.f32.mrf.mxu0
        %3325 = vmatprep.mubr.f32.mxu0 0.0
        %3326 = vmatmul.mubr.f32.gmra.mxu0 %v3144
        %v3327 = vpop.f32.mrf.mxu0
        %v3328 = vadd.f32 0.0, %v3327
        %v3329 = vpop.f32.mrf.mxu0
        %3330 = vmatprep.mubr.f32.mxu0 0.0
        %3331 = vmatmul.mubr.f32.gmra.mxu0 %v3145
        %v3332 = vpop.f32.mrf.mxu0
        %v3333 = vadd.f32 0.0, %v3332
        %v3334 = vpop.f32.mrf.mxu0
        %3335 = vmatprep.mubr.f32.mxu0 0.0
        %3336 = vmatmul.mubr.f32.gmra.mxu0 %v3146
        %v3337 = vpop.f32.mrf.mxu0
        %v3338 = vadd.f32 0.0, %v3337
        %v3339 = vpop.f32.mrf.mxu0
        %3340 = vmatprep.mubr.f32.mxu0 0.0
        %3341 = vmatmul.mubr.f32.gmra.mxu0 %v3147
        %v3342 = vpop.f32.mrf.mxu0
        %v3343 = vadd.f32 0.0, %v3342
        %v3344 = vpop.f32.mrf.mxu0
        %3345 = vmatprep.mubr.f32.mxu0 0.0
        %3346 = vmatmul.mubr.f32.gmra.mxu0 %v3148
        %v3347 = vpop.f32.mrf.mxu0
        %v3348 = vadd.f32 0.0, %v3347
        %v3349 = vpop.f32.mrf.mxu0
        %3350 = vmatprep.mubr.f32.mxu0 0.0
        %3351 = vmatmul.mubr.f32.gmra.mxu0 %v3149
        %v3352 = vpop.f32.mrf.mxu0
        %v3353 = vadd.f32 0.0, %v3352
        %v3354 = vpop.f32.mrf.mxu0
        %3355 = vmatprep.mubr.f32.mxu0 0.0
        %3356 = vmatmul.mubr.f32.gmra.mxu0 %v3150
        %v3357 = vpop.f32.mrf.mxu0
        %v3358 = vadd.f32 0.0, %v3357
        %v3359 = vpop.f32.mrf.mxu0
        %3360 = vmatprep.mubr.f32.mxu0 0.0
        %3361 = vmatmul.mubr.f32.gmra.mxu0 %v3151
        %v3362 = vpop.f32.mrf.mxu0
        %v3363 = vadd.f32 0.0, %v3362
        %v3364 = vpop.f32.mrf.mxu0
        %3365 = vmatprep.mubr.f32.mxu0 0.0
        %3366 = vmatmul.mubr.f32.gmra.mxu0 %v3152
        %v3367 = vpop.f32.mrf.mxu0
        %v3368 = vadd.f32 0.0, %v3367
        %v3369 = vpop.f32.mrf.mxu0
        %3370 = vmatprep.mubr.f32.mxu0 0.0
        %3371 = vmatmul.mubr.f32.gmra.mxu0 %v3153
        %v3372 = vpop.f32.mrf.mxu0
        %v3373 = vadd.f32 0.0, %v3372
        %v3374 = vpop.f32.mrf.mxu0
        %3375 = vmatprep.mubr.f32.mxu0 0.0
        %3376 = vmatmul.mubr.f32.gmra.mxu0 %v3154
        %v3377 = vpop.f32.mrf.mxu0
        %v3378 = vadd.f32 0.0, %v3377
        %v3379 = vpop.f32.mrf.mxu0
        %3380 = vmatprep.mubr.f32.mxu0 0.0
        %3381 = vmatmul.mubr.f32.gmra.mxu0 %v3155
        %v3382 = vpop.f32.mrf.mxu0
        %v3383 = vadd.f32 0.0, %v3382
        %v3384 = vpop.f32.mrf.mxu0
        %3385 = vmatprep.mubr.f32.mxu0 0.0
        %3386 = vmatmul.mubr.f32.gmra.mxu0 %v3156
        %v3387 = vpop.f32.mrf.mxu0
        %v3388 = vadd.f32 0.0, %v3387
        %v3389 = vpop.f32.mrf.mxu0
        %3390 = vmatprep.mubr.f32.mxu0 0.0
        %3391 = vmatmul.mubr.f32.gmra.mxu0 %v3157
        %v3392 = vpop.f32.mrf.mxu0
        %v3393 = vadd.f32 0.0, %v3392
        %v3394 = vpop.f32.mrf.mxu0
        %3395 = vmatprep.mubr.f32.mxu0 0.0
        %3396 = vmatmul.mubr.f32.gmra.mxu0 %v3158
        %v3397 = vpop.f32.mrf.mxu0
        %v3398 = vadd.f32 0.0, %v3397
        %v3399 = vpop.f32.mrf.mxu0
        %3400 = vdwg.mxu0
        %v3401 = vadd.f32 %v3095, %v3243
        %v3402 = vadd.f32 %v3096, %v3248
        %v3403 = vadd.f32 %v3097, %v3253
        %v3404 = vadd.f32 %v3098, %v3258
        %v3405 = vadd.f32 %v3099, %v3263
        %v3406 = vadd.f32 %v3100, %v3268
        %v3407 = vadd.f32 %v3101, %v3273
        %v3408 = vadd.f32 %v3102, %v3278
        %v3409 = vadd.f32 %v3103, %v3283
        %v3410 = vadd.f32 %v3104, %v3288
        %v3411 = vadd.f32 %v3105, %v3293
        %v3412 = vadd.f32 %v3106, %v3298
        %v3413 = vadd.f32 %v3107, %v3303
        %v3414 = vadd.f32 %v3108, %v3308
        %v3415 = vadd.f32 %v3109, %v3313
        %v3416 = vadd.f32 %v3110, %v3318
        %v3417 = vadd.f32 %v3111, %v3323
        %v3418 = vadd.f32 %v3112, %v3328
        %v3419 = vadd.f32 %v3113, %v3333
        %v3420 = vadd.f32 %v3114, %v3338
        %v3421 = vadd.f32 %v3115, %v3343
        %v3422 = vadd.f32 %v3116, %v3348
        %v3423 = vadd.f32 %v3117, %v3353
        %v3424 = vadd.f32 %v3118, %v3358
        %v3425 = vadd.f32 %v3119, %v3363
        %v3426 = vadd.f32 %v3120, %v3368
        %v3427 = vadd.f32 %v3121, %v3373
        %v3428 = vadd.f32 %v3122, %v3378
        %v3429 = vadd.f32 %v3123, %v3383
        %v3430 = vadd.f32 %v3124, %v3388
        %v3431 = vadd.f32 %v3125, %v3393
        %v3432 = vadd.f32 %v3126, %v3398
        %v3433 = vld [vmem:[%s2820 + $0x2] sm:$0xff]
        %v3434 = vld [vmem:[%s2820 + $0xa] sm:$0xff]
        %v3435 = vld [vmem:[%s2820 + $0x1a] sm:$0xff]
        %v3436 = vld [vmem:[%s2820 + $0x22] sm:$0xff]
        %v3437 = vld [vmem:[%s2820 + $0x32] sm:$0xff]
        %v3438 = vld [vmem:[%s2820 + $0x3a] sm:$0xff]
        %v3439 = vld [vmem:[%s2820 + $0x4a] sm:$0xff]
        %v3440 = vld [vmem:[%s2820 + $0x52] sm:$0xff]
        %v3441 = vld [vmem:[%s2820 + $0x62] sm:$0xff]
        %v3442 = vld [vmem:[%s2820 + $0x6a] sm:$0xff]
        %v3443 = vld [vmem:[%s2820 + $0x7a] sm:$0xff]
        %v3444 = vld [vmem:[%s2820 + $0x82] sm:$0xff]
        %v3445 = vld [vmem:[%s2820 + $0x92] sm:$0xff]
        %v3446 = vld [vmem:[%s2820 + $0x9a] sm:$0xff]
        %v3447 = vld [vmem:[%s2820 + $0xaa] sm:$0xff]
        %v3448 = vld [vmem:[%s2820 + $0xb2] sm:$0xff]
        %v3449 = vld [vmem:[%s2820 + $0xc2] sm:$0xff]
        %v3450 = vld [vmem:[%s2820 + $0xca] sm:$0xff]
        %v3451 = vld [vmem:[%s2820 + $0xda] sm:$0xff]
        %v3452 = vld [vmem:[%s2820 + $0xe2] sm:$0xff]
        %v3453 = vld [vmem:[%s2820 + $0xf2] sm:$0xff]
        %v3454 = vld [vmem:[%s2820 + $0xfa] sm:$0xff]
        %v3455 = vld [vmem:[%s2820 + $0x10a] sm:$0xff]
        %v3456 = vld [vmem:[%s2820 + $0x112] sm:$0xff]
        %v3457 = vld [vmem:[%s2820 + $0x122] sm:$0xff]
        %v3458 = vld [vmem:[%s2820 + $0x12a] sm:$0xff]
        %v3459 = vld [vmem:[%s2820 + $0x13a] sm:$0xff]
        %v3460 = vld [vmem:[%s2820 + $0x142] sm:$0xff]
        %v3461 = vld [vmem:[%s2820 + $0x152] sm:$0xff]
        %v3462 = vld [vmem:[%s2820 + $0x15a] sm:$0xff]
        %v3463 = vld [vmem:[%s2820 + $0x16a] sm:$0xff]
        %v3464 = vld [vmem:[%s2820 + $0x172] sm:$0xff]
        %s3465 = scalar_lea.vmem [#allocation8], 1024
        %v3466 = vld [vmem:[%s3465] sm:$0xff]
        %v3467 = vld [vmem:[%s3465 + $0x8] sm:$0xff]
        %v3468 = vld [vmem:[%s3465 + $0x10] sm:$0xff]
        %v3469 = vld [vmem:[%s3465 + $0x18] sm:$0xff]
        %v3470 = vld [vmem:[%s3465 + $0x20] sm:$0xff]
        %v3471 = vld [vmem:[%s3465 + $0x28] sm:$0xff]
        %v3472 = vld [vmem:[%s3465 + $0x30] sm:$0xff]
        %v3473 = vld [vmem:[%s3465 + $0x38] sm:$0xff]
        %v3474 = vld [vmem:[%s3465 + $0x40] sm:$0xff]
        %v3475 = vld [vmem:[%s3465 + $0x48] sm:$0xff]
        %v3476 = vld [vmem:[%s3465 + $0x50] sm:$0xff]
        %v3477 = vld [vmem:[%s3465 + $0x58] sm:$0xff]
        %v3478 = vld [vmem:[%s3465 + $0x60] sm:$0xff]
        %v3479 = vld [vmem:[%s3465 + $0x68] sm:$0xff]
        %v3480 = vld [vmem:[%s3465 + $0x70] sm:$0xff]
        %v3481 = vld [vmem:[%s3465 + $0x78] sm:$0xff]
        %3482 = vmatprep.subr.mxu0 0.0
        %3483 = vmatpush1.msra.mxu0 %v3481
        %3484 = vmatprep.subr.mxu0 0.0
        %3485 = vmatpush1.msra.mxu0 %v3480
        %3486 = vmatprep.subr.mxu0 0.0
        %3487 = vmatpush1.msra.mxu0 %v3479
        %3488 = vmatprep.subr.mxu0 0.0
        %3489 = vmatpush1.msra.mxu0 %v3478
        %3490 = vmatprep.subr.mxu0 0.0
        %3491 = vmatpush1.msra.mxu0 %v3477
        %3492 = vmatprep.subr.mxu0 0.0
        %3493 = vmatpush1.msra.mxu0 %v3476
        %3494 = vmatprep.subr.mxu0 0.0
        %3495 = vmatpush1.msra.mxu0 %v3475
        %3496 = vmatprep.subr.mxu0 0.0
        %3497 = vmatpush1.msra.mxu0 %v3474
        %3498 = vmatprep.subr.mxu0 0.0
        %3499 = vmatpush1.msra.mxu0 %v3473
        %3500 = vmatprep.subr.mxu0 0.0
        %3501 = vmatpush1.msra.mxu0 %v3472
        %3502 = vmatprep.subr.mxu0 0.0
        %3503 = vmatpush1.msra.mxu0 %v3471
        %3504 = vmatprep.subr.mxu0 0.0
        %3505 = vmatpush1.msra.mxu0 %v3470
        %3506 = vmatprep.subr.mxu0 0.0
        %3507 = vmatpush1.msra.mxu0 %v3469
        %3508 = vmatprep.subr.mxu0 0.0
        %3509 = vmatpush1.msra.mxu0 %v3468
        %3510 = vmatprep.subr.mxu0 0.0
        %3511 = vmatpush1.msra.mxu0 %v3467
        %3512 = vmatprep.subr.mxu0 0.0
        %3513 = vmatpush1.msra.mxu0 %v3466
        %3514 = vmatprep.subr.mxu0 0.0
        %3515 = vmatpush2.msra.mxu0 0.0
        %3516 = vmatprep.subr.mxu0 0.0
        %3517 = vmatpush2.msra.mxu0 0.0
        %3518 = vmatprep.subr.mxu0 0.0
        %3519 = vmatpush2.msra.mxu0 0.0
        %3520 = vmatprep.subr.mxu0 0.0
        %3521 = vmatpush2.msra.mxu0 0.0
        %3522 = vmatprep.subr.mxu0 0.0
        %3523 = vmatpush2.msra.mxu0 0.0
        %3524 = vmatprep.subr.mxu0 0.0
        %3525 = vmatpush2.msra.mxu0 0.0
        %3526 = vmatprep.subr.mxu0 0.0
        %3527 = vmatpush2.msra.mxu0 0.0
        %3528 = vmatprep.subr.mxu0 0.0
        %3529 = vmatpush2.msra.mxu0 0.0
        %3530 = vmatprep.subr.mxu0 0.0
        %3531 = vmatpush2.msra.mxu0 0.0
        %3532 = vmatprep.subr.mxu0 0.0
        %3533 = vmatpush2.msra.mxu0 0.0
        %3534 = vmatprep.subr.mxu0 0.0
        %3535 = vmatpush2.msra.mxu0 0.0
        %3536 = vmatprep.subr.mxu0 0.0
        %3537 = vmatpush2.msra.mxu0 0.0
        %3538 = vmatprep.subr.mxu0 0.0
        %3539 = vmatpush2.msra.mxu0 0.0
        %3540 = vmatprep.subr.mxu0 0.0
        %3541 = vmatpush2.msra.mxu0 0.0
        %3542 = vmatprep.subr.mxu0 0.0
        %3543 = vmatpush2.msra.mxu0 0.0
        %3544 = vmatprep.subr.mxu0 0.0
        %3545 = vmatpush2.msra.mxu0 0.0
        %3546 = vmatprep.mubr.f32.mxu0 0.0
        %3547 = vmatmul.mubr.f32.gmra.mxu0 %v3433
        %v3548 = vpop.f32.mrf.mxu0
        %v3549 = vadd.f32 0.0, %v3548
        %v3550 = vpop.f32.mrf.mxu0
        %3551 = vmatprep.mubr.f32.mxu0 0.0
        %3552 = vmatmul.mubr.f32.gmra.mxu0 %v3434
        %v3553 = vpop.f32.mrf.mxu0
        %v3554 = vadd.f32 0.0, %v3553
        %v3555 = vpop.f32.mrf.mxu0
        %3556 = vmatprep.mubr.f32.mxu0 0.0
        %3557 = vmatmul.mubr.f32.gmra.mxu0 %v3435
        %v3558 = vpop.f32.mrf.mxu0
        %v3559 = vadd.f32 0.0, %v3558
        %v3560 = vpop.f32.mrf.mxu0
        %3561 = vmatprep.mubr.f32.mxu0 0.0
        %3562 = vmatmul.mubr.f32.gmra.mxu0 %v3436
        %v3563 = vpop.f32.mrf.mxu0
        %v3564 = vadd.f32 0.0, %v3563
        %v3565 = vpop.f32.mrf.mxu0
        %3566 = vmatprep.mubr.f32.mxu0 0.0
        %3567 = vmatmul.mubr.f32.gmra.mxu0 %v3437
        %v3568 = vpop.f32.mrf.mxu0
        %v3569 = vadd.f32 0.0, %v3568
        %v3570 = vpop.f32.mrf.mxu0
        %3571 = vmatprep.mubr.f32.mxu0 0.0
        %3572 = vmatmul.mubr.f32.gmra.mxu0 %v3438
        %v3573 = vpop.f32.mrf.mxu0
        %v3574 = vadd.f32 0.0, %v3573
        %v3575 = vpop.f32.mrf.mxu0
        %3576 = vmatprep.mubr.f32.mxu0 0.0
        %3577 = vmatmul.mubr.f32.gmra.mxu0 %v3439
        %v3578 = vpop.f32.mrf.mxu0
        %v3579 = vadd.f32 0.0, %v3578
        %v3580 = vpop.f32.mrf.mxu0
        %3581 = vmatprep.mubr.f32.mxu0 0.0
        %3582 = vmatmul.mubr.f32.gmra.mxu0 %v3440
        %v3583 = vpop.f32.mrf.mxu0
        %v3584 = vadd.f32 0.0, %v3583
        %v3585 = vpop.f32.mrf.mxu0
        %3586 = vmatprep.mubr.f32.mxu0 0.0
        %3587 = vmatmul.mubr.f32.gmra.mxu0 %v3441
        %v3588 = vpop.f32.mrf.mxu0
        %v3589 = vadd.f32 0.0, %v3588
        %v3590 = vpop.f32.mrf.mxu0
        %3591 = vmatprep.mubr.f32.mxu0 0.0
        %3592 = vmatmul.mubr.f32.gmra.mxu0 %v3442
        %v3593 = vpop.f32.mrf.mxu0
        %v3594 = vadd.f32 0.0, %v3593
        %v3595 = vpop.f32.mrf.mxu0
        %3596 = vmatprep.mubr.f32.mxu0 0.0
        %3597 = vmatmul.mubr.f32.gmra.mxu0 %v3443
        %v3598 = vpop.f32.mrf.mxu0
        %v3599 = vadd.f32 0.0, %v3598
        %v3600 = vpop.f32.mrf.mxu0
        %3601 = vmatprep.mubr.f32.mxu0 0.0
        %3602 = vmatmul.mubr.f32.gmra.mxu0 %v3444
        %v3603 = vpop.f32.mrf.mxu0
        %v3604 = vadd.f32 0.0, %v3603
        %v3605 = vpop.f32.mrf.mxu0
        %3606 = vmatprep.mubr.f32.mxu0 0.0
        %3607 = vmatmul.mubr.f32.gmra.mxu0 %v3445
        %v3608 = vpop.f32.mrf.mxu0
        %v3609 = vadd.f32 0.0, %v3608
        %v3610 = vpop.f32.mrf.mxu0
        %3611 = vmatprep.mubr.f32.mxu0 0.0
        %3612 = vmatmul.mubr.f32.gmra.mxu0 %v3446
        %v3613 = vpop.f32.mrf.mxu0
        %v3614 = vadd.f32 0.0, %v3613
        %v3615 = vpop.f32.mrf.mxu0
        %3616 = vmatprep.mubr.f32.mxu0 0.0
        %3617 = vmatmul.mubr.f32.gmra.mxu0 %v3447
        %v3618 = vpop.f32.mrf.mxu0
        %v3619 = vadd.f32 0.0, %v3618
        %v3620 = vpop.f32.mrf.mxu0
        %3621 = vmatprep.mubr.f32.mxu0 0.0
        %3622 = vmatmul.mubr.f32.gmra.mxu0 %v3448
        %v3623 = vpop.f32.mrf.mxu0
        %v3624 = vadd.f32 0.0, %v3623
        %v3625 = vpop.f32.mrf.mxu0
        %3626 = vmatprep.mubr.f32.mxu0 0.0
        %3627 = vmatmul.mubr.f32.gmra.mxu0 %v3449
        %v3628 = vpop.f32.mrf.mxu0
        %v3629 = vadd.f32 0.0, %v3628
        %v3630 = vpop.f32.mrf.mxu0
        %3631 = vmatprep.mubr.f32.mxu0 0.0
        %3632 = vmatmul.mubr.f32.gmra.mxu0 %v3450
        %v3633 = vpop.f32.mrf.mxu0
        %v3634 = vadd.f32 0.0, %v3633
        %v3635 = vpop.f32.mrf.mxu0
        %3636 = vmatprep.mubr.f32.mxu0 0.0
        %3637 = vmatmul.mubr.f32.gmra.mxu0 %v3451
        %v3638 = vpop.f32.mrf.mxu0
        %v3639 = vadd.f32 0.0, %v3638
        %v3640 = vpop.f32.mrf.mxu0
        %3641 = vmatprep.mubr.f32.mxu0 0.0
        %3642 = vmatmul.mubr.f32.gmra.mxu0 %v3452
        %v3643 = vpop.f32.mrf.mxu0
        %v3644 = vadd.f32 0.0, %v3643
        %v3645 = vpop.f32.mrf.mxu0
        %3646 = vmatprep.mubr.f32.mxu0 0.0
        %3647 = vmatmul.mubr.f32.gmra.mxu0 %v3453
        %v3648 = vpop.f32.mrf.mxu0
        %v3649 = vadd.f32 0.0, %v3648
        %v3650 = vpop.f32.mrf.mxu0
        %3651 = vmatprep.mubr.f32.mxu0 0.0
        %3652 = vmatmul.mubr.f32.gmra.mxu0 %v3454
        %v3653 = vpop.f32.mrf.mxu0
        %v3654 = vadd.f32 0.0, %v3653
        %v3655 = vpop.f32.mrf.mxu0
        %3656 = vmatprep.mubr.f32.mxu0 0.0
        %3657 = vmatmul.mubr.f32.gmra.mxu0 %v3455
        %v3658 = vpop.f32.mrf.mxu0
        %v3659 = vadd.f32 0.0, %v3658
        %v3660 = vpop.f32.mrf.mxu0
        %3661 = vmatprep.mubr.f32.mxu0 0.0
        %3662 = vmatmul.mubr.f32.gmra.mxu0 %v3456
        %v3663 = vpop.f32.mrf.mxu0
        %v3664 = vadd.f32 0.0, %v3663
        %v3665 = vpop.f32.mrf.mxu0
        %3666 = vmatprep.mubr.f32.mxu0 0.0
        %3667 = vmatmul.mubr.f32.gmra.mxu0 %v3457
        %v3668 = vpop.f32.mrf.mxu0
        %v3669 = vadd.f32 0.0, %v3668
        %v3670 = vpop.f32.mrf.mxu0
        %3671 = vmatprep.mubr.f32.mxu0 0.0
        %3672 = vmatmul.mubr.f32.gmra.mxu0 %v3458
        %v3673 = vpop.f32.mrf.mxu0
        %v3674 = vadd.f32 0.0, %v3673
        %v3675 = vpop.f32.mrf.mxu0
        %3676 = vmatprep.mubr.f32.mxu0 0.0
        %3677 = vmatmul.mubr.f32.gmra.mxu0 %v3459
        %v3678 = vpop.f32.mrf.mxu0
        %v3679 = vadd.f32 0.0, %v3678
        %v3680 = vpop.f32.mrf.mxu0
        %3681 = vmatprep.mubr.f32.mxu0 0.0
        %3682 = vmatmul.mubr.f32.gmra.mxu0 %v3460
        %v3683 = vpop.f32.mrf.mxu0
        %v3684 = vadd.f32 0.0, %v3683
        %v3685 = vpop.f32.mrf.mxu0
        %3686 = vmatprep.mubr.f32.mxu0 0.0
        %3687 = vmatmul.mubr.f32.gmra.mxu0 %v3461
        %v3688 = vpop.f32.mrf.mxu0
        %v3689 = vadd.f32 0.0, %v3688
        %v3690 = vpop.f32.mrf.mxu0
        %3691 = vmatprep.mubr.f32.mxu0 0.0
        %3692 = vmatmul.mubr.f32.gmra.mxu0 %v3462
        %v3693 = vpop.f32.mrf.mxu0
        %v3694 = vadd.f32 0.0, %v3693
        %v3695 = vpop.f32.mrf.mxu0
        %3696 = vmatprep.mubr.f32.mxu0 0.0
        %3697 = vmatmul.mubr.f32.gmra.mxu0 %v3463
        %v3698 = vpop.f32.mrf.mxu0
        %v3699 = vadd.f32 0.0, %v3698
        %v3700 = vpop.f32.mrf.mxu0
        %3701 = vmatprep.mubr.f32.mxu0 0.0
        %3702 = vmatmul.mubr.f32.gmra.mxu0 %v3464
        %v3703 = vpop.f32.mrf.mxu0
        %v3704 = vadd.f32 0.0, %v3703
        %v3705 = vpop.f32.mrf.mxu0
        %3706 = vdwg.mxu0
        %v3707 = vadd.f32 %v3401, %v3549
        %v3708 = vadd.f32 %v3402, %v3554
        %v3709 = vadd.f32 %v3403, %v3559
        %v3710 = vadd.f32 %v3404, %v3564
        %v3711 = vadd.f32 %v3405, %v3569
        %v3712 = vadd.f32 %v3406, %v3574
        %v3713 = vadd.f32 %v3407, %v3579
        %v3714 = vadd.f32 %v3408, %v3584
        %v3715 = vadd.f32 %v3409, %v3589
        %v3716 = vadd.f32 %v3410, %v3594
        %v3717 = vadd.f32 %v3411, %v3599
        %v3718 = vadd.f32 %v3412, %v3604
        %v3719 = vadd.f32 %v3413, %v3609
        %v3720 = vadd.f32 %v3414, %v3614
        %v3721 = vadd.f32 %v3415, %v3619
        %v3722 = vadd.f32 %v3416, %v3624
        %v3723 = vadd.f32 %v3417, %v3629
        %v3724 = vadd.f32 %v3418, %v3634
        %v3725 = vadd.f32 %v3419, %v3639
        %v3726 = vadd.f32 %v3420, %v3644
        %v3727 = vadd.f32 %v3421, %v3649
        %v3728 = vadd.f32 %v3422, %v3654
        %v3729 = vadd.f32 %v3423, %v3659
        %v3730 = vadd.f32 %v3424, %v3664
        %v3731 = vadd.f32 %v3425, %v3669
        %v3732 = vadd.f32 %v3426, %v3674
        %v3733 = vadd.f32 %v3427, %v3679
        %v3734 = vadd.f32 %v3428, %v3684
        %v3735 = vadd.f32 %v3429, %v3689
        %v3736 = vadd.f32 %v3430, %v3694
        %v3737 = vadd.f32 %v3431, %v3699
        %v3738 = vadd.f32 %v3432, %v3704
        %v3739 = vld [vmem:[%s5] sm:$0x1]
        %v3741 = vlaneseq
        %v3742 = vshrl.u32 %v3741, 7
        %v3743 = vsub.s32 0, %v3742
        %v3744 = vrot.slane %v3739, %v3743
        %v3746 = vmul.f32 %v3707, %v3744
        %v3747 = vmul.f32 %v3708, %v3744
        %v3748 = vmul.f32 %v3709, %v3744
        %v3749 = vmul.f32 %v3710, %v3744
        %v3750 = vmul.f32 %v3711, %v3744
        %v3751 = vmul.f32 %v3712, %v3744
        %v3752 = vmul.f32 %v3713, %v3744
        %v3753 = vmul.f32 %v3714, %v3744
        %v3754 = vmul.f32 %v3715, %v3744
        %v3755 = vmul.f32 %v3716, %v3744
        %v3756 = vmul.f32 %v3717, %v3744
        %v3757 = vmul.f32 %v3718, %v3744
        %v3758 = vmul.f32 %v3719, %v3744
        %v3759 = vmul.f32 %v3720, %v3744
        %v3760 = vmul.f32 %v3721, %v3744
        %v3761 = vmul.f32 %v3722, %v3744
        %v3762 = vmul.f32 %v3723, %v3744
        %v3763 = vmul.f32 %v3724, %v3744
        %v3764 = vmul.f32 %v3725, %v3744
        %v3765 = vmul.f32 %v3726, %v3744
        %v3766 = vmul.f32 %v3727, %v3744
        %v3767 = vmul.f32 %v3728, %v3744
        %v3768 = vmul.f32 %v3729, %v3744
        %v3769 = vmul.f32 %v3730, %v3744
        %v3770 = vmul.f32 %v3731, %v3744
        %v3771 = vmul.f32 %v3732, %v3744
        %v3772 = vmul.f32 %v3733, %v3744
        %v3773 = vmul.f32 %v3734, %v3744
        %v3774 = vmul.f32 %v3735, %v3744
        %v3775 = vmul.f32 %v3736, %v3744
        %v3776 = vmul.f32 %v3737, %v3744
        %v3777 = vmul.f32 %v3738, %v3744
        %v3778 = vld [vmem:[%s6] sm:$0x1]
        %v3780 = vlaneseq
        %v3781 = vshrl.u32 %v3780, 7
        %v3782 = vsub.s32 0, %v3781
        %v3783 = vrot.slane %v3778, %v3782
        %v3785 = vadd.f32 %v3746, %v3783
        %v3786 = vadd.f32 %v3747, %v3783
        %v3787 = vadd.f32 %v3748, %v3783
        %v3788 = vadd.f32 %v3749, %v3783
        %v3789 = vadd.f32 %v3750, %v3783
        %v3790 = vadd.f32 %v3751, %v3783
        %v3791 = vadd.f32 %v3752, %v3783
        %v3792 = vadd.f32 %v3753, %v3783
        %v3793 = vadd.f32 %v3754, %v3783
        %v3794 = vadd.f32 %v3755, %v3783
        %v3795 = vadd.f32 %v3756, %v3783
        %v3796 = vadd.f32 %v3757, %v3783
        %v3797 = vadd.f32 %v3758, %v3783
        %v3798 = vadd.f32 %v3759, %v3783
        %v3799 = vadd.f32 %v3760, %v3783
        %v3800 = vadd.f32 %v3761, %v3783
        %v3801 = vadd.f32 %v3762, %v3783
        %v3802 = vadd.f32 %v3763, %v3783
        %v3803 = vadd.f32 %v3764, %v3783
        %v3804 = vadd.f32 %v3765, %v3783
        %v3805 = vadd.f32 %v3766, %v3783
        %v3806 = vadd.f32 %v3767, %v3783
        %v3807 = vadd.f32 %v3768, %v3783
        %v3808 = vadd.f32 %v3769, %v3783
        %v3809 = vadd.f32 %v3770, %v3783
        %v3810 = vadd.f32 %v3771, %v3783
        %v3811 = vadd.f32 %v3772, %v3783
        %v3812 = vadd.f32 %v3773, %v3783
        %v3813 = vadd.f32 %v3774, %v3783
        %v3814 = vadd.f32 %v3775, %v3783
        %v3815 = vadd.f32 %v3776, %v3783
        %v3816 = vadd.f32 %v3777, %v3783
        %v3817 = vmax.f32 %v3785, 0.0
        %v3818 = vmax.f32 %v3786, 0.0
        %v3819 = vmax.f32 %v3787, 0.0
        %v3820 = vmax.f32 %v3788, 0.0
        %v3821 = vmax.f32 %v3789, 0.0
        %v3822 = vmax.f32 %v3790, 0.0
        %v3823 = vmax.f32 %v3791, 0.0
        %v3824 = vmax.f32 %v3792, 0.0
        %v3825 = vmax.f32 %v3793, 0.0
        %v3826 = vmax.f32 %v3794, 0.0
        %v3827 = vmax.f32 %v3795, 0.0
        %v3828 = vmax.f32 %v3796, 0.0
        %v3829 = vmax.f32 %v3797, 0.0
        %v3830 = vmax.f32 %v3798, 0.0
        %v3831 = vmax.f32 %v3799, 0.0
        %v3832 = vmax.f32 %v3800, 0.0
        %v3833 = vmax.f32 %v3801, 0.0
        %v3834 = vmax.f32 %v3802, 0.0
        %v3835 = vmax.f32 %v3803, 0.0
        %v3836 = vmax.f32 %v3804, 0.0
        %v3837 = vmax.f32 %v3805, 0.0
        %v3838 = vmax.f32 %v3806, 0.0
        %v3839 = vmax.f32 %v3807, 0.0
        %v3840 = vmax.f32 %v3808, 0.0
        %v3841 = vmax.f32 %v3809, 0.0
        %v3842 = vmax.f32 %v3810, 0.0
        %v3843 = vmax.f32 %v3811, 0.0
        %v3844 = vmax.f32 %v3812, 0.0
        %v3845 = vmax.f32 %v3813, 0.0
        %v3846 = vmax.f32 %v3814, 0.0
        %v3847 = vmax.f32 %v3815, 0.0
        %v3848 = vmax.f32 %v3816, 0.0
        %v3849 = vld [vmem:[#allocation9] sm:$0xff]
        %v3850 = vld [vmem:[#allocation9 + $0x8] sm:$0xff]
        %v3851 = vld [vmem:[#allocation9 + $0x10] sm:$0xff]
        %v3852 = vld [vmem:[#allocation9 + $0x18] sm:$0xff]
        %v3853 = vld [vmem:[#allocation9 + $0x20] sm:$0xff]
        %v3854 = vld [vmem:[#allocation9 + $0x28] sm:$0xff]
        %v3855 = vld [vmem:[#allocation9 + $0x30] sm:$0xff]
        %v3856 = vld [vmem:[#allocation9 + $0x38] sm:$0xff]
        %v3857 = vld [vmem:[#allocation9 + $0x40] sm:$0xff]
        %v3858 = vld [vmem:[#allocation9 + $0x48] sm:$0xff]
        %v3859 = vld [vmem:[#allocation9 + $0x50] sm:$0xff]
        %v3860 = vld [vmem:[#allocation9 + $0x58] sm:$0xff]
        %v3861 = vld [vmem:[#allocation9 + $0x60] sm:$0xff]
        %v3862 = vld [vmem:[#allocation9 + $0x68] sm:$0xff]
        %v3863 = vld [vmem:[#allocation9 + $0x70] sm:$0xff]
        %v3864 = vld [vmem:[#allocation9 + $0x78] sm:$0xff]
        %3865 = vmatprep.subr.mxu0 0.0
        %3866 = vmatpush1.msra.mxu0 %v3864
        %3867 = vmatprep.subr.mxu0 0.0
        %3868 = vmatpush1.msra.mxu0 %v3863
        %3869 = vmatprep.subr.mxu0 0.0
        %3870 = vmatpush1.msra.mxu0 %v3862
        %3871 = vmatprep.subr.mxu0 0.0
        %3872 = vmatpush1.msra.mxu0 %v3861
        %3873 = vmatprep.subr.mxu0 0.0
        %3874 = vmatpush1.msra.mxu0 %v3860
        %3875 = vmatprep.subr.mxu0 0.0
        %3876 = vmatpush1.msra.mxu0 %v3859
        %3877 = vmatprep.subr.mxu0 0.0
        %3878 = vmatpush1.msra.mxu0 %v3858
        %3879 = vmatprep.subr.mxu0 0.0
        %3880 = vmatpush1.msra.mxu0 %v3857
        %3881 = vmatprep.subr.mxu0 0.0
        %3882 = vmatpush1.msra.mxu0 %v3856
        %3883 = vmatprep.subr.mxu0 0.0
        %3884 = vmatpush1.msra.mxu0 %v3855
        %3885 = vmatprep.subr.mxu0 0.0
        %3886 = vmatpush1.msra.mxu0 %v3854
        %3887 = vmatprep.subr.mxu0 0.0
        %3888 = vmatpush1.msra.mxu0 %v3853
        %3889 = vmatprep.subr.mxu0 0.0
        %3890 = vmatpush1.msra.mxu0 %v3852
        %3891 = vmatprep.subr.mxu0 0.0
        %3892 = vmatpush1.msra.mxu0 %v3851
        %3893 = vmatprep.subr.mxu0 0.0
        %3894 = vmatpush1.msra.mxu0 %v3850
        %3895 = vmatprep.subr.mxu0 0.0
        %3896 = vmatpush1.msra.mxu0 %v3849
        %3897 = vmatprep.subr.mxu0 0.0
        %3898 = vmatpush2.msra.mxu0 0.0
        %3899 = vmatprep.subr.mxu0 0.0
        %3900 = vmatpush2.msra.mxu0 0.0
        %3901 = vmatprep.subr.mxu0 0.0
        %3902 = vmatpush2.msra.mxu0 0.0
        %3903 = vmatprep.subr.mxu0 0.0
        %3904 = vmatpush2.msra.mxu0 0.0
        %3905 = vmatprep.subr.mxu0 0.0
        %3906 = vmatpush2.msra.mxu0 0.0
        %3907 = vmatprep.subr.mxu0 0.0
        %3908 = vmatpush2.msra.mxu0 0.0
        %3909 = vmatprep.subr.mxu0 0.0
        %3910 = vmatpush2.msra.mxu0 0.0
        %3911 = vmatprep.subr.mxu0 0.0
        %3912 = vmatpush2.msra.mxu0 0.0
        %3913 = vmatprep.subr.mxu0 0.0
        %3914 = vmatpush2.msra.mxu0 0.0
        %3915 = vmatprep.subr.mxu0 0.0
        %3916 = vmatpush2.msra.mxu0 0.0
        %3917 = vmatprep.subr.mxu0 0.0
        %3918 = vmatpush2.msra.mxu0 0.0
        %3919 = vmatprep.subr.mxu0 0.0
        %3920 = vmatpush2.msra.mxu0 0.0
        %3921 = vmatprep.subr.mxu0 0.0
        %3922 = vmatpush2.msra.mxu0 0.0
        %3923 = vmatprep.subr.mxu0 0.0
        %3924 = vmatpush2.msra.mxu0 0.0
        %3925 = vmatprep.subr.mxu0 0.0
        %3926 = vmatpush2.msra.mxu0 0.0
        %3927 = vmatprep.subr.mxu0 0.0
        %3928 = vmatpush2.msra.mxu0 0.0
        %3929 = vmatprep.mubr.f32.mxu0 0.0
        %3930 = vmatmul.mubr.f32.gmra.mxu0 %v3817
        %v3931 = vpop.f32.mrf.mxu0
        %v3932 = vadd.f32 0.0, %v3931
        %v3933 = vpop.f32.mrf.mxu0
        %3934 = vmatprep.mubr.f32.mxu0 0.0
        %3935 = vmatmul.mubr.f32.gmra.mxu0 %v3818
        %v3936 = vpop.f32.mrf.mxu0
        %v3937 = vadd.f32 0.0, %v3936
        %v3938 = vpop.f32.mrf.mxu0
        %3939 = vmatprep.mubr.f32.mxu0 0.0
        %3940 = vmatmul.mubr.f32.gmra.mxu0 %v3819
        %v3941 = vpop.f32.mrf.mxu0
        %v3942 = vadd.f32 0.0, %v3941
        %v3943 = vpop.f32.mrf.mxu0
        %3944 = vmatprep.mubr.f32.mxu0 0.0
        %3945 = vmatmul.mubr.f32.gmra.mxu0 %v3820
        %v3946 = vpop.f32.mrf.mxu0
        %v3947 = vadd.f32 0.0, %v3946
        %v3948 = vpop.f32.mrf.mxu0
        %3949 = vmatprep.mubr.f32.mxu0 0.0
        %3950 = vmatmul.mubr.f32.gmra.mxu0 %v3821
        %v3951 = vpop.f32.mrf.mxu0
        %v3952 = vadd.f32 0.0, %v3951
        %v3953 = vpop.f32.mrf.mxu0
        %3954 = vmatprep.mubr.f32.mxu0 0.0
        %3955 = vmatmul.mubr.f32.gmra.mxu0 %v3822
        %v3956 = vpop.f32.mrf.mxu0
        %v3957 = vadd.f32 0.0, %v3956
        %v3958 = vpop.f32.mrf.mxu0
        %3959 = vmatprep.mubr.f32.mxu0 0.0
        %3960 = vmatmul.mubr.f32.gmra.mxu0 %v3823
        %v3961 = vpop.f32.mrf.mxu0
        %v3962 = vadd.f32 0.0, %v3961
        %v3963 = vpop.f32.mrf.mxu0
        %3964 = vmatprep.mubr.f32.mxu0 0.0
        %3965 = vmatmul.mubr.f32.gmra.mxu0 %v3824
        %v3966 = vpop.f32.mrf.mxu0
        %v3967 = vadd.f32 0.0, %v3966
        %v3968 = vpop.f32.mrf.mxu0
        %3969 = vmatprep.mubr.f32.mxu0 0.0
        %3970 = vmatmul.mubr.f32.gmra.mxu0 %v3825
        %v3971 = vpop.f32.mrf.mxu0
        %v3972 = vadd.f32 0.0, %v3971
        %v3973 = vpop.f32.mrf.mxu0
        %3974 = vmatprep.mubr.f32.mxu0 0.0
        %3975 = vmatmul.mubr.f32.gmra.mxu0 %v3826
        %v3976 = vpop.f32.mrf.mxu0
        %v3977 = vadd.f32 0.0, %v3976
        %v3978 = vpop.f32.mrf.mxu0
        %3979 = vmatprep.mubr.f32.mxu0 0.0
        %3980 = vmatmul.mubr.f32.gmra.mxu0 %v3827
        %v3981 = vpop.f32.mrf.mxu0
        %v3982 = vadd.f32 0.0, %v3981
        %v3983 = vpop.f32.mrf.mxu0
        %3984 = vmatprep.mubr.f32.mxu0 0.0
        %3985 = vmatmul.mubr.f32.gmra.mxu0 %v3828
        %v3986 = vpop.f32.mrf.mxu0
        %v3987 = vadd.f32 0.0, %v3986
        %v3988 = vpop.f32.mrf.mxu0
        %3989 = vmatprep.mubr.f32.mxu0 0.0
        %3990 = vmatmul.mubr.f32.gmra.mxu0 %v3829
        %v3991 = vpop.f32.mrf.mxu0
        %v3992 = vadd.f32 0.0, %v3991
        %v3993 = vpop.f32.mrf.mxu0
        %3994 = vmatprep.mubr.f32.mxu0 0.0
        %3995 = vmatmul.mubr.f32.gmra.mxu0 %v3830
        %v3996 = vpop.f32.mrf.mxu0
        %v3997 = vadd.f32 0.0, %v3996
        %v3998 = vpop.f32.mrf.mxu0
        %3999 = vmatprep.mubr.f32.mxu0 0.0
        %4000 = vmatmul.mubr.f32.gmra.mxu0 %v3831
        %v4001 = vpop.f32.mrf.mxu0
        %v4002 = vadd.f32 0.0, %v4001
        %v4003 = vpop.f32.mrf.mxu0
        %4004 = vmatprep.mubr.f32.mxu0 0.0
        %4005 = vmatmul.mubr.f32.gmra.mxu0 %v3832
        %v4006 = vpop.f32.mrf.mxu0
        %v4007 = vadd.f32 0.0, %v4006
        %v4008 = vpop.f32.mrf.mxu0
        %4009 = vmatprep.mubr.f32.mxu0 0.0
        %4010 = vmatmul.mubr.f32.gmra.mxu0 %v3833
        %v4011 = vpop.f32.mrf.mxu0
        %v4012 = vadd.f32 0.0, %v4011
        %v4013 = vpop.f32.mrf.mxu0
        %4014 = vmatprep.mubr.f32.mxu0 0.0
        %4015 = vmatmul.mubr.f32.gmra.mxu0 %v3834
        %v4016 = vpop.f32.mrf.mxu0
        %v4017 = vadd.f32 0.0, %v4016
        %v4018 = vpop.f32.mrf.mxu0
        %4019 = vmatprep.mubr.f32.mxu0 0.0
        %4020 = vmatmul.mubr.f32.gmra.mxu0 %v3835
        %v4021 = vpop.f32.mrf.mxu0
        %v4022 = vadd.f32 0.0, %v4021
        %v4023 = vpop.f32.mrf.mxu0
        %4024 = vmatprep.mubr.f32.mxu0 0.0
        %4025 = vmatmul.mubr.f32.gmra.mxu0 %v3836
        %v4026 = vpop.f32.mrf.mxu0
        %v4027 = vadd.f32 0.0, %v4026
        %v4028 = vpop.f32.mrf.mxu0
        %4029 = vmatprep.mubr.f32.mxu0 0.0
        %4030 = vmatmul.mubr.f32.gmra.mxu0 %v3837
        %v4031 = vpop.f32.mrf.mxu0
        %v4032 = vadd.f32 0.0, %v4031
        %v4033 = vpop.f32.mrf.mxu0
        %4034 = vmatprep.mubr.f32.mxu0 0.0
        %4035 = vmatmul.mubr.f32.gmra.mxu0 %v3838
        %v4036 = vpop.f32.mrf.mxu0
        %v4037 = vadd.f32 0.0, %v4036
        %v4038 = vpop.f32.mrf.mxu0
        %4039 = vmatprep.mubr.f32.mxu0 0.0
        %4040 = vmatmul.mubr.f32.gmra.mxu0 %v3839
        %v4041 = vpop.f32.mrf.mxu0
        %v4042 = vadd.f32 0.0, %v4041
        %v4043 = vpop.f32.mrf.mxu0
        %4044 = vmatprep.mubr.f32.mxu0 0.0
        %4045 = vmatmul.mubr.f32.gmra.mxu0 %v3840
        %v4046 = vpop.f32.mrf.mxu0
        %v4047 = vadd.f32 0.0, %v4046
        %v4048 = vpop.f32.mrf.mxu0
        %4049 = vmatprep.mubr.f32.mxu0 0.0
        %4050 = vmatmul.mubr.f32.gmra.mxu0 %v3841
        %v4051 = vpop.f32.mrf.mxu0
        %v4052 = vadd.f32 0.0, %v4051
        %v4053 = vpop.f32.mrf.mxu0
        %4054 = vmatprep.mubr.f32.mxu0 0.0
        %4055 = vmatmul.mubr.f32.gmra.mxu0 %v3842
        %v4056 = vpop.f32.mrf.mxu0
        %v4057 = vadd.f32 0.0, %v4056
        %v4058 = vpop.f32.mrf.mxu0
        %4059 = vmatprep.mubr.f32.mxu0 0.0
        %4060 = vmatmul.mubr.f32.gmra.mxu0 %v3843
        %v4061 = vpop.f32.mrf.mxu0
        %v4062 = vadd.f32 0.0, %v4061
        %v4063 = vpop.f32.mrf.mxu0
        %4064 = vmatprep.mubr.f32.mxu0 0.0
        %4065 = vmatmul.mubr.f32.gmra.mxu0 %v3844
        %v4066 = vpop.f32.mrf.mxu0
        %v4067 = vadd.f32 0.0, %v4066
        %v4068 = vpop.f32.mrf.mxu0
        %4069 = vmatprep.mubr.f32.mxu0 0.0
        %4070 = vmatmul.mubr.f32.gmra.mxu0 %v3845
        %v4071 = vpop.f32.mrf.mxu0
        %v4072 = vadd.f32 0.0, %v4071
        %v4073 = vpop.f32.mrf.mxu0
        %4074 = vmatprep.mubr.f32.mxu0 0.0
        %4075 = vmatmul.mubr.f32.gmra.mxu0 %v3846
        %v4076 = vpop.f32.mrf.mxu0
        %v4077 = vadd.f32 0.0, %v4076
        %v4078 = vpop.f32.mrf.mxu0
        %4079 = vmatprep.mubr.f32.mxu0 0.0
        %4080 = vmatmul.mubr.f32.gmra.mxu0 %v3847
        %v4081 = vpop.f32.mrf.mxu0
        %v4082 = vadd.f32 0.0, %v4081
        %v4083 = vpop.f32.mrf.mxu0
        %4084 = vmatprep.mubr.f32.mxu0 0.0
        %4085 = vmatmul.mubr.f32.gmra.mxu0 %v3848
        %v4086 = vpop.f32.mrf.mxu0
        %v4087 = vadd.f32 0.0, %v4086
        %v4088 = vpop.f32.mrf.mxu0
        %4089 = vdwg.mxu0
        %v4090 = vld [vmem:[%s8] sm:$0x1]
        %v4092 = vlaneseq
        %v4093 = vshrl.u32 %v4092, 7
        %v4094 = vsub.s32 0, %v4093
        %v4095 = vrot.slane %v4090, %v4094
        %v4097 = vmul.f32 %v3932, %v4095
        %v4098 = vmul.f32 %v3937, %v4095
        %v4099 = vmul.f32 %v3942, %v4095
        %v4100 = vmul.f32 %v3947, %v4095
        %v4101 = vmul.f32 %v3952, %v4095
        %v4102 = vmul.f32 %v3957, %v4095
        %v4103 = vmul.f32 %v3962, %v4095
        %v4104 = vmul.f32 %v3967, %v4095
        %v4105 = vmul.f32 %v3972, %v4095
        %v4106 = vmul.f32 %v3977, %v4095
        %v4107 = vmul.f32 %v3982, %v4095
        %v4108 = vmul.f32 %v3987, %v4095
        %v4109 = vmul.f32 %v3992, %v4095
        %v4110 = vmul.f32 %v3997, %v4095
        %v4111 = vmul.f32 %v4002, %v4095
        %v4112 = vmul.f32 %v4007, %v4095
        %v4113 = vmul.f32 %v4012, %v4095
        %v4114 = vmul.f32 %v4017, %v4095
        %v4115 = vmul.f32 %v4022, %v4095
        %v4116 = vmul.f32 %v4027, %v4095
        %v4117 = vmul.f32 %v4032, %v4095
        %v4118 = vmul.f32 %v4037, %v4095
        %v4119 = vmul.f32 %v4042, %v4095
        %v4120 = vmul.f32 %v4047, %v4095
        %v4121 = vmul.f32 %v4052, %v4095
        %v4122 = vmul.f32 %v4057, %v4095
        %v4123 = vmul.f32 %v4062, %v4095
        %v4124 = vmul.f32 %v4067, %v4095
        %v4125 = vmul.f32 %v4072, %v4095
        %v4126 = vmul.f32 %v4077, %v4095
        %v4127 = vmul.f32 %v4082, %v4095
        %v4128 = vmul.f32 %v4087, %v4095
        %v4129 = vld [vmem:[%s9] sm:$0x1]
        %v4131 = vlaneseq
        %v4132 = vshrl.u32 %v4131, 7
        %v4133 = vsub.s32 0, %v4132
        %v4134 = vrot.slane %v4129, %v4133
        %v4136 = vadd.f32 %v4097, %v4134
        %v4137 = vadd.f32 %v4098, %v4134
        %v4138 = vadd.f32 %v4099, %v4134
        %v4139 = vadd.f32 %v4100, %v4134
        %v4140 = vadd.f32 %v4101, %v4134
        %v4141 = vadd.f32 %v4102, %v4134
        %v4142 = vadd.f32 %v4103, %v4134
        %v4143 = vadd.f32 %v4104, %v4134
        %v4144 = vadd.f32 %v4105, %v4134
        %v4145 = vadd.f32 %v4106, %v4134
        %v4146 = vadd.f32 %v4107, %v4134
        %v4147 = vadd.f32 %v4108, %v4134
        %v4148 = vadd.f32 %v4109, %v4134
        %v4149 = vadd.f32 %v4110, %v4134
        %v4150 = vadd.f32 %v4111, %v4134
        %v4151 = vadd.f32 %v4112, %v4134
        %v4152 = vadd.f32 %v4113, %v4134
        %v4153 = vadd.f32 %v4114, %v4134
        %v4154 = vadd.f32 %v4115, %v4134
        %v4155 = vadd.f32 %v4116, %v4134
        %v4156 = vadd.f32 %v4117, %v4134
        %v4157 = vadd.f32 %v4118, %v4134
        %v4158 = vadd.f32 %v4119, %v4134
        %v4159 = vadd.f32 %v4120, %v4134
        %v4160 = vadd.f32 %v4121, %v4134
        %v4161 = vadd.f32 %v4122, %v4134
        %v4162 = vadd.f32 %v4123, %v4134
        %v4163 = vadd.f32 %v4124, %v4134
        %v4164 = vadd.f32 %v4125, %v4134
        %v4165 = vadd.f32 %v4126, %v4134
        %v4166 = vadd.f32 %v4127, %v4134
        %v4167 = vadd.f32 %v4128, %v4134
        %v4168 = vld [vmem:[#allocation11] sm:$0xff]
        %v4169 = vld [vmem:[#allocation11 + $0x8] sm:$0xff]
        %v4170 = vld [vmem:[#allocation11 + $0x10] sm:$0xff]
        %v4171 = vld [vmem:[#allocation11 + $0x18] sm:$0xff]
        %v4172 = vld [vmem:[#allocation11 + $0x20] sm:$0xff]
        %v4173 = vld [vmem:[#allocation11 + $0x28] sm:$0xff]
        %v4174 = vld [vmem:[#allocation11 + $0x30] sm:$0xff]
        %v4175 = vld [vmem:[#allocation11 + $0x38] sm:$0xff]
        %v4176 = vld [vmem:[%s11] sm:$0x1]
        %v4178 = vlaneseq
        %v4179 = vshrl.u32 %v4178, 7
        %v4180 = vsub.s32 0, %v4179
        %v4181 = vrot.slane %v4176, %v4180
        %4183 = vmatprep.subr.mxu0 0.0
        %4184 = vmatpush1.msra.mxu0 0.0
        %4185 = vmatprep.subr.mxu0 0.0
        %4186 = vmatpush1.msra.mxu0 0.0
        %4187 = vmatprep.subr.mxu0 0.0
        %4188 = vmatpush1.msra.mxu0 0.0
        %4189 = vmatprep.subr.mxu0 0.0
        %4190 = vmatpush1.msra.mxu0 0.0
        %4191 = vmatprep.subr.mxu0 0.0
        %4192 = vmatpush1.msra.mxu0 0.0
        %4193 = vmatprep.subr.mxu0 0.0
        %4194 = vmatpush1.msra.mxu0 0.0
        %4195 = vmatprep.subr.mxu0 0.0
        %4196 = vmatpush1.msra.mxu0 0.0
        %4197 = vmatprep.subr.mxu0 0.0
        %4198 = vmatpush1.msra.mxu0 0.0
        %4199 = vmatprep.subr.mxu0 0.0
        %4200 = vmatpush1.msra.mxu0 %v4175
        %4201 = vmatprep.subr.mxu0 0.0
        %4202 = vmatpush1.msra.mxu0 %v4174
        %4203 = vmatprep.subr.mxu0 0.0
        %4204 = vmatpush1.msra.mxu0 %v4173
        %4205 = vmatprep.subr.mxu0 0.0
        %4206 = vmatpush1.msra.mxu0 %v4172
        %4207 = vmatprep.subr.mxu0 0.0
        %4208 = vmatpush1.msra.mxu0 %v4171
        %4209 = vmatprep.subr.mxu0 0.0
        %4210 = vmatpush1.msra.mxu0 %v4170
        %4211 = vmatprep.subr.mxu0 0.0
        %4212 = vmatpush1.msra.mxu0 %v4169
        %4213 = vmatprep.subr.mxu0 0.0
        %4214 = vmatpush1.msra.mxu0 %v4168
        %4215 = vmatprep.subr.mxu0 0.0
        %4216 = vmatpush2.msra.mxu0 0.0
        %4217 = vmatprep.subr.mxu0 0.0
        %4218 = vmatpush2.msra.mxu0 0.0
        %4219 = vmatprep.subr.mxu0 0.0
        %4220 = vmatpush2.msra.mxu0 0.0
        %4221 = vmatprep.subr.mxu0 0.0
        %4222 = vmatpush2.msra.mxu0 0.0
        %4223 = vmatprep.subr.mxu0 0.0
        %4224 = vmatpush2.msra.mxu0 0.0
        %4225 = vmatprep.subr.mxu0 0.0
        %4226 = vmatpush2.msra.mxu0 0.0
        %4227 = vmatprep.subr.mxu0 0.0
        %4228 = vmatpush2.msra.mxu0 0.0
        %4229 = vmatprep.subr.mxu0 0.0
        %4230 = vmatpush2.msra.mxu0 0.0
        %4231 = vmatprep.subr.mxu0 0.0
        %4232 = vmatpush2.msra.mxu0 0.0
        %4233 = vmatprep.subr.mxu0 0.0
        %4234 = vmatpush2.msra.mxu0 0.0
        %4235 = vmatprep.subr.mxu0 0.0
        %4236 = vmatpush2.msra.mxu0 0.0
        %4237 = vmatprep.subr.mxu0 0.0
        %4238 = vmatpush2.msra.mxu0 0.0
        %4239 = vmatprep.subr.mxu0 0.0
        %4240 = vmatpush2.msra.mxu0 0.0
        %4241 = vmatprep.subr.mxu0 0.0
        %4242 = vmatpush2.msra.mxu0 0.0
        %4243 = vmatprep.subr.mxu0 0.0
        %4244 = vmatpush2.msra.mxu0 0.0
        %4245 = vmatprep.subr.mxu0 0.0
        %4246 = vmatpush2.msra.mxu0 0.0
        %4247 = vmatprep.mubr.f32.mxu0 0.0
        %4248 = vmatmul.mubr.f32.gmra.mxu0 %v532
        %v4249 = vpop.f32.mrf.mxu0
        %v4250 = vadd.f32 %v4181, %v4249
        %v4251 = vpop.f32.mrf.mxu0
        %4252 = vmatprep.mubr.f32.mxu0 0.0
        %4253 = vmatmul.mubr.f32.gmra.mxu0 %v535
        %v4254 = vpop.f32.mrf.mxu0
        %v4255 = vadd.f32 %v4181, %v4254
        %v4256 = vpop.f32.mrf.mxu0
        %4257 = vmatprep.mubr.f32.mxu0 0.0
        %4258 = vmatmul.mubr.f32.gmra.mxu0 %v538
        %v4259 = vpop.f32.mrf.mxu0
        %v4260 = vadd.f32 %v4181, %v4259
        %v4261 = vpop.f32.mrf.mxu0
        %4262 = vmatprep.mubr.f32.mxu0 0.0
        %4263 = vmatmul.mubr.f32.gmra.mxu0 %v541
        %v4264 = vpop.f32.mrf.mxu0
        %v4265 = vadd.f32 %v4181, %v4264
        %v4266 = vpop.f32.mrf.mxu0
        %4267 = vmatprep.mubr.f32.mxu0 0.0
        %4268 = vmatmul.mubr.f32.gmra.mxu0 %v544
        %v4269 = vpop.f32.mrf.mxu0
        %v4270 = vadd.f32 %v4181, %v4269
        %v4271 = vpop.f32.mrf.mxu0
        %4272 = vmatprep.mubr.f32.mxu0 0.0
        %4273 = vmatmul.mubr.f32.gmra.mxu0 %v547
        %v4274 = vpop.f32.mrf.mxu0
        %v4275 = vadd.f32 %v4181, %v4274
        %v4276 = vpop.f32.mrf.mxu0
        %4277 = vmatprep.mubr.f32.mxu0 0.0
        %4278 = vmatmul.mubr.f32.gmra.mxu0 %v550
        %v4279 = vpop.f32.mrf.mxu0
        %v4280 = vadd.f32 %v4181, %v4279
        %v4281 = vpop.f32.mrf.mxu0
        %4282 = vmatprep.mubr.f32.mxu0 0.0
        %4283 = vmatmul.mubr.f32.gmra.mxu0 %v553
        %v4284 = vpop.f32.mrf.mxu0
        %v4285 = vadd.f32 %v4181, %v4284
        %v4286 = vpop.f32.mrf.mxu0
        %4287 = vmatprep.mubr.f32.mxu0 0.0
        %4288 = vmatmul.mubr.f32.gmra.mxu0 %v556
        %v4289 = vpop.f32.mrf.mxu0
        %v4290 = vadd.f32 %v4181, %v4289
        %v4291 = vpop.f32.mrf.mxu0
        %4292 = vmatprep.mubr.f32.mxu0 0.0
        %4293 = vmatmul.mubr.f32.gmra.mxu0 %v559
        %v4294 = vpop.f32.mrf.mxu0
        %v4295 = vadd.f32 %v4181, %v4294
        %v4296 = vpop.f32.mrf.mxu0
        %4297 = vmatprep.mubr.f32.mxu0 0.0
        %4298 = vmatmul.mubr.f32.gmra.mxu0 %v562
        %v4299 = vpop.f32.mrf.mxu0
        %v4300 = vadd.f32 %v4181, %v4299
        %v4301 = vpop.f32.mrf.mxu0
        %4302 = vmatprep.mubr.f32.mxu0 0.0
        %4303 = vmatmul.mubr.f32.gmra.mxu0 %v565
        %v4304 = vpop.f32.mrf.mxu0
        %v4305 = vadd.f32 %v4181, %v4304
        %v4306 = vpop.f32.mrf.mxu0
        %4307 = vmatprep.mubr.f32.mxu0 0.0
        %4308 = vmatmul.mubr.f32.gmra.mxu0 %v568
        %v4309 = vpop.f32.mrf.mxu0
        %v4310 = vadd.f32 %v4181, %v4309
        %v4311 = vpop.f32.mrf.mxu0
        %4312 = vmatprep.mubr.f32.mxu0 0.0
        %4313 = vmatmul.mubr.f32.gmra.mxu0 %v571
        %v4314 = vpop.f32.mrf.mxu0
        %v4315 = vadd.f32 %v4181, %v4314
        %v4316 = vpop.f32.mrf.mxu0
        %4317 = vmatprep.mubr.f32.mxu0 0.0
        %4318 = vmatmul.mubr.f32.gmra.mxu0 %v574
        %v4319 = vpop.f32.mrf.mxu0
        %v4320 = vadd.f32 %v4181, %v4319
        %v4321 = vpop.f32.mrf.mxu0
        %4322 = vmatprep.mubr.f32.mxu0 0.0
        %4323 = vmatmul.mubr.f32.gmra.mxu0 %v577
        %v4324 = vpop.f32.mrf.mxu0
        %v4325 = vadd.f32 %v4181, %v4324
        %v4326 = vpop.f32.mrf.mxu0
        %4327 = vmatprep.mubr.f32.mxu0 0.0
        %4328 = vmatmul.mubr.f32.gmra.mxu0 %v580
        %v4329 = vpop.f32.mrf.mxu0
        %v4330 = vadd.f32 %v4181, %v4329
        %v4331 = vpop.f32.mrf.mxu0
        %4332 = vmatprep.mubr.f32.mxu0 0.0
        %4333 = vmatmul.mubr.f32.gmra.mxu0 %v583
        %v4334 = vpop.f32.mrf.mxu0
        %v4335 = vadd.f32 %v4181, %v4334
        %v4336 = vpop.f32.mrf.mxu0
        %4337 = vmatprep.mubr.f32.mxu0 0.0
        %4338 = vmatmul.mubr.f32.gmra.mxu0 %v586
        %v4339 = vpop.f32.mrf.mxu0
        %v4340 = vadd.f32 %v4181, %v4339
        %v4341 = vpop.f32.mrf.mxu0
        %4342 = vmatprep.mubr.f32.mxu0 0.0
        %4343 = vmatmul.mubr.f32.gmra.mxu0 %v589
        %v4344 = vpop.f32.mrf.mxu0
        %v4345 = vadd.f32 %v4181, %v4344
        %v4346 = vpop.f32.mrf.mxu0
        %4347 = vmatprep.mubr.f32.mxu0 0.0
        %4348 = vmatmul.mubr.f32.gmra.mxu0 %v592
        %v4349 = vpop.f32.mrf.mxu0
        %v4350 = vadd.f32 %v4181, %v4349
        %v4351 = vpop.f32.mrf.mxu0
        %4352 = vmatprep.mubr.f32.mxu0 0.0
        %4353 = vmatmul.mubr.f32.gmra.mxu0 %v595
        %v4354 = vpop.f32.mrf.mxu0
        %v4355 = vadd.f32 %v4181, %v4354
        %v4356 = vpop.f32.mrf.mxu0
        %4357 = vmatprep.mubr.f32.mxu0 0.0
        %4358 = vmatmul.mubr.f32.gmra.mxu0 %v598
        %v4359 = vpop.f32.mrf.mxu0
        %v4360 = vadd.f32 %v4181, %v4359
        %v4361 = vpop.f32.mrf.mxu0
        %4362 = vmatprep.mubr.f32.mxu0 0.0
        %4363 = vmatmul.mubr.f32.gmra.mxu0 %v601
        %v4364 = vpop.f32.mrf.mxu0
        %v4365 = vadd.f32 %v4181, %v4364
        %v4366 = vpop.f32.mrf.mxu0
        %4367 = vmatprep.mubr.f32.mxu0 0.0
        %4368 = vmatmul.mubr.f32.gmra.mxu0 %v604
        %v4369 = vpop.f32.mrf.mxu0
        %v4370 = vadd.f32 %v4181, %v4369
        %v4371 = vpop.f32.mrf.mxu0
        %4372 = vmatprep.mubr.f32.mxu0 0.0
        %4373 = vmatmul.mubr.f32.gmra.mxu0 %v607
        %v4374 = vpop.f32.mrf.mxu0
        %v4375 = vadd.f32 %v4181, %v4374
        %v4376 = vpop.f32.mrf.mxu0
        %4377 = vmatprep.mubr.f32.mxu0 0.0
        %4378 = vmatmul.mubr.f32.gmra.mxu0 %v610
        %v4379 = vpop.f32.mrf.mxu0
        %v4380 = vadd.f32 %v4181, %v4379
        %v4381 = vpop.f32.mrf.mxu0
        %4382 = vmatprep.mubr.f32.mxu0 0.0
        %4383 = vmatmul.mubr.f32.gmra.mxu0 %v613
        %v4384 = vpop.f32.mrf.mxu0
        %v4385 = vadd.f32 %v4181, %v4384
        %v4386 = vpop.f32.mrf.mxu0
        %4387 = vmatprep.mubr.f32.mxu0 0.0
        %4388 = vmatmul.mubr.f32.gmra.mxu0 %v616
        %v4389 = vpop.f32.mrf.mxu0
        %v4390 = vadd.f32 %v4181, %v4389
        %v4391 = vpop.f32.mrf.mxu0
        %4392 = vmatprep.mubr.f32.mxu0 0.0
        %4393 = vmatmul.mubr.f32.gmra.mxu0 %v619
        %v4394 = vpop.f32.mrf.mxu0
        %v4395 = vadd.f32 %v4181, %v4394
        %v4396 = vpop.f32.mrf.mxu0
        %4397 = vmatprep.mubr.f32.mxu0 0.0
        %4398 = vmatmul.mubr.f32.gmra.mxu0 %v622
        %v4399 = vpop.f32.mrf.mxu0
        %v4400 = vadd.f32 %v4181, %v4399
        %v4401 = vpop.f32.mrf.mxu0
        %4402 = vmatprep.mubr.f32.mxu0 0.0
        %4403 = vmatmul.mubr.f32.gmra.mxu0 %v625
        %v4404 = vpop.f32.mrf.mxu0
        %v4405 = vadd.f32 %v4181, %v4404
        %v4406 = vpop.f32.mrf.mxu0
        %4407 = vdwg.mxu0
        %v4408 = vadd.f32 %v4136, %v4250
        %v4409 = vadd.f32 %v4137, %v4255
        %v4410 = vadd.f32 %v4138, %v4260
        %v4411 = vadd.f32 %v4139, %v4265
        %v4412 = vadd.f32 %v4140, %v4270
        %v4413 = vadd.f32 %v4141, %v4275
        %v4414 = vadd.f32 %v4142, %v4280
        %v4415 = vadd.f32 %v4143, %v4285
        %v4416 = vadd.f32 %v4144, %v4290
        %v4417 = vadd.f32 %v4145, %v4295
        %v4418 = vadd.f32 %v4146, %v4300
        %v4419 = vadd.f32 %v4147, %v4305
        %v4420 = vadd.f32 %v4148, %v4310
        %v4421 = vadd.f32 %v4149, %v4315
        %v4422 = vadd.f32 %v4150, %v4320
        %v4423 = vadd.f32 %v4151, %v4325
        %v4424 = vadd.f32 %v4152, %v4330
        %v4425 = vadd.f32 %v4153, %v4335
        %v4426 = vadd.f32 %v4154, %v4340
        %v4427 = vadd.f32 %v4155, %v4345
        %v4428 = vadd.f32 %v4156, %v4350
        %v4429 = vadd.f32 %v4157, %v4355
        %v4430 = vadd.f32 %v4158, %v4360
        %v4431 = vadd.f32 %v4159, %v4365
        %v4432 = vadd.f32 %v4160, %v4370
        %v4433 = vadd.f32 %v4161, %v4375
        %v4434 = vadd.f32 %v4162, %v4380
        %v4435 = vadd.f32 %v4163, %v4385
        %v4436 = vadd.f32 %v4164, %v4390
        %v4437 = vadd.f32 %v4165, %v4395
        %v4438 = vadd.f32 %v4166, %v4400
        %v4439 = vadd.f32 %v4167, %v4405
        %v4440 = vmax.f32 %v4408, 0.0
        %v4441 = vmax.f32 %v4409, 0.0
        %v4442 = vmax.f32 %v4410, 0.0
        %v4443 = vmax.f32 %v4411, 0.0
        %v4444 = vmax.f32 %v4412, 0.0
        %v4445 = vmax.f32 %v4413, 0.0
        %v4446 = vmax.f32 %v4414, 0.0
        %v4447 = vmax.f32 %v4415, 0.0
        %v4448 = vmax.f32 %v4416, 0.0
        %v4449 = vmax.f32 %v4417, 0.0
        %v4450 = vmax.f32 %v4418, 0.0
        %v4451 = vmax.f32 %v4419, 0.0
        %v4452 = vmax.f32 %v4420, 0.0
        %v4453 = vmax.f32 %v4421, 0.0
        %v4454 = vmax.f32 %v4422, 0.0
        %v4455 = vmax.f32 %v4423, 0.0
        %v4456 = vmax.f32 %v4424, 0.0
        %v4457 = vmax.f32 %v4425, 0.0
        %v4458 = vmax.f32 %v4426, 0.0
        %v4459 = vmax.f32 %v4427, 0.0
        %v4460 = vmax.f32 %v4428, 0.0
        %v4461 = vmax.f32 %v4429, 0.0
        %v4462 = vmax.f32 %v4430, 0.0
        %v4463 = vmax.f32 %v4431, 0.0
        %v4464 = vmax.f32 %v4432, 0.0
        %v4465 = vmax.f32 %v4433, 0.0
        %v4466 = vmax.f32 %v4434, 0.0
        %v4467 = vmax.f32 %v4435, 0.0
        %v4468 = vmax.f32 %v4436, 0.0
        %v4469 = vmax.f32 %v4437, 0.0
        %v4470 = vmax.f32 %v4438, 0.0
        %v4471 = vmax.f32 %v4439, 0.0
        %4472 = vst [vmem:[%s489] sm:$0xff] %v4440
        %4473 = vst [vmem:[%s489 + $0x8] sm:$0xff] %v4441
        %4474 = vst [vmem:[%s489 + $0x10] sm:$0xff] %v4442
        %4475 = vst [vmem:[%s489 + $0x18] sm:$0xff] %v4443
        %4476 = vst [vmem:[%s489 + $0x20] sm:$0xff] %v4444
        %4477 = vst [vmem:[%s489 + $0x28] sm:$0xff] %v4445
        %4478 = vst [vmem:[%s489 + $0x30] sm:$0xff] %v4446
        %4479 = vst [vmem:[%s489 + $0x38] sm:$0xff] %v4447
        %4480 = vst [vmem:[%s489 + $0x40] sm:$0xff] %v4448
        %4481 = vst [vmem:[%s489 + $0x48] sm:$0xff] %v4449
        %4482 = vst [vmem:[%s489 + $0x50] sm:$0xff] %v4450
        %4483 = vst [vmem:[%s489 + $0x58] sm:$0xff] %v4451
        %4484 = vst [vmem:[%s489 + $0x60] sm:$0xff] %v4452
        %4485 = vst [vmem:[%s489 + $0x68] sm:$0xff] %v4453
        %4486 = vst [vmem:[%s489 + $0x70] sm:$0xff] %v4454
        %4487 = vst [vmem:[%s489 + $0x78] sm:$0xff] %v4455
        %4488 = vst [vmem:[%s489 + $0x80] sm:$0xff] %v4456
        %4489 = vst [vmem:[%s489 + $0x88] sm:$0xff] %v4457
        %4490 = vst [vmem:[%s489 + $0x90] sm:$0xff] %v4458
        %4491 = vst [vmem:[%s489 + $0x98] sm:$0xff] %v4459
        %4492 = vst [vmem:[%s489 + $0xa0] sm:$0xff] %v4460
        %4493 = vst [vmem:[%s489 + $0xa8] sm:$0xff] %v4461
        %4494 = vst [vmem:[%s489 + $0xb0] sm:$0xff] %v4462
        %4495 = vst [vmem:[%s489 + $0xb8] sm:$0xff] %v4463
        %4496 = vst [vmem:[%s489 + $0xc0] sm:$0xff] %v4464
        %4497 = vst [vmem:[%s489 + $0xc8] sm:$0xff] %v4465
        %4498 = vst [vmem:[%s489 + $0xd0] sm:$0xff] %v4466
        %4499 = vst [vmem:[%s489 + $0xd8] sm:$0xff] %v4467
        %4500 = vst [vmem:[%s489 + $0xe0] sm:$0xff] %v4468
        %4501 = vst [vmem:[%s489 + $0xe8] sm:$0xff] %v4469
        %4502 = vst [vmem:[%s489 + $0xf0] sm:$0xff] %v4470
        %4503 = vst [vmem:[%s489 + $0xf8] sm:$0xff] %v4471
        %s4504 = sand.u32 %s296, 1
        %s4505 = scalar_lea.sflag [#allocation5], %s4504
        %s4506 = sand.u32 %s296, 1
        %s4507 = smul.addr %s4506, 256
        %s4508 = scalar_lea.vmem [#allocation12], %s4507
        // Predicated region
        $region89: #{tpu_custom_call.1} parent=67 // pred_check
          %p4509 = pneg %p306
        $region90: #{tpu_custom_call.1} parent=67 // pred_check_branch
          %4511 = sbr.rel (%p4509) target = $region92
        $region91: #{tpu_custom_call.1} parent=67 // pred_region
          %s4513 = ssub.s32 4096, 4096
          %4514 = vsyncadd %s4505, %s4513
          %s4515 = smul.addr %s31, 32
          %s4516 = smul.addr %s4515, 128
          %s4517 = scalar_lea.hbm %s12, %s4516
          %s4518 = sshll.u32 %s4508, 4
          %s4519 = int_to_ptr.vmem [resolvable:$true] %s4518
          %4524 = dma.vmem_to_hbm [thread:$0]  %s4519, 4096, %s4517, %s4505, 128, 128, 8
        $region92: #{tpu_custom_call.1} parent=67 // pred_fallthru
          _
      $region68: #{tpu_custom_call.1} parent=5 // pred_fallthru
        _
      %p4525 = scmp.le.s32.totalorder 2, %s26
      // Predicated region
      $region93: #{tpu_custom_call.1} parent=5 // pred_check
        %p4526 = pneg %p4525
      $region94: #{tpu_custom_call.1} parent=5 // pred_check_branch
        %4528 = sbr.rel (%p4526) target = $region96
      $region95: #{tpu_custom_call.1} parent=5 // pred_region
        %s4529 = ssub.s32 %s26, 2
        // Predicated region
        $region97: #{tpu_custom_call.1} parent=95 // pred_check
          %p4530 = pneg %p312
        $region98: #{tpu_custom_call.1} parent=95 // pred_check_branch
          %4532 = sbr.rel (%p4530) target = $region100
        $region99: #{tpu_custom_call.1} parent=95 // pred_region
          %s4533 = sand.u32 %s297, 1
          %s4534 = scalar_lea.sflag [#allocation5], %s4533
          %s4535 = sand.u32 %s297, 1
          %s4536 = smul.addr %s4535, 256
          %s4537 = scalar_lea.vmem [#allocation12], %s4536
          %4538 = dma.done %s4534, 4096
        $region100: #{tpu_custom_call.1} parent=95 // pred_fallthru
          _
      $region96: #{tpu_custom_call.1} parent=5 // pred_fallthru
        _
    $region6: #{tpu_custom_call.1} parent=1 // loop_footer
      %s30 = sadd.s32 1, %s26
    $region7: #{tpu_custom_call.1} parent=1 // loop_footer_branch
      %25 = sbr.rel target = $region3
    $region8: #{tpu_custom_call.1} parent=1 // loop_exit
      _
    %4539 = vsyncpa [#allocation4], 1
    %s4540 = scalar_lea.sflag [#allocation4], 1
    %4541 = vsyncpa %s4540, 1
    %4542 = vsyncpa [#allocation7], 1
    %4543 = vsyncpa [#allocation10], 1
    %4544 = vsyncpa [#allocation5], 1
    %s4545 = scalar_lea.sflag [#allocation5], 1
    %4546 = vsyncpa %s4545, 1

</llo_original>
